<compile_context>
chip_gen: v6e
topology: v6e:2x2x1
jax: 0.10.0
libtpu: 0.0.40
codegen_flags: <defaults>
</compile_context>

<pallas_src>
import functools

import numpy as np

import jax
import jax.numpy as jnp
from jax.experimental import pallas as pl
from jax.experimental.pallas import tpu as pltpu


LANES = 128                     # lane-dense padding for every GEMM N / channel dim

# Geometry implied by the module instantiation (input 4 x 16 x 16, NCHW).
C_IN, H_IN, W_IN = 4, 16, 16
C1, H1, W1 = 8, 8, 8            # after conv1 (stride 2, pad 1)
C2, H2, W2 = 16, 4, 4           # after conv2 (stride 2, pad 1)
K1 = C_IN * 9                   # conv1 im2col depth (= 36)
HW1 = H1 * W1                   # 64 conv1 output positions per sample
HW2 = H2 * W2                   # 16 conv2 output positions per sample
NUM_CLASSES = 10
CENTER_TAP = 4                  # (ky, kx) = (1, 1) -> always in-bounds


# ----------------------------------------------------------------------------
# The fused Pallas kernel: conv1 + ReLU + conv2 + ReLU + flatten + Linear.
# All "gathers" are 0/1 selection matmuls; biases ride on a constant-ones lane,
# so the body is matmuls and ReLUs only — no layout ops, no broadcast adds.
# ----------------------------------------------------------------------------
def _fused_forward_kernel(p1_ref, w1_ref, s2_ref, w2_ref, rsel_ref, wc_ref,
                          out_ref):
    f32 = jnp.float32

    # ---- conv1 as one lane-dense GEMM + ReLU (bias folded via ones column) ---
    # rows = (n, y1, x1); cols = C1 channels, col C1 is a constant 1 (for the
    # conv2 bias fold); remaining padded cols stay 0.
    h1 = jnp.maximum(
        jnp.dot(p1_ref[...], w1_ref[...], preferred_element_type=f32), 0.0)

    # ---- conv2 (3x3 / s2 / p1) as 9 (gather-matmul, weight-matmul) taps ------
    # s2[t] is a constant 0/1 matrix: it gathers the conv1 rows each tap needs
    # (zero rows for the padding border) — the MXU does the im2col.  The conv2
    # bias (and the classifier's constant-ones lane) are folded into the
    # always-valid center tap's weight slice.
    rows2 = s2_ref.shape[1]                                      # bb * 16
    acc2 = jnp.zeros((rows2, LANES), f32)
    for t in range(9):                                           # unrolled
        tap_in = jnp.dot(s2_ref[t], h1, preferred_element_type=f32)
        acc2 = acc2 + jnp.dot(tap_in, w2_ref[t], preferred_element_type=f32)
    h2 = jnp.maximum(acc2, 0.0)                                  # (bb*16, 128)

    # ---- flatten (PyTorch C,H,W order folded into wc) + Linear ---------------
    # For each spatial position r, a 0/1 selection matmul picks that row for
    # every sample, then multiplies by the r-th slice of the packed classifier
    # weight (the classifier bias is folded into the r=0 slice).
    nb = out_ref.shape[0]                                        # bb
    acc3 = jnp.zeros((nb, LANES), f32)
    for r in range(HW2):                                         # 16, unrolled
        rows_r = jnp.dot(rsel_ref[r], h2, preferred_element_type=f32)
        acc3 = acc3 + jnp.dot(rows_r, wc_ref[r], preferred_element_type=f32)
    out_ref[...] = acc3.astype(out_ref.dtype)


# ----------------------------------------------------------------------------
# One-time parameter packing (lane-dense, pre-transposed, biases folded in).
# ----------------------------------------------------------------------------
def init_params(key):
    """PyTorch-shaped parameters (Conv2d: (Cout, Cin, kh, kw), Linear: (out, in))."""
    k1, k2, k3, k4, k5, k6 = jax.random.split(key, 6)
    w1 = jax.random.normal(k1, (C1, C_IN, 3, 3), jnp.float32) * 0.1
    b1 = jax.random.normal(k4, (C1,), jnp.float32) * 0.1
    w2 = jax.random.normal(k2, (C2, C1, 3, 3), jnp.float32) * 0.1
    b2 = jax.random.normal(k5, (C2,), jnp.float32) * 0.1
    wc = jax.random.normal(k3, (NUM_CLASSES, C2 * HW2), jnp.float32) * 0.05
    bc = jax.random.normal(k6, (NUM_CLASSES,), jnp.float32) * 0.1
    return {"w1": w1, "b1": b1, "w2": w2, "b2": b2, "wc": wc, "bc": bc}


def pack_params(params):
    """Repack once: zero-pad channel dims to 128, fold the PyTorch (C,H,W)
    flatten order into the classifier weight, and fold every bias into the
    GEMMs via a constant-ones lane chain:
        p1 col K1 = 1  ->  h1 lane C1 = 1  ->  h2 lane C2 = 1."""
    w1, b1 = params["w1"], params["b1"]
    w2, b2 = params["w2"], params["b2"]
    wc, bc = params["wc"], params["bc"]

    # conv1 as GEMM: (Cin*kh*kw, Cout) zero-padded to (128, 128).
    # Row K1 multiplies the constant-ones column of p1: it carries b1 into the
    # real channels and writes a constant 1 into lane C1 of h1.
    w1_mat = w1.reshape(C1, K1).T                                  # (36, 8)
    w1p = (jnp.zeros((LANES, LANES), jnp.float32)
           .at[:K1, :C1].set(w1_mat)
           .at[K1, :C1].set(b1)
           .at[K1, C1].set(1.0))

    # conv2 per-tap weights: w2p[t, ci, co] = w2[co, ci, ky, kx],  t = ky*3+kx.
    # The center tap (always in-bounds) also reads h1 lane C1 (== 1): it adds
    # b2 to the real channels and writes a constant 1 into lane C2 of h2.
    w2_taps = jnp.transpose(w2, (2, 3, 1, 0)).reshape(9, C1, C2)
    w2p = (jnp.zeros((9, LANES, LANES), jnp.float32)
           .at[:, :C1, :C2].set(w2_taps)
           .at[CENTER_TAP, C1, :C2].set(b2)
           .at[CENTER_TAP, C1, C2].set(1.0))

    # classifier: wcp[r, c, o] = wc[o, c*HW2 + r]  (r = y*W2 + x), i.e. the
    # PyTorch flatten order (C, H, W) baked into the weight, pre-transposed.
    # Lane C2 of h2 is 1 for every row, so bc is folded into the r = 0 slice.
    wc3 = wc.reshape(NUM_CLASSES, C2, HW2)                         # (o, c, r)
    wcp = (jnp.zeros((HW2, LANES, LANES), jnp.float32)
           .at[:, :C2, :NUM_CLASSES].set(jnp.transpose(wc3, (2, 1, 0)))
           .at[0, C2, :NUM_CLASSES].set(bc))

    return {"w1p": w1p, "w2p": w2p, "wcp": wcp}


@functools.lru_cache(maxsize=None)
def _selection_constants(bb):
    """Constant 0/1 gather matrices for a batch block of `bb` samples."""
    # conv2 spatial gather: s2[t, p, q] = 1 iff tap t=(ky,kx) at output
    # position p=(n, oy, ox) reads conv1 row q=(n, 2*oy+ky-1, 2*ox+kx-1);
    # out-of-range taps (the zero padding) select nothing (row of zeros).
    s2 = np.zeros((9, bb * HW2, bb * HW1), np.float32)
    for ky in range(3):
        for kx in range(3):
            t = ky * 3 + kx
            for n in range(bb):
                for oy in range(H2):
                    for ox in range(W2):
                        y = 2 * oy + ky - 1
                        x = 2 * ox + kx - 1
                        if 0 <= y < H1 and 0 <= x < W1:
                            s2[t, n * HW2 + oy * W2 + ox,
                               n * HW1 + y * W1 + x] = 1.0
    # classifier row gather: rsel[r, n, q] = 1 iff q is sample n, position r.
    rsel = np.zeros((HW2, bb, bb * HW2), np.float32)
    for r in range(HW2):
        for n in range(bb):
            rsel[r, n, n * HW2 + r] = 1.0
    return jnp.asarray(s2), jnp.asarray(rsel)


# ----------------------------------------------------------------------------
# Pre-kernel glue: conv1 im2col on the raw NCHW input (one small XLA fusion).
# ----------------------------------------------------------------------------
def _conv1_patches(x):
    """Rows ordered (n, oy, ox); cols ordered (ci, ky, kx) to match the PyTorch
    weight flattening, followed by a constant-ones column (bias fold); cols
    zero-padded to 128 (lane-dense kernel input)."""
    n = x.shape[0]
    xp = jnp.pad(x, ((0, 0), (0, 0), (1, 1), (1, 1)))
    taps = [xp[:, :, ky:ky + 2 * H1:2, kx:kx + 2 * W1:2]
            for ky in range(3) for kx in range(3)]
    p = jnp.stack(taps, axis=2)                                   # (n, Cin, 9, H1, W1)
    p = p.transpose(0, 3, 4, 1, 2).reshape(n * HW1, K1)
    ones = jnp.ones((n * HW1, 1), p.dtype)
    p = jnp.concatenate([p, ones], axis=1)                        # col K1 == 1
    return jnp.pad(p, ((0, 0), (0, LANES - K1 - 1)))


# ----------------------------------------------------------------------------
# Forward pass
# ----------------------------------------------------------------------------
def autoencoder_classifier_forward(x, packed):
    """Matches AutoencoderClassifier.forward for x in NCHW float32."""
    batch = x.shape[0]
    bb = batch if batch <= 8 else 8          # samples per grid step (batch block)
    pad = (-batch) % bb                      # pad batch to a multiple of bb
    if pad:
        x = jnp.pad(x, ((0, pad), (0, 0), (0, 0), (0, 0)))
    batch_p = batch + pad
    n_blocks = batch_p // bb
    rows1 = bb * HW1
    rows2 = bb * HW2

    s2, rsel = _selection_constants(bb)
    p1 = _conv1_patches(x)                                        # (batch_p*64, 128)

    # NOTE: the PyTorch module's `x[-1]` branch (encoder returning list/tuple)
    # is a no-op here because this encoder returns a single tensor.
    logits_padded = pl.pallas_call(
        _fused_forward_kernel,
        out_shape=jax.ShapeDtypeStruct((batch_p, LANES), jnp.float32),
        grid=(n_blocks,),
        in_specs=[
            pl.BlockSpec((rows1, LANES), lambda i: (i, 0)),          # conv1 patches
            pl.BlockSpec((LANES, LANES), lambda i: (0, 0)),          # w1p (+b1 folded)
            pl.BlockSpec((9, rows2, rows1), lambda i: (0, 0, 0)),    # conv2 gather
            pl.BlockSpec((9, LANES, LANES), lambda i: (0, 0, 0)),    # w2p (+b2 folded)
            pl.BlockSpec((HW2, bb, rows2), lambda i: (0, 0, 0)),     # classifier gather
            pl.BlockSpec((HW2, LANES, LANES), lambda i: (0, 0, 0)),  # wcp (+bc folded)
        ],
        out_specs=pl.BlockSpec((bb, LANES), lambda i: (i, 0)),       # lane-dense logits
        compiler_params=pltpu.CompilerParams(
            dimension_semantics=("parallel",)),   # batch blocks independent (megacore)
    )(p1, packed["w1p"], s2, packed["w2p"], rsel, packed["wcp"])

    return logits_padded[:batch, :NUM_CLASSES]


# ----------------------------------------------------------------------------
# Pure-XLA reference (independent path) for a correctness cross-check.
# ----------------------------------------------------------------------------
def _reference_forward(x, params):
    dn = ("NCHW", "OIHW", "NCHW")
    hi = jax.lax.Precision.HIGHEST
    h = jax.lax.conv_general_dilated(x, params["w1"], (2, 2), ((1, 1), (1, 1)),
                                     dimension_numbers=dn, precision=hi)
    h = jax.nn.relu(h + params["b1"][None, :, None, None])
    h = jax.lax.conv_general_dilated(h, params["w2"], (2, 2), ((1, 1), (1, 1)),
                                     dimension_numbers=dn, precision=hi)
    h = jax.nn.relu(h + params["b2"][None, :, None, None])
    h = h.reshape(h.shape[0], -1)
    return jnp.dot(h, params["wc"].T, precision=hi) + params["bc"]


if __name__ == "__main__":
    key = jax.random.PRNGKey(0)
    pkey, xkey = jax.random.split(key)
    params = init_params(pkey)
    packed = pack_params(params)                 # one-time repack (padded, biases folded)
    x = jax.random.normal(xkey, (2, C_IN, H_IN, W_IN), jnp.float32)   # NCHW, batch=2

    fwd = jax.jit(autoencoder_classifier_forward)
    logits = fwd(x, packed)
    jax.block_until_ready(logits)
    assert logits.shape == (2, NUM_CLASSES), logits.shape

    ref = _reference_forward(x, params)
    err = float(jnp.max(jnp.abs(logits - ref)))
    assert err < 2e-2, f"mismatch vs reference: max abs err = {err}"
    print("KERNEL_OK")
</pallas_src>

<mosaic_0001>
module attributes {stable_mosaic.version = 11 : i64} {
  func.func @_fused_forward_kernel(%arg0: i32, %arg1: memref<128x128xf32, #tpu.memory_space<vmem>>, %arg2: memref<128x128xf32, #tpu.memory_space<vmem>>, %arg3: memref<9x32x128xf32, #tpu.memory_space<vmem>>, %arg4: memref<9x128x128xf32, #tpu.memory_space<vmem>>, %arg5: memref<16x2x32xf32, #tpu.memory_space<vmem>>, %arg6: memref<16x128x128xf32, #tpu.memory_space<vmem>>, %arg7: memref<2x128xf32, #tpu.memory_space<vmem>>) attributes {dimension_semantics = [#tpu.dimension_semantics<parallel>], iteration_bounds = array<i64: 1>, scalar_prefetch = 0 : i64, scratch_operands = 0 : i64, tpu.core_type = #tpu.core_type<tc>, window_params = [{transform_indices = @transform_0, window_bounds = array<i64: 128, 128>}, {pipeline_mode = #tpu.pipeline_mode<synchronous>, transform_indices = @transform_1, window_bounds = array<i64: 128, 128>}, {pipeline_mode = #tpu.pipeline_mode<synchronous>, transform_indices = @transform_2, window_bounds = array<i64: 9, 32, 128>}, {pipeline_mode = #tpu.pipeline_mode<synchronous>, transform_indices = @transform_3, window_bounds = array<i64: 9, 128, 128>}, {pipeline_mode = #tpu.pipeline_mode<synchronous>, transform_indices = @transform_4, window_bounds = array<i64: 16, 2, 32>}, {pipeline_mode = #tpu.pipeline_mode<synchronous>, transform_indices = @transform_5, window_bounds = array<i64: 16, 128, 128>}, {transform_indices = @transform_6, window_bounds = array<i64: 2, 128>}]} {
    %c0 = arith.constant 0 : index
    %c0_0 = arith.constant 0 : index
    %0 = vector.load %arg1[%c0, %c0_0] : memref<128x128xf32, #tpu.memory_space<vmem>>, vector<128x128xf32>
    %c0_1 = arith.constant 0 : index
    %c0_2 = arith.constant 0 : index
    %1 = vector.load %arg2[%c0_1, %c0_2] : memref<128x128xf32, #tpu.memory_space<vmem>>, vector<128x128xf32>
    %cst = arith.constant dense<0.000000e+00> : vector<128x128xf32>
    %2 = tpu.matmul %0, %1, %cst {dimension_numbers = #tpu.dot_dimension_numbers<[1], [0], [0], [1], [0, 0, 1, 1], [], []>} : vector<128x128xf32>, vector<128x128xf32>, vector<128x128xf32> -> vector<128x128xf32>
    %cst_3 = arith.constant 0.000000e+00 : f32
    %3 = vector.broadcast %cst_3 : f32 to vector<128x128xf32>
    %4 = arith.maximumf %2, %3 : vector<128x128xf32>
    %cst_4 = arith.constant 0.000000e+00 : f32
    %5 = vector.broadcast %cst_4 : f32 to vector<32x128xf32>
    %c0_5 = arith.constant 0 : index
    %c0_6 = arith.constant 0 : index
    %c0_7 = arith.constant 0 : index
    %6 = vector.load %arg3[%c0_5, %c0_6, %c0_7] : memref<9x32x128xf32, #tpu.memory_space<vmem>>, vector<1x32x128xf32>
    %7 = vector.shape_cast %6 : vector<1x32x128xf32> to vector<32x128xf32>
    %cst_8 = arith.constant dense<0.000000e+00> : vector<32x128xf32>
    %8 = tpu.matmul %7, %4, %cst_8 {dimension_numbers = #tpu.dot_dimension_numbers<[1], [0], [0], [1], [0, 0, 1, 1], [], []>} : vector<32x128xf32>, vector<128x128xf32>, vector<32x128xf32> -> vector<32x128xf32>
    %c0_9 = arith.constant 0 : index
    %c0_10 = arith.constant 0 : index
    %c0_11 = arith.constant 0 : index
    %9 = vector.load %arg4[%c0_9, %c0_10, %c0_11] : memref<9x128x128xf32, #tpu.memory_space<vmem>>, vector<1x128x128xf32>
    %10 = vector.shape_cast %9 : vector<1x128x128xf32> to vector<128x128xf32>
    %cst_12 = arith.constant dense<0.000000e+00> : vector<32x128xf32>
    %11 = tpu.matmul %8, %10, %cst_12 {dimension_numbers = #tpu.dot_dimension_numbers<[1], [0], [0], [1], [0, 0, 1, 1], [], []>} : vector<32x128xf32>, vector<128x128xf32>, vector<32x128xf32> -> vector<32x128xf32>
    %12 = arith.addf %5, %11 : vector<32x128xf32>
    %c1 = arith.constant 1 : index
    %c0_13 = arith.constant 0 : index
    %c0_14 = arith.constant 0 : index
    %13 = vector.load %arg3[%c1, %c0_13, %c0_14] : memref<9x32x128xf32, #tpu.memory_space<vmem>>, vector<1x32x128xf32>
    %14 = vector.shape_cast %13 : vector<1x32x128xf32> to vector<32x128xf32>
    %cst_15 = arith.constant dense<0.000000e+00> : vector<32x128xf32>
    %15 = tpu.matmul %14, %4, %cst_15 {dimension_numbers = #tpu.dot_dimension_numbers<[1], [0], [0], [1], [0, 0, 1, 1], [], []>} : vector<32x128xf32>, vector<128x128xf32>, vector<32x128xf32> -> vector<32x128xf32>
    %c1_16 = arith.constant 1 : index
    %c0_17 = arith.constant 0 : index
    %c0_18 = arith.constant 0 : index
    %16 = vector.load %arg4[%c1_16, %c0_17, %c0_18] : memref<9x128x128xf32, #tpu.memory_space<vmem>>, vector<1x128x128xf32>
    %17 = vector.shape_cast %16 : vector<1x128x128xf32> to vector<128x128xf32>
    %cst_19 = arith.constant dense<0.000000e+00> : vector<32x128xf32>
    %18 = tpu.matmul %15, %17, %cst_19 {dimension_numbers = #tpu.dot_dimension_numbers<[1], [0], [0], [1], [0, 0, 1, 1], [], []>} : vector<32x128xf32>, vector<128x128xf32>, vector<32x128xf32> -> vector<32x128xf32>
    %19 = arith.addf %12, %18 : vector<32x128xf32>
    %c2 = arith.constant 2 : index
    %c0_20 = arith.constant 0 : index
    %c0_21 = arith.constant 0 : index
    %20 = vector.load %arg3[%c2, %c0_20, %c0_21] : memref<9x32x128xf32, #tpu.memory_space<vmem>>, vector<1x32x128xf32>
    %21 = vector.shape_cast %20 : vector<1x32x128xf32> to vector<32x128xf32>
    %cst_22 = arith.constant dense<0.000000e+00> : vector<32x128xf32>
    %22 = tpu.matmul %21, %4, %cst_22 {dimension_numbers = #tpu.dot_dimension_numbers<[1], [0], [0], [1], [0, 0, 1, 1], [], []>} : vector<32x128xf32>, vector<128x128xf32>, vector<32x128xf32> -> vector<32x128xf32>
    %c2_23 = arith.constant 2 : index
    %c0_24 = arith.constant 0 : index
    %c0_25 = arith.constant 0 : index
    %23 = vector.load %arg4[%c2_23, %c0_24, %c0_25] : memref<9x128x128xf32, #tpu.memory_space<vmem>>, vector<1x128x128xf32>
    %24 = vector.shape_cast %23 : vector<1x128x128xf32> to vector<128x128xf32>
    %cst_26 = arith.constant dense<0.000000e+00> : vector<32x128xf32>
    %25 = tpu.matmul %22, %24, %cst_26 {dimension_numbers = #tpu.dot_dimension_numbers<[1], [0], [0], [1], [0, 0, 1, 1], [], []>} : vector<32x128xf32>, vector<128x128xf32>, vector<32x128xf32> -> vector<32x128xf32>
    %26 = arith.addf %19, %25 : vector<32x128xf32>
    %c3 = arith.constant 3 : index
    %c0_27 = arith.constant 0 : index
    %c0_28 = arith.constant 0 : index
    %27 = vector.load %arg3[%c3, %c0_27, %c0_28] : memref<9x32x128xf32, #tpu.memory_space<vmem>>, vector<1x32x128xf32>
    %28 = vector.shape_cast %27 : vector<1x32x128xf32> to vector<32x128xf32>
    %cst_29 = arith.constant dense<0.000000e+00> : vector<32x128xf32>
    %29 = tpu.matmul %28, %4, %cst_29 {dimension_numbers = #tpu.dot_dimension_numbers<[1], [0], [0], [1], [0, 0, 1, 1], [], []>} : vector<32x128xf32>, vector<128x128xf32>, vector<32x128xf32> -> vector<32x128xf32>
    %c3_30 = arith.constant 3 : index
    %c0_31 = arith.constant 0 : index
    %c0_32 = arith.constant 0 : index
    %30 = vector.load %arg4[%c3_30, %c0_31, %c0_32] : memref<9x128x128xf32, #tpu.memory_space<vmem>>, vector<1x128x128xf32>
    %31 = vector.shape_cast %30 : vector<1x128x128xf32> to vector<128x128xf32>
    %cst_33 = arith.constant dense<0.000000e+00> : vector<32x128xf32>
    %32 = tpu.matmul %29, %31, %cst_33 {dimension_numbers = #tpu.dot_dimension_numbers<[1], [0], [0], [1], [0, 0, 1, 1], [], []>} : vector<32x128xf32>, vector<128x128xf32>, vector<32x128xf32> -> vector<32x128xf32>
    %33 = arith.addf %26, %32 : vector<32x128xf32>
    %c4 = arith.constant 4 : index
    %c0_34 = arith.constant 0 : index
    %c0_35 = arith.constant 0 : index
    %34 = vector.load %arg3[%c4, %c0_34, %c0_35] : memref<9x32x128xf32, #tpu.memory_space<vmem>>, vector<1x32x128xf32>
    %35 = vector.shape_cast %34 : vector<1x32x128xf32> to vector<32x128xf32>
    %cst_36 = arith.constant dense<0.000000e+00> : vector<32x128xf32>
    %36 = tpu.matmul %35, %4, %cst_36 {dimension_numbers = #tpu.dot_dimension_numbers<[1], [0], [0], [1], [0, 0, 1, 1], [], []>} : vector<32x128xf32>, vector<128x128xf32>, vector<32x128xf32> -> vector<32x128xf32>
    %c4_37 = arith.constant 4 : index
    %c0_38 = arith.constant 0 : index
    %c0_39 = arith.constant 0 : index
    %37 = vector.load %arg4[%c4_37, %c0_38, %c0_39] : memref<9x128x128xf32, #tpu.memory_space<vmem>>, vector<1x128x128xf32>
    %38 = vector.shape_cast %37 : vector<1x128x128xf32> to vector<128x128xf32>
    %cst_40 = arith.constant dense<0.000000e+00> : vector<32x128xf32>
    %39 = tpu.matmul %36, %38, %cst_40 {dimension_numbers = #tpu.dot_dimension_numbers<[1], [0], [0], [1], [0, 0, 1, 1], [], []>} : vector<32x128xf32>, vector<128x128xf32>, vector<32x128xf32> -> vector<32x128xf32>
    %40 = arith.addf %33, %39 : vector<32x128xf32>
    %c5 = arith.constant 5 : index
    %c0_41 = arith.constant 0 : index
    %c0_42 = arith.constant 0 : index
    %41 = vector.load %arg3[%c5, %c0_41, %c0_42] : memref<9x32x128xf32, #tpu.memory_space<vmem>>, vector<1x32x128xf32>
    %42 = vector.shape_cast %41 : vector<1x32x128xf32> to vector<32x128xf32>
    %cst_43 = arith.constant dense<0.000000e+00> : vector<32x128xf32>
    %43 = tpu.matmul %42, %4, %cst_43 {dimension_numbers = #tpu.dot_dimension_numbers<[1], [0], [0], [1], [0, 0, 1, 1], [], []>} : vector<32x128xf32>, vector<128x128xf32>, vector<32x128xf32> -> vector<32x128xf32>
    %c5_44 = arith.constant 5 : index
    %c0_45 = arith.constant 0 : index
    %c0_46 = arith.constant 0 : index
    %44 = vector.load %arg4[%c5_44, %c0_45, %c0_46] : memref<9x128x128xf32, #tpu.memory_space<vmem>>, vector<1x128x128xf32>
    %45 = vector.shape_cast %44 : vector<1x128x128xf32> to vector<128x128xf32>
    %cst_47 = arith.constant dense<0.000000e+00> : vector<32x128xf32>
    %46 = tpu.matmul %43, %45, %cst_47 {dimension_numbers = #tpu.dot_dimension_numbers<[1], [0], [0], [1], [0, 0, 1, 1], [], []>} : vector<32x128xf32>, vector<128x128xf32>, vector<32x128xf32> -> vector<32x128xf32>
    %47 = arith.addf %40, %46 : vector<32x128xf32>
    %c6 = arith.constant 6 : index
    %c0_48 = arith.constant 0 : index
    %c0_49 = arith.constant 0 : index
    %48 = vector.load %arg3[%c6, %c0_48, %c0_49] : memref<9x32x128xf32, #tpu.memory_space<vmem>>, vector<1x32x128xf32>
    %49 = vector.shape_cast %48 : vector<1x32x128xf32> to vector<32x128xf32>
    %cst_50 = arith.constant dense<0.000000e+00> : vector<32x128xf32>
    %50 = tpu.matmul %49, %4, %cst_50 {dimension_numbers = #tpu.dot_dimension_numbers<[1], [0], [0], [1], [0, 0, 1, 1], [], []>} : vector<32x128xf32>, vector<128x128xf32>, vector<32x128xf32> -> vector<32x128xf32>
    %c6_51 = arith.constant 6 : index
    %c0_52 = arith.constant 0 : index
    %c0_53 = arith.constant 0 : index
    %51 = vector.load %arg4[%c6_51, %c0_52, %c0_53] : memref<9x128x128xf32, #tpu.memory_space<vmem>>, vector<1x128x128xf32>
    %52 = vector.shape_cast %51 : vector<1x128x128xf32> to vector<128x128xf32>
    %cst_54 = arith.constant dense<0.000000e+00> : vector<32x128xf32>
    %53 = tpu.matmul %50, %52, %cst_54 {dimension_numbers = #tpu.dot_dimension_numbers<[1], [0], [0], [1], [0, 0, 1, 1], [], []>} : vector<32x128xf32>, vector<128x128xf32>, vector<32x128xf32> -> vector<32x128xf32>
    %54 = arith.addf %47, %53 : vector<32x128xf32>
    %c7 = arith.constant 7 : index
    %c0_55 = arith.constant 0 : index
    %c0_56 = arith.constant 0 : index
    %55 = vector.load %arg3[%c7, %c0_55, %c0_56] : memref<9x32x128xf32, #tpu.memory_space<vmem>>, vector<1x32x128xf32>
    %56 = vector.shape_cast %55 : vector<1x32x128xf32> to vector<32x128xf32>
    %cst_57 = arith.constant dense<0.000000e+00> : vector<32x128xf32>
    %57 = tpu.matmul %56, %4, %cst_57 {dimension_numbers = #tpu.dot_dimension_numbers<[1], [0], [0], [1], [0, 0, 1, 1], [], []>} : vector<32x128xf32>, vector<128x128xf32>, vector<32x128xf32> -> vector<32x128xf32>
    %c7_58 = arith.constant 7 : index
    %c0_59 = arith.constant 0 : index
    %c0_60 = arith.constant 0 : index
    %58 = vector.load %arg4[%c7_58, %c0_59, %c0_60] : memref<9x128x128xf32, #tpu.memory_space<vmem>>, vector<1x128x128xf32>
    %59 = vector.shape_cast %58 : vector<1x128x128xf32> to vector<128x128xf32>
    %cst_61 = arith.constant dense<0.000000e+00> : vector<32x128xf32>
    %60 = tpu.matmul %57, %59, %cst_61 {dimension_numbers = #tpu.dot_dimension_numbers<[1], [0], [0], [1], [0, 0, 1, 1], [], []>} : vector<32x128xf32>, vector<128x128xf32>, vector<32x128xf32> -> vector<32x128xf32>
    %61 = arith.addf %54, %60 : vector<32x128xf32>
    %c8 = arith.constant 8 : index
    %c0_62 = arith.constant 0 : index
    %c0_63 = arith.constant 0 : index
    %62 = vector.load %arg3[%c8, %c0_62, %c0_63] : memref<9x32x128xf32, #tpu.memory_space<vmem>>, vector<1x32x128xf32>
    %63 = vector.shape_cast %62 : vector<1x32x128xf32> to vector<32x128xf32>
    %cst_64 = arith.constant dense<0.000000e+00> : vector<32x128xf32>
    %64 = tpu.matmul %63, %4, %cst_64 {dimension_numbers = #tpu.dot_dimension_numbers<[1], [0], [0], [1], [0, 0, 1, 1], [], []>} : vector<32x128xf32>, vector<128x128xf32>, vector<32x128xf32> -> vector<32x128xf32>
    %c8_65 = arith.constant 8 : index
    %c0_66 = arith.constant 0 : index
    %c0_67 = arith.constant 0 : index
    %65 = vector.load %arg4[%c8_65, %c0_66, %c0_67] : memref<9x128x128xf32, #tpu.memory_space<vmem>>, vector<1x128x128xf32>
    %66 = vector.shape_cast %65 : vector<1x128x128xf32> to vector<128x128xf32>
    %cst_68 = arith.constant dense<0.000000e+00> : vector<32x128xf32>
    %67 = tpu.matmul %64, %66, %cst_68 {dimension_numbers = #tpu.dot_dimension_numbers<[1], [0], [0], [1], [0, 0, 1, 1], [], []>} : vector<32x128xf32>, vector<128x128xf32>, vector<32x128xf32> -> vector<32x128xf32>
    %68 = arith.addf %61, %67 : vector<32x128xf32>
    %cst_69 = arith.constant 0.000000e+00 : f32
    %69 = vector.broadcast %cst_69 : f32 to vector<32x128xf32>
    %70 = arith.maximumf %68, %69 : vector<32x128xf32>
    %cst_70 = arith.constant 0.000000e+00 : f32
    %71 = vector.broadcast %cst_70 : f32 to vector<2x128xf32>
    %c0_71 = arith.constant 0 : index
    %c0_72 = arith.constant 0 : index
    %c0_73 = arith.constant 0 : index
    %72 = vector.load %arg5[%c0_71, %c0_72, %c0_73] : memref<16x2x32xf32, #tpu.memory_space<vmem>>, vector<1x2x32xf32>
    %73 = vector.shape_cast %72 : vector<1x2x32xf32> to vector<2x32xf32>
    %cst_74 = arith.constant dense<0.000000e+00> : vector<2x128xf32>
    %74 = tpu.matmul %73, %70, %cst_74 {dimension_numbers = #tpu.dot_dimension_numbers<[1], [0], [0], [1], [0, 0, 1, 1], [], []>} : vector<2x32xf32>, vector<32x128xf32>, vector<2x128xf32> -> vector<2x128xf32>
    %c0_75 = arith.constant 0 : index
    %c0_76 = arith.constant 0 : index
    %c0_77 = arith.constant 0 : index
    %75 = vector.load %arg6[%c0_75, %c0_76, %c0_77] : memref<16x128x128xf32, #tpu.memory_space<vmem>>, vector<1x128x128xf32>
    %76 = vector.shape_cast %75 : vector<1x128x128xf32> to vector<128x128xf32>
    %cst_78 = arith.constant dense<0.000000e+00> : vector<2x128xf32>
    %77 = tpu.matmul %74, %76, %cst_78 {dimension_numbers = #tpu.dot_dimension_numbers<[1], [0], [0], [1], [0, 0, 1, 1], [], []>} : vector<2x128xf32>, vector<128x128xf32>, vector<2x128xf32> -> vector<2x128xf32>
    %78 = arith.addf %71, %77 : vector<2x128xf32>
    %c1_79 = arith.constant 1 : index
    %c0_80 = arith.constant 0 : index
    %c0_81 = arith.constant 0 : index
    %79 = vector.load %arg5[%c1_79, %c0_80, %c0_81] : memref<16x2x32xf32, #tpu.memory_space<vmem>>, vector<1x2x32xf32>
    %80 = vector.shape_cast %79 : vector<1x2x32xf32> to vector<2x32xf32>
    %cst_82 = arith.constant dense<0.000000e+00> : vector<2x128xf32>
    %81 = tpu.matmul %80, %70, %cst_82 {dimension_numbers = #tpu.dot_dimension_numbers<[1], [0], [0], [1], [0, 0, 1, 1], [], []>} : vector<2x32xf32>, vector<32x128xf32>, vector<2x128xf32> -> vector<2x128xf32>
    %c1_83 = arith.constant 1 : index
    %c0_84 = arith.constant 0 : index
    %c0_85 = arith.constant 0 : index
    %82 = vector.load %arg6[%c1_83, %c0_84, %c0_85] : memref<16x128x128xf32, #tpu.memory_space<vmem>>, vector<1x128x128xf32>
    %83 = vector.shape_cast %82 : vector<1x128x128xf32> to vector<128x128xf32>
    %cst_86 = arith.constant dense<0.000000e+00> : vector<2x128xf32>
    %84 = tpu.matmul %81, %83, %cst_86 {dimension_numbers = #tpu.dot_dimension_numbers<[1], [0], [0], [1], [0, 0, 1, 1], [], []>} : vector<2x128xf32>, vector<128x128xf32>, vector<2x128xf32> -> vector<2x128xf32>
    %85 = arith.addf %78, %84 : vector<2x128xf32>
    %c2_87 = arith.constant 2 : index
    %c0_88 = arith.constant 0 : index
    %c0_89 = arith.constant 0 : index
    %86 = vector.load %arg5[%c2_87, %c0_88, %c0_89] : memref<16x2x32xf32, #tpu.memory_space<vmem>>, vector<1x2x32xf32>
    %87 = vector.shape_cast %86 : vector<1x2x32xf32> to vector<2x32xf32>
    %cst_90 = arith.constant dense<0.000000e+00> : vector<2x128xf32>
    %88 = tpu.matmul %87, %70, %cst_90 {dimension_numbers = #tpu.dot_dimension_numbers<[1], [0], [0], [1], [0, 0, 1, 1], [], []>} : vector<2x32xf32>, vector<32x128xf32>, vector<2x128xf32> -> vector<2x128xf32>
    %c2_91 = arith.constant 2 : index
    %c0_92 = arith.constant 0 : index
    %c0_93 = arith.constant 0 : index
    %89 = vector.load %arg6[%c2_91, %c0_92, %c0_93] : memref<16x128x128xf32, #tpu.memory_space<vmem>>, vector<1x128x128xf32>
    %90 = vector.shape_cast %89 : vector<1x128x128xf32> to vector<128x128xf32>
    %cst_94 = arith.constant dense<0.000000e+00> : vector<2x128xf32>
    %91 = tpu.matmul %88, %90, %cst_94 {dimension_numbers = #tpu.dot_dimension_numbers<[1], [0], [0], [1], [0, 0, 1, 1], [], []>} : vector<2x128xf32>, vector<128x128xf32>, vector<2x128xf32> -> vector<2x128xf32>
    %92 = arith.addf %85, %91 : vector<2x128xf32>
    %c3_95 = arith.constant 3 : index
    %c0_96 = arith.constant 0 : index
    %c0_97 = arith.constant 0 : index
    %93 = vector.load %arg5[%c3_95, %c0_96, %c0_97] : memref<16x2x32xf32, #tpu.memory_space<vmem>>, vector<1x2x32xf32>
    %94 = vector.shape_cast %93 : vector<1x2x32xf32> to vector<2x32xf32>
    %cst_98 = arith.constant dense<0.000000e+00> : vector<2x128xf32>
    %95 = tpu.matmul %94, %70, %cst_98 {dimension_numbers = #tpu.dot_dimension_numbers<[1], [0], [0], [1], [0, 0, 1, 1], [], []>} : vector<2x32xf32>, vector<32x128xf32>, vector<2x128xf32> -> vector<2x128xf32>
    %c3_99 = arith.constant 3 : index
    %c0_100 = arith.constant 0 : index
    %c0_101 = arith.constant 0 : index
    %96 = vector.load %arg6[%c3_99, %c0_100, %c0_101] : memref<16x128x128xf32, #tpu.memory_space<vmem>>, vector<1x128x128xf32>
    %97 = vector.shape_cast %96 : vector<1x128x128xf32> to vector<128x128xf32>
    %cst_102 = arith.constant dense<0.000000e+00> : vector<2x128xf32>
    %98 = tpu.matmul %95, %97, %cst_102 {dimension_numbers = #tpu.dot_dimension_numbers<[1], [0], [0], [1], [0, 0, 1, 1], [], []>} : vector<2x128xf32>, vector<128x128xf32>, vector<2x128xf32> -> vector<2x128xf32>
    %99 = arith.addf %92, %98 : vector<2x128xf32>
    %c4_103 = arith.constant 4 : index
    %c0_104 = arith.constant 0 : index
    %c0_105 = arith.constant 0 : index
    %100 = vector.load %arg5[%c4_103, %c0_104, %c0_105] : memref<16x2x32xf32, #tpu.memory_space<vmem>>, vector<1x2x32xf32>
    %101 = vector.shape_cast %100 : vector<1x2x32xf32> to vector<2x32xf32>
    %cst_106 = arith.constant dense<0.000000e+00> : vector<2x128xf32>
    %102 = tpu.matmul %101, %70, %cst_106 {dimension_numbers = #tpu.dot_dimension_numbers<[1], [0], [0], [1], [0, 0, 1, 1], [], []>} : vector<2x32xf32>, vector<32x128xf32>, vector<2x128xf32> -> vector<2x128xf32>
    %c4_107 = arith.constant 4 : index
    %c0_108 = arith.constant 0 : index
    %c0_109 = arith.constant 0 : index
    %103 = vector.load %arg6[%c4_107, %c0_108, %c0_109] : memref<16x128x128xf32, #tpu.memory_space<vmem>>, vector<1x128x128xf32>
    %104 = vector.shape_cast %103 : vector<1x128x128xf32> to vector<128x128xf32>
    %cst_110 = arith.constant dense<0.000000e+00> : vector<2x128xf32>
    %105 = tpu.matmul %102, %104, %cst_110 {dimension_numbers = #tpu.dot_dimension_numbers<[1], [0], [0], [1], [0, 0, 1, 1], [], []>} : vector<2x128xf32>, vector<128x128xf32>, vector<2x128xf32> -> vector<2x128xf32>
    %106 = arith.addf %99, %105 : vector<2x128xf32>
    %c5_111 = arith.constant 5 : index
    %c0_112 = arith.constant 0 : index
    %c0_113 = arith.constant 0 : index
    %107 = vector.load %arg5[%c5_111, %c0_112, %c0_113] : memref<16x2x32xf32, #tpu.memory_space<vmem>>, vector<1x2x32xf32>
    %108 = vector.shape_cast %107 : vector<1x2x32xf32> to vector<2x32xf32>
    %cst_114 = arith.constant dense<0.000000e+00> : vector<2x128xf32>
    %109 = tpu.matmul %108, %70, %cst_114 {dimension_numbers = #tpu.dot_dimension_numbers<[1], [0], [0], [1], [0, 0, 1, 1], [], []>} : vector<2x32xf32>, vector<32x128xf32>, vector<2x128xf32> -> vector<2x128xf32>
    %c5_115 = arith.constant 5 : index
    %c0_116 = arith.constant 0 : index
    %c0_117 = arith.constant 0 : index
    %110 = vector.load %arg6[%c5_115, %c0_116, %c0_117] : memref<16x128x128xf32, #tpu.memory_space<vmem>>, vector<1x128x128xf32>
    %111 = vector.shape_cast %110 : vector<1x128x128xf32> to vector<128x128xf32>
    %cst_118 = arith.constant dense<0.000000e+00> : vector<2x128xf32>
    %112 = tpu.matmul %109, %111, %cst_118 {dimension_numbers = #tpu.dot_dimension_numbers<[1], [0], [0], [1], [0, 0, 1, 1], [], []>} : vector<2x128xf32>, vector<128x128xf32>, vector<2x128xf32> -> vector<2x128xf32>
    %113 = arith.addf %106, %112 : vector<2x128xf32>
    %c6_119 = arith.constant 6 : index
    %c0_120 = arith.constant 0 : index
    %c0_121 = arith.constant 0 : index
    %114 = vector.load %arg5[%c6_119, %c0_120, %c0_121] : memref<16x2x32xf32, #tpu.memory_space<vmem>>, vector<1x2x32xf32>
    %115 = vector.shape_cast %114 : vector<1x2x32xf32> to vector<2x32xf32>
    %cst_122 = arith.constant dense<0.000000e+00> : vector<2x128xf32>
    %116 = tpu.matmul %115, %70, %cst_122 {dimension_numbers = #tpu.dot_dimension_numbers<[1], [0], [0], [1], [0, 0, 1, 1], [], []>} : vector<2x32xf32>, vector<32x128xf32>, vector<2x128xf32> -> vector<2x128xf32>
    %c6_123 = arith.constant 6 : index
    %c0_124 = arith.constant 0 : index
    %c0_125 = arith.constant 0 : index
    %117 = vector.load %arg6[%c6_123, %c0_124, %c0_125] : memref<16x128x128xf32, #tpu.memory_space<vmem>>, vector<1x128x128xf32>
    %118 = vector.shape_cast %117 : vector<1x128x128xf32> to vector<128x128xf32>
    %cst_126 = arith.constant dense<0.000000e+00> : vector<2x128xf32>
    %119 = tpu.matmul %116, %118, %cst_126 {dimension_numbers = #tpu.dot_dimension_numbers<[1], [0], [0], [1], [0, 0, 1, 1], [], []>} : vector<2x128xf32>, vector<128x128xf32>, vector<2x128xf32> -> vector<2x128xf32>
    %120 = arith.addf %113, %119 : vector<2x128xf32>
    %c7_127 = arith.constant 7 : index
    %c0_128 = arith.constant 0 : index
    %c0_129 = arith.constant 0 : index
    %121 = vector.load %arg5[%c7_127, %c0_128, %c0_129] : memref<16x2x32xf32, #tpu.memory_space<vmem>>, vector<1x2x32xf32>
    %122 = vector.shape_cast %121 : vector<1x2x32xf32> to vector<2x32xf32>
    %cst_130 = arith.constant dense<0.000000e+00> : vector<2x128xf32>
    %123 = tpu.matmul %122, %70, %cst_130 {dimension_numbers = #tpu.dot_dimension_numbers<[1], [0], [0], [1], [0, 0, 1, 1], [], []>} : vector<2x32xf32>, vector<32x128xf32>, vector<2x128xf32> -> vector<2x128xf32>
    %c7_131 = arith.constant 7 : index
    %c0_132 = arith.constant 0 : index
    %c0_133 = arith.constant 0 : index
    %124 = vector.load %arg6[%c7_131, %c0_132, %c0_133] : memref<16x128x128xf32, #tpu.memory_space<vmem>>, vector<1x128x128xf32>
    %125 = vector.shape_cast %124 : vector<1x128x128xf32> to vector<128x128xf32>
    %cst_134 = arith.constant dense<0.000000e+00> : vector<2x128xf32>
    %126 = tpu.matmul %123, %125, %cst_134 {dimension_numbers = #tpu.dot_dimension_numbers<[1], [0], [0], [1], [0, 0, 1, 1], [], []>} : vector<2x128xf32>, vector<128x128xf32>, vector<2x128xf32> -> vector<2x128xf32>
    %127 = arith.addf %120, %126 : vector<2x128xf32>
    %c8_135 = arith.constant 8 : index
    %c0_136 = arith.constant 0 : index
    %c0_137 = arith.constant 0 : index
    %128 = vector.load %arg5[%c8_135, %c0_136, %c0_137] : memref<16x2x32xf32, #tpu.memory_space<vmem>>, vector<1x2x32xf32>
    %129 = vector.shape_cast %128 : vector<1x2x32xf32> to vector<2x32xf32>
    %cst_138 = arith.constant dense<0.000000e+00> : vector<2x128xf32>
    %130 = tpu.matmul %129, %70, %cst_138 {dimension_numbers = #tpu.dot_dimension_numbers<[1], [0], [0], [1], [0, 0, 1, 1], [], []>} : vector<2x32xf32>, vector<32x128xf32>, vector<2x128xf32> -> vector<2x128xf32>
    %c8_139 = arith.constant 8 : index
    %c0_140 = arith.constant 0 : index
    %c0_141 = arith.constant 0 : index
    %131 = vector.load %arg6[%c8_139, %c0_140, %c0_141] : memref<16x128x128xf32, #tpu.memory_space<vmem>>, vector<1x128x128xf32>
    %132 = vector.shape_cast %131 : vector<1x128x128xf32> to vector<128x128xf32>
    %cst_142 = arith.constant dense<0.000000e+00> : vector<2x128xf32>
    %133 = tpu.matmul %130, %132, %cst_142 {dimension_numbers = #tpu.dot_dimension_numbers<[1], [0], [0], [1], [0, 0, 1, 1], [], []>} : vector<2x128xf32>, vector<128x128xf32>, vector<2x128xf32> -> vector<2x128xf32>
    %134 = arith.addf %127, %133 : vector<2x128xf32>
    %c9 = arith.constant 9 : index
    %c0_143 = arith.constant 0 : index
    %c0_144 = arith.constant 0 : index
    %135 = vector.load %arg5[%c9, %c0_143, %c0_144] : memref<16x2x32xf32, #tpu.memory_space<vmem>>, vector<1x2x32xf32>
    %136 = vector.shape_cast %135 : vector<1x2x32xf32> to vector<2x32xf32>
    %cst_145 = arith.constant dense<0.000000e+00> : vector<2x128xf32>
    %137 = tpu.matmul %136, %70, %cst_145 {dimension_numbers = #tpu.dot_dimension_numbers<[1], [0], [0], [1], [0, 0, 1, 1], [], []>} : vector<2x32xf32>, vector<32x128xf32>, vector<2x128xf32> -> vector<2x128xf32>
    %c9_146 = arith.constant 9 : index
    %c0_147 = arith.constant 0 : index
    %c0_148 = arith.constant 0 : index
    %138 = vector.load %arg6[%c9_146, %c0_147, %c0_148] : memref<16x128x128xf32, #tpu.memory_space<vmem>>, vector<1x128x128xf32>
    %139 = vector.shape_cast %138 : vector<1x128x128xf32> to vector<128x128xf32>
    %cst_149 = arith.constant dense<0.000000e+00> : vector<2x128xf32>
    %140 = tpu.matmul %137, %139, %cst_149 {dimension_numbers = #tpu.dot_dimension_numbers<[1], [0], [0], [1], [0, 0, 1, 1], [], []>} : vector<2x128xf32>, vector<128x128xf32>, vector<2x128xf32> -> vector<2x128xf32>
    %141 = arith.addf %134, %140 : vector<2x128xf32>
    %c10 = arith.constant 10 : index
    %c0_150 = arith.constant 0 : index
    %c0_151 = arith.constant 0 : index
    %142 = vector.load %arg5[%c10, %c0_150, %c0_151] : memref<16x2x32xf32, #tpu.memory_space<vmem>>, vector<1x2x32xf32>
    %143 = vector.shape_cast %142 : vector<1x2x32xf32> to vector<2x32xf32>
    %cst_152 = arith.constant dense<0.000000e+00> : vector<2x128xf32>
    %144 = tpu.matmul %143, %70, %cst_152 {dimension_numbers = #tpu.dot_dimension_numbers<[1], [0], [0], [1], [0, 0, 1, 1], [], []>} : vector<2x32xf32>, vector<32x128xf32>, vector<2x128xf32> -> vector<2x128xf32>
    %c10_153 = arith.constant 10 : index
    %c0_154 = arith.constant 0 : index
    %c0_155 = arith.constant 0 : index
    %145 = vector.load %arg6[%c10_153, %c0_154, %c0_155] : memref<16x128x128xf32, #tpu.memory_space<vmem>>, vector<1x128x128xf32>
    %146 = vector.shape_cast %145 : vector<1x128x128xf32> to vector<128x128xf32>
    %cst_156 = arith.constant dense<0.000000e+00> : vector<2x128xf32>
    %147 = tpu.matmul %144, %146, %cst_156 {dimension_numbers = #tpu.dot_dimension_numbers<[1], [0], [0], [1], [0, 0, 1, 1], [], []>} : vector<2x128xf32>, vector<128x128xf32>, vector<2x128xf32> -> vector<2x128xf32>
    %148 = arith.addf %141, %147 : vector<2x128xf32>
    %c11 = arith.constant 11 : index
    %c0_157 = arith.constant 0 : index
    %c0_158 = arith.constant 0 : index
    %149 = vector.load %arg5[%c11, %c0_157, %c0_158] : memref<16x2x32xf32, #tpu.memory_space<vmem>>, vector<1x2x32xf32>
    %150 = vector.shape_cast %149 : vector<1x2x32xf32> to vector<2x32xf32>
    %cst_159 = arith.constant dense<0.000000e+00> : vector<2x128xf32>
    %151 = tpu.matmul %150, %70, %cst_159 {dimension_numbers = #tpu.dot_dimension_numbers<[1], [0], [0], [1], [0, 0, 1, 1], [], []>} : vector<2x32xf32>, vector<32x128xf32>, vector<2x128xf32> -> vector<2x128xf32>
    %c11_160 = arith.constant 11 : index
    %c0_161 = arith.constant 0 : index
    %c0_162 = arith.constant 0 : index
    %152 = vector.load %arg6[%c11_160, %c0_161, %c0_162] : memref<16x128x128xf32, #tpu.memory_space<vmem>>, vector<1x128x128xf32>
    %153 = vector.shape_cast %152 : vector<1x128x128xf32> to vector<128x128xf32>
    %cst_163 = arith.constant dense<0.000000e+00> : vector<2x128xf32>
    %154 = tpu.matmul %151, %153, %cst_163 {dimension_numbers = #tpu.dot_dimension_numbers<[1], [0], [0], [1], [0, 0, 1, 1], [], []>} : vector<2x128xf32>, vector<128x128xf32>, vector<2x128xf32> -> vector<2x128xf32>
    %155 = arith.addf %148, %154 : vector<2x128xf32>
    %c12 = arith.constant 12 : index
    %c0_164 = arith.constant 0 : index
    %c0_165 = arith.constant 0 : index
    %156 = vector.load %arg5[%c12, %c0_164, %c0_165] : memref<16x2x32xf32, #tpu.memory_space<vmem>>, vector<1x2x32xf32>
    %157 = vector.shape_cast %156 : vector<1x2x32xf32> to vector<2x32xf32>
    %cst_166 = arith.constant dense<0.000000e+00> : vector<2x128xf32>
    %158 = tpu.matmul %157, %70, %cst_166 {dimension_numbers = #tpu.dot_dimension_numbers<[1], [0], [0], [1], [0, 0, 1, 1], [], []>} : vector<2x32xf32>, vector<32x128xf32>, vector<2x128xf32> -> vector<2x128xf32>
    %c12_167 = arith.constant 12 : index
    %c0_168 = arith.constant 0 : index
    %c0_169 = arith.constant 0 : index
    %159 = vector.load %arg6[%c12_167, %c0_168, %c0_169] : memref<16x128x128xf32, #tpu.memory_space<vmem>>, vector<1x128x128xf32>
    %160 = vector.shape_cast %159 : vector<1x128x128xf32> to vector<128x128xf32>
    %cst_170 = arith.constant dense<0.000000e+00> : vector<2x128xf32>
    %161 = tpu.matmul %158, %160, %cst_170 {dimension_numbers = #tpu.dot_dimension_numbers<[1], [0], [0], [1], [0, 0, 1, 1], [], []>} : vector<2x128xf32>, vector<128x128xf32>, vector<2x128xf32> -> vector<2x128xf32>
    %162 = arith.addf %155, %161 : vector<2x128xf32>
    %c13 = arith.constant 13 : index
    %c0_171 = arith.constant 0 : index
    %c0_172 = arith.constant 0 : index
    %163 = vector.load %arg5[%c13, %c0_171, %c0_172] : memref<16x2x32xf32, #tpu.memory_space<vmem>>, vector<1x2x32xf32>
    %164 = vector.shape_cast %163 : vector<1x2x32xf32> to vector<2x32xf32>
    %cst_173 = arith.constant dense<0.000000e+00> : vector<2x128xf32>
    %165 = tpu.matmul %164, %70, %cst_173 {dimension_numbers = #tpu.dot_dimension_numbers<[1], [0], [0], [1], [0, 0, 1, 1], [], []>} : vector<2x32xf32>, vector<32x128xf32>, vector<2x128xf32> -> vector<2x128xf32>
    %c13_174 = arith.constant 13 : index
    %c0_175 = arith.constant 0 : index
    %c0_176 = arith.constant 0 : index
    %166 = vector.load %arg6[%c13_174, %c0_175, %c0_176] : memref<16x128x128xf32, #tpu.memory_space<vmem>>, vector<1x128x128xf32>
    %167 = vector.shape_cast %166 : vector<1x128x128xf32> to vector<128x128xf32>
    %cst_177 = arith.constant dense<0.000000e+00> : vector<2x128xf32>
    %168 = tpu.matmul %165, %167, %cst_177 {dimension_numbers = #tpu.dot_dimension_numbers<[1], [0], [0], [1], [0, 0, 1, 1], [], []>} : vector<2x128xf32>, vector<128x128xf32>, vector<2x128xf32> -> vector<2x128xf32>
    %169 = arith.addf %162, %168 : vector<2x128xf32>
    %c14 = arith.constant 14 : index
    %c0_178 = arith.constant 0 : index
    %c0_179 = arith.constant 0 : index
    %170 = vector.load %arg5[%c14, %c0_178, %c0_179] : memref<16x2x32xf32, #tpu.memory_space<vmem>>, vector<1x2x32xf32>
    %171 = vector.shape_cast %170 : vector<1x2x32xf32> to vector<2x32xf32>
    %cst_180 = arith.constant dense<0.000000e+00> : vector<2x128xf32>
    %172 = tpu.matmul %171, %70, %cst_180 {dimension_numbers = #tpu.dot_dimension_numbers<[1], [0], [0], [1], [0, 0, 1, 1], [], []>} : vector<2x32xf32>, vector<32x128xf32>, vector<2x128xf32> -> vector<2x128xf32>
    %c14_181 = arith.constant 14 : index
    %c0_182 = arith.constant 0 : index
    %c0_183 = arith.constant 0 : index
    %173 = vector.load %arg6[%c14_181, %c0_182, %c0_183] : memref<16x128x128xf32, #tpu.memory_space<vmem>>, vector<1x128x128xf32>
    %174 = vector.shape_cast %173 : vector<1x128x128xf32> to vector<128x128xf32>
    %cst_184 = arith.constant dense<0.000000e+00> : vector<2x128xf32>
    %175 = tpu.matmul %172, %174, %cst_184 {dimension_numbers = #tpu.dot_dimension_numbers<[1], [0], [0], [1], [0, 0, 1, 1], [], []>} : vector<2x128xf32>, vector<128x128xf32>, vector<2x128xf32> -> vector<2x128xf32>
    %176 = arith.addf %169, %175 : vector<2x128xf32>
    %c15 = arith.constant 15 : index
    %c0_185 = arith.constant 0 : index
    %c0_186 = arith.constant 0 : index
    %177 = vector.load %arg5[%c15, %c0_185, %c0_186] : memref<16x2x32xf32, #tpu.memory_space<vmem>>, vector<1x2x32xf32>
    %178 = vector.shape_cast %177 : vector<1x2x32xf32> to vector<2x32xf32>
    %cst_187 = arith.constant dense<0.000000e+00> : vector<2x128xf32>
    %179 = tpu.matmul %178, %70, %cst_187 {dimension_numbers = #tpu.dot_dimension_numbers<[1], [0], [0], [1], [0, 0, 1, 1], [], []>} : vector<2x32xf32>, vector<32x128xf32>, vector<2x128xf32> -> vector<2x128xf32>
    %c15_188 = arith.constant 15 : index
    %c0_189 = arith.constant 0 : index
    %c0_190 = arith.constant 0 : index
    %180 = vector.load %arg6[%c15_188, %c0_189, %c0_190] : memref<16x128x128xf32, #tpu.memory_space<vmem>>, vector<1x128x128xf32>
    %181 = vector.shape_cast %180 : vector<1x128x128xf32> to vector<128x128xf32>
    %cst_191 = arith.constant dense<0.000000e+00> : vector<2x128xf32>
    %182 = tpu.matmul %179, %181, %cst_191 {dimension_numbers = #tpu.dot_dimension_numbers<[1], [0], [0], [1], [0, 0, 1, 1], [], []>} : vector<2x128xf32>, vector<128x128xf32>, vector<2x128xf32> -> vector<2x128xf32>
    %183 = arith.addf %176, %182 : vector<2x128xf32>
    %c0_192 = arith.constant 0 : index
    %c0_193 = arith.constant 0 : index
    %184 = vector.load %arg7[%c0_192, %c0_193] : memref<2x128xf32, #tpu.memory_space<vmem>>, vector<2x128xf32>
    tpu.vector_store %arg7[%c0_192, %c0_193], %183 {strides = array<i32>} : memref<2x128xf32, #tpu.memory_space<vmem>>, vector<2x128xf32>,
    return
  }
  func.func @transform_0(%arg0: i32) -> (i32, i32) {
    %c0_i32 = arith.constant 0 : i32
    %c0_i32_0 = arith.constant 0 : i32
    return %arg0, %c0_i32 : i32, i32
  }
  func.func @transform_1(%arg0: i32) -> (i32, i32) {
    %c0_i32 = arith.constant 0 : i32
    %c0_i32_0 = arith.constant 0 : i32
    %c0_i32_1 = arith.constant 0 : i32
    return %c0_i32, %c0_i32_0 : i32, i32
  }
  func.func @transform_2(%arg0: i32) -> (i32, i32, i32) {
    %c0_i32 = arith.constant 0 : i32
    %c0_i32_0 = arith.constant 0 : i32
    %c0_i32_1 = arith.constant 0 : i32
    %c0_i32_2 = arith.constant 0 : i32
    return %c0_i32, %c0_i32_0, %c0_i32_1 : i32, i32, i32
  }
  func.func @transform_3(%arg0: i32) -> (i32, i32, i32) {
    %c0_i32 = arith.constant 0 : i32
    %c0_i32_0 = arith.constant 0 : i32
    %c0_i32_1 = arith.constant 0 : i32
    %c0_i32_2 = arith.constant 0 : i32
    return %c0_i32, %c0_i32_0, %c0_i32_1 : i32, i32, i32
  }
  func.func @transform_4(%arg0: i32) -> (i32, i32, i32) {
    %c0_i32 = arith.constant 0 : i32
    %c0_i32_0 = arith.constant 0 : i32
    %c0_i32_1 = arith.constant 0 : i32
    %c0_i32_2 = arith.constant 0 : i32
    return %c0_i32, %c0_i32_0, %c0_i32_1 : i32, i32, i32
  }
  func.func @transform_5(%arg0: i32) -> (i32, i32, i32) {
    %c0_i32 = arith.constant 0 : i32
    %c0_i32_0 = arith.constant 0 : i32
    %c0_i32_1 = arith.constant 0 : i32
    %c0_i32_2 = arith.constant 0 : i32
    return %c0_i32, %c0_i32_0, %c0_i32_1 : i32, i32, i32
  }
  func.func @transform_6(%arg0: i32) -> (i32, i32) {
    %c0_i32 = arith.constant 0 : i32
    %c0_i32_0 = arith.constant 0 : i32
    return %arg0, %c0_i32 : i32, i32
  }
}

</mosaic_0001>

<llo_original>
// kernel: autoencoder_classifier_forward.1
$region0: #{autoencoder_classifier_forward.1}
  #allocation0 [shape = 'u32[]', space=smem, size = 0x4, offset = 0x4, fixed_abs, tag = 'smem constant byte address 0x4 - core index']
  #allocation1 [shape = 'u32[144,128]{1,0:T(1,128)}', space=vmem, size = 0x12000, scoped, tag = 'internal scratch']
  %s0 = inlined_call_operand.vmem [shape: f32[128,128], index: 0, kind: input, shape index: {}]
  %s1 = inlined_call_operand.vmem [shape: f32[128,128], index: 1, kind: input, shape index: {}]
  %s2 = inlined_call_operand.vmem [shape: f32[9,32,128], index: 2, kind: input, shape index: {}]
  %s3 = inlined_call_operand.vmem [shape: f32[9,128,128], index: 3, kind: input, shape index: {}]
  %s4 = inlined_call_operand.vmem [shape: f32[16,2,32], index: 4, kind: input, shape index: {}]
  %s5 = inlined_call_operand.vmem [shape: f32[16,128,128], index: 5, kind: input, shape index: {}]
  %s6 = inlined_call_operand.hbm [shape: f32[2,128], index: 6, kind: output, shape index: {}]
  %s7 = sld [smem:[#allocation0]]
  $region34: #{autoencoder_classifier_forward.1} parent=0
    _
  %s9 = ssub.s32 1, %s7
  %s10 = scalar_select 0, %s9, %s7
  $region1: #{autoencoder_classifier_forward.1} parent=0
    #allocation2 [shape = 'u8[1024]{0}', space=vmem, size = 0x400, scoped, tag = 'output window, operand 0, single buffered']
    #allocation3 [shape = 's32[1]{0}', space=sflag, size = 0x4, scoped, tag = 'scoped memory for autoencoder_classifier_forward.1']
    %11 = vsyncpa [#allocation3], 0
    // Predicated region
    $region2: #{autoencoder_classifier_forward.1} parent=1 // pred_check
      _
    $region3: #{autoencoder_classifier_forward.1} parent=1 // pred_check_branch
      %13 = sbr.rel (0) target = $region5
    $region4: #{autoencoder_classifier_forward.1} parent=1 // pred_region
      _
    $region5: #{autoencoder_classifier_forward.1} parent=1 // pred_fallthru
      _
    // Predicated region
    $region6: #{autoencoder_classifier_forward.1} parent=1 // pred_check
      _
    $region7: #{autoencoder_classifier_forward.1} parent=1 // pred_check_branch
      %15 = sbr.rel (0) target = $region9
    $region8: #{autoencoder_classifier_forward.1} parent=1 // pred_region
      _
    $region9: #{autoencoder_classifier_forward.1} parent=1 // pred_fallthru
      _
    // Predicated region
    $region10: #{autoencoder_classifier_forward.1} parent=1 // pred_check
      _
    $region11: #{autoencoder_classifier_forward.1} parent=1 // pred_check_branch
      %17 = sbr.rel (0) target = $region13
    $region12: #{autoencoder_classifier_forward.1} parent=1 // pred_region
      _
    $region13: #{autoencoder_classifier_forward.1} parent=1 // pred_fallthru
      _
    // Predicated region
    $region14: #{autoencoder_classifier_forward.1} parent=1 // pred_check
      _
    $region15: #{autoencoder_classifier_forward.1} parent=1 // pred_check_branch
      %19 = sbr.rel (0) target = $region17
    $region16: #{autoencoder_classifier_forward.1} parent=1 // pred_region
      _
    $region17: #{autoencoder_classifier_forward.1} parent=1 // pred_fallthru
      _
    // Predicated region
    $region18: #{autoencoder_classifier_forward.1} parent=1 // pred_check
      _
    $region19: #{autoencoder_classifier_forward.1} parent=1 // pred_check_branch
      %21 = sbr.rel (0) target = $region21
    $region20: #{autoencoder_classifier_forward.1} parent=1 // pred_region
      _
    $region21: #{autoencoder_classifier_forward.1} parent=1 // pred_fallthru
      _
    // Predicated region
    $region22: #{autoencoder_classifier_forward.1} parent=1 // pred_check
      _
    $region23: #{autoencoder_classifier_forward.1} parent=1 // pred_check_branch
      %23 = sbr.rel (0) target = $region25
    $region24: #{autoencoder_classifier_forward.1} parent=1 // pred_region
      _
    $region25: #{autoencoder_classifier_forward.1} parent=1 // pred_fallthru
      _
    %v24 = vld [vmem:[%s0] sm:$0xff]
    %v25 = vld [vmem:[%s0 + $0x8] sm:$0xff]
    %v26 = vld [vmem:[%s0 + $0x10] sm:$0xff]
    %v27 = vld [vmem:[%s0 + $0x18] sm:$0xff]
    %v28 = vld [vmem:[%s0 + $0x20] sm:$0xff]
    %v29 = vld [vmem:[%s0 + $0x28] sm:$0xff]
    %v30 = vld [vmem:[%s0 + $0x30] sm:$0xff]
    %v31 = vld [vmem:[%s0 + $0x38] sm:$0xff]
    %v32 = vld [vmem:[%s0 + $0x40] sm:$0xff]
    %v33 = vld [vmem:[%s0 + $0x48] sm:$0xff]
    %v34 = vld [vmem:[%s0 + $0x50] sm:$0xff]
    %v35 = vld [vmem:[%s0 + $0x58] sm:$0xff]
    %v36 = vld [vmem:[%s0 + $0x60] sm:$0xff]
    %v37 = vld [vmem:[%s0 + $0x68] sm:$0xff]
    %v38 = vld [vmem:[%s0 + $0x70] sm:$0xff]
    %v39 = vld [vmem:[%s0 + $0x78] sm:$0xff]
    %v40 = vld [vmem:[%s1] sm:$0xff]
    %v41 = vld [vmem:[%s1 + $0x8] sm:$0xff]
    %v42 = vld [vmem:[%s1 + $0x10] sm:$0xff]
    %v43 = vld [vmem:[%s1 + $0x18] sm:$0xff]
    %v44 = vld [vmem:[%s1 + $0x20] sm:$0xff]
    %v45 = vld [vmem:[%s1 + $0x28] sm:$0xff]
    %v46 = vld [vmem:[%s1 + $0x30] sm:$0xff]
    %v47 = vld [vmem:[%s1 + $0x38] sm:$0xff]
    %v48 = vld [vmem:[%s1 + $0x40] sm:$0xff]
    %v49 = vld [vmem:[%s1 + $0x48] sm:$0xff]
    %v50 = vld [vmem:[%s1 + $0x50] sm:$0xff]
    %v51 = vld [vmem:[%s1 + $0x58] sm:$0xff]
    %v52 = vld [vmem:[%s1 + $0x60] sm:$0xff]
    %v53 = vld [vmem:[%s1 + $0x68] sm:$0xff]
    %v54 = vld [vmem:[%s1 + $0x70] sm:$0xff]
    %v55 = vld [vmem:[%s1 + $0x78] sm:$0xff]
    %56 = vmatprep.subr.mxu0 0.0
    %57 = vmatpush1.msra.mxu0 %v55
    %58 = vmatprep.subr.mxu0 0.0
    %59 = vmatpush1.msra.mxu0 %v54
    %60 = vmatprep.subr.mxu0 0.0
    %61 = vmatpush1.msra.mxu0 %v53
    %62 = vmatprep.subr.mxu0 0.0
    %63 = vmatpush1.msra.mxu0 %v52
    %64 = vmatprep.subr.mxu0 0.0
    %65 = vmatpush1.msra.mxu0 %v51
    %66 = vmatprep.subr.mxu0 0.0
    %67 = vmatpush1.msra.mxu0 %v50
    %68 = vmatprep.subr.mxu0 0.0
    %69 = vmatpush1.msra.mxu0 %v49
    %70 = vmatprep.subr.mxu0 0.0
    %71 = vmatpush1.msra.mxu0 %v48
    %72 = vmatprep.subr.mxu0 0.0
    %73 = vmatpush1.msra.mxu0 %v47
    %74 = vmatprep.subr.mxu0 0.0
    %75 = vmatpush1.msra.mxu0 %v46
    %76 = vmatprep.subr.mxu0 0.0
    %77 = vmatpush1.msra.mxu0 %v45
    %78 = vmatprep.subr.mxu0 0.0
    %79 = vmatpush1.msra.mxu0 %v44
    %80 = vmatprep.subr.mxu0 0.0
    %81 = vmatpush1.msra.mxu0 %v43
    %82 = vmatprep.subr.mxu0 0.0
    %83 = vmatpush1.msra.mxu0 %v42
    %84 = vmatprep.subr.mxu0 0.0
    %85 = vmatpush1.msra.mxu0 %v41
    %86 = vmatprep.subr.mxu0 0.0
    %87 = vmatpush1.msra.mxu0 %v40
    %88 = vmatprep.subr.mxu0 0.0
    %89 = vmatpush2.msra.mxu0 0.0
    %90 = vmatprep.subr.mxu0 0.0
    %91 = vmatpush2.msra.mxu0 0.0
    %92 = vmatprep.subr.mxu0 0.0
    %93 = vmatpush2.msra.mxu0 0.0
    %94 = vmatprep.subr.mxu0 0.0
    %95 = vmatpush2.msra.mxu0 0.0
    %96 = vmatprep.subr.mxu0 0.0
    %97 = vmatpush2.msra.mxu0 0.0
    %98 = vmatprep.subr.mxu0 0.0
    %99 = vmatpush2.msra.mxu0 0.0
    %100 = vmatprep.subr.mxu0 0.0
    %101 = vmatpush2.msra.mxu0 0.0
    %102 = vmatprep.subr.mxu0 0.0
    %103 = vmatpush2.msra.mxu0 0.0
    %104 = vmatprep.subr.mxu0 0.0
    %105 = vmatpush2.msra.mxu0 0.0
    %106 = vmatprep.subr.mxu0 0.0
    %107 = vmatpush2.msra.mxu0 0.0
    %108 = vmatprep.subr.mxu0 0.0
    %109 = vmatpush2.msra.mxu0 0.0
    %110 = vmatprep.subr.mxu0 0.0
    %111 = vmatpush2.msra.mxu0 0.0
    %112 = vmatprep.subr.mxu0 0.0
    %113 = vmatpush2.msra.mxu0 0.0
    %114 = vmatprep.subr.mxu0 0.0
    %115 = vmatpush2.msra.mxu0 0.0
    %116 = vmatprep.subr.mxu0 0.0
    %117 = vmatpush2.msra.mxu0 0.0
    %118 = vmatprep.subr.mxu0 0.0
    %119 = vmatpush2.msra.mxu0 0.0
    %120 = vmatprep.mubr.f32.mxu0 0.0
    %121 = vmatmul.mubr.f32.gmra.mxu0 %v24
    %v122 = vpop.f32.mrf.mxu0
    %v123 = vadd.f32 0.0, %v122
    %v124 = vpop.f32.mrf.mxu0
    %125 = vmatprep.mubr.f32.mxu0 0.0
    %126 = vmatmul.mubr.f32.gmra.mxu0 %v25
    %v127 = vpop.f32.mrf.mxu0
    %v128 = vadd.f32 0.0, %v127
    %v129 = vpop.f32.mrf.mxu0
    %130 = vmatprep.mubr.f32.mxu0 0.0
    %131 = vmatmul.mubr.f32.gmra.mxu0 %v26
    %v132 = vpop.f32.mrf.mxu0
    %v133 = vadd.f32 0.0, %v132
    %v134 = vpop.f32.mrf.mxu0
    %135 = vmatprep.mubr.f32.mxu0 0.0
    %136 = vmatmul.mubr.f32.gmra.mxu0 %v27
    %v137 = vpop.f32.mrf.mxu0
    %v138 = vadd.f32 0.0, %v137
    %v139 = vpop.f32.mrf.mxu0
    %140 = vmatprep.mubr.f32.mxu0 0.0
    %141 = vmatmul.mubr.f32.gmra.mxu0 %v28
    %v142 = vpop.f32.mrf.mxu0
    %v143 = vadd.f32 0.0, %v142
    %v144 = vpop.f32.mrf.mxu0
    %145 = vmatprep.mubr.f32.mxu0 0.0
    %146 = vmatmul.mubr.f32.gmra.mxu0 %v29
    %v147 = vpop.f32.mrf.mxu0
    %v148 = vadd.f32 0.0, %v147
    %v149 = vpop.f32.mrf.mxu0
    %150 = vmatprep.mubr.f32.mxu0 0.0
    %151 = vmatmul.mubr.f32.gmra.mxu0 %v30
    %v152 = vpop.f32.mrf.mxu0
    %v153 = vadd.f32 0.0, %v152
    %v154 = vpop.f32.mrf.mxu0
    %155 = vmatprep.mubr.f32.mxu0 0.0
    %156 = vmatmul.mubr.f32.gmra.mxu0 %v31
    %v157 = vpop.f32.mrf.mxu0
    %v158 = vadd.f32 0.0, %v157
    %v159 = vpop.f32.mrf.mxu0
    %160 = vmatprep.mubr.f32.mxu0 0.0
    %161 = vmatmul.mubr.f32.gmra.mxu0 %v32
    %v162 = vpop.f32.mrf.mxu0
    %v163 = vadd.f32 0.0, %v162
    %v164 = vpop.f32.mrf.mxu0
    %165 = vmatprep.mubr.f32.mxu0 0.0
    %166 = vmatmul.mubr.f32.gmra.mxu0 %v33
    %v167 = vpop.f32.mrf.mxu0
    %v168 = vadd.f32 0.0, %v167
    %v169 = vpop.f32.mrf.mxu0
    %170 = vmatprep.mubr.f32.mxu0 0.0
    %171 = vmatmul.mubr.f32.gmra.mxu0 %v34
    %v172 = vpop.f32.mrf.mxu0
    %v173 = vadd.f32 0.0, %v172
    %v174 = vpop.f32.mrf.mxu0
    %175 = vmatprep.mubr.f32.mxu0 0.0
    %176 = vmatmul.mubr.f32.gmra.mxu0 %v35
    %v177 = vpop.f32.mrf.mxu0
    %v178 = vadd.f32 0.0, %v177
    %v179 = vpop.f32.mrf.mxu0
    %180 = vmatprep.mubr.f32.mxu0 0.0
    %181 = vmatmul.mubr.f32.gmra.mxu0 %v36
    %v182 = vpop.f32.mrf.mxu0
    %v183 = vadd.f32 0.0, %v182
    %v184 = vpop.f32.mrf.mxu0
    %185 = vmatprep.mubr.f32.mxu0 0.0
    %186 = vmatmul.mubr.f32.gmra.mxu0 %v37
    %v187 = vpop.f32.mrf.mxu0
    %v188 = vadd.f32 0.0, %v187
    %v189 = vpop.f32.mrf.mxu0
    %190 = vmatprep.mubr.f32.mxu0 0.0
    %191 = vmatmul.mubr.f32.gmra.mxu0 %v38
    %v192 = vpop.f32.mrf.mxu0
    %v193 = vadd.f32 0.0, %v192
    %v194 = vpop.f32.mrf.mxu0
    %195 = vmatprep.mubr.f32.mxu0 0.0
    %196 = vmatmul.mubr.f32.gmra.mxu0 %v39
    %v197 = vpop.f32.mrf.mxu0
    %v198 = vadd.f32 0.0, %v197
    %v199 = vpop.f32.mrf.mxu0
    %200 = vdwg.mxu0
    %v201 = vmax.f32 %v123, 0.0
    %v202 = vmax.f32 %v128, 0.0
    %v203 = vmax.f32 %v133, 0.0
    %v204 = vmax.f32 %v138, 0.0
    %v205 = vmax.f32 %v143, 0.0
    %v206 = vmax.f32 %v148, 0.0
    %v207 = vmax.f32 %v153, 0.0
    %v208 = vmax.f32 %v158, 0.0
    %v209 = vmax.f32 %v163, 0.0
    %v210 = vmax.f32 %v168, 0.0
    %v211 = vmax.f32 %v173, 0.0
    %v212 = vmax.f32 %v178, 0.0
    %v213 = vmax.f32 %v183, 0.0
    %v214 = vmax.f32 %v188, 0.0
    %v215 = vmax.f32 %v193, 0.0
    %v216 = vmax.f32 %v198, 0.0
    %v217 = vld [vmem:[%s2] sm:$0xff]
    %v218 = vld [vmem:[%s2 + $0x8] sm:$0xff]
    %v219 = vld [vmem:[%s2 + $0x10] sm:$0xff]
    %v220 = vld [vmem:[%s2 + $0x18] sm:$0xff]
    %221 = vmatprep.subr.mxu0 0.0
    %222 = vmatpush1.msra.mxu0 %v216
    %223 = vmatprep.subr.mxu0 0.0
    %224 = vmatpush1.msra.mxu0 %v215
    %225 = vmatprep.subr.mxu0 0.0
    %226 = vmatpush1.msra.mxu0 %v214
    %227 = vmatprep.subr.mxu0 0.0
    %228 = vmatpush1.msra.mxu0 %v213
    %229 = vmatprep.subr.mxu0 0.0
    %230 = vmatpush1.msra.mxu0 %v212
    %231 = vmatprep.subr.mxu0 0.0
    %232 = vmatpush1.msra.mxu0 %v211
    %233 = vmatprep.subr.mxu0 0.0
    %234 = vmatpush1.msra.mxu0 %v210
    %235 = vmatprep.subr.mxu0 0.0
    %236 = vmatpush1.msra.mxu0 %v209
    %237 = vmatprep.subr.mxu0 0.0
    %238 = vmatpush1.msra.mxu0 %v208
    %239 = vmatprep.subr.mxu0 0.0
    %240 = vmatpush1.msra.mxu0 %v207
    %241 = vmatprep.subr.mxu0 0.0
    %242 = vmatpush1.msra.mxu0 %v206
    %243 = vmatprep.subr.mxu0 0.0
    %244 = vmatpush1.msra.mxu0 %v205
    %245 = vmatprep.subr.mxu0 0.0
    %246 = vmatpush1.msra.mxu0 %v204
    %247 = vmatprep.subr.mxu0 0.0
    %248 = vmatpush1.msra.mxu0 %v203
    %249 = vmatprep.subr.mxu0 0.0
    %250 = vmatpush1.msra.mxu0 %v202
    %251 = vmatprep.subr.mxu0 0.0
    %252 = vmatpush1.msra.mxu0 %v201
    %253 = vmatprep.subr.mxu0 0.0
    %254 = vmatpush2.msra.mxu0 0.0
    %255 = vmatprep.subr.mxu0 0.0
    %256 = vmatpush2.msra.mxu0 0.0
    %257 = vmatprep.subr.mxu0 0.0
    %258 = vmatpush2.msra.mxu0 0.0
    %259 = vmatprep.subr.mxu0 0.0
    %260 = vmatpush2.msra.mxu0 0.0
    %261 = vmatprep.subr.mxu0 0.0
    %262 = vmatpush2.msra.mxu0 0.0
    %263 = vmatprep.subr.mxu0 0.0
    %264 = vmatpush2.msra.mxu0 0.0
    %265 = vmatprep.subr.mxu0 0.0
    %266 = vmatpush2.msra.mxu0 0.0
    %267 = vmatprep.subr.mxu0 0.0
    %268 = vmatpush2.msra.mxu0 0.0
    %269 = vmatprep.subr.mxu0 0.0
    %270 = vmatpush2.msra.mxu0 0.0
    %271 = vmatprep.subr.mxu0 0.0
    %272 = vmatpush2.msra.mxu0 0.0
    %273 = vmatprep.subr.mxu0 0.0
    %274 = vmatpush2.msra.mxu0 0.0
    %275 = vmatprep.subr.mxu0 0.0
    %276 = vmatpush2.msra.mxu0 0.0
    %277 = vmatprep.subr.mxu0 0.0
    %278 = vmatpush2.msra.mxu0 0.0
    %279 = vmatprep.subr.mxu0 0.0
    %280 = vmatpush2.msra.mxu0 0.0
    %281 = vmatprep.subr.mxu0 0.0
    %282 = vmatpush2.msra.mxu0 0.0
    %283 = vmatprep.subr.mxu0 0.0
    %284 = vmatpush2.msra.mxu0 0.0
    %285 = vmatprep.mubr.f32.mxu0 0.0
    %286 = vmatmul.mubr.f32.gmra.mxu0 %v217
    %v287 = vpop.f32.mrf.mxu0
    %v288 = vadd.f32 0.0, %v287
    %v289 = vpop.f32.mrf.mxu0
    %290 = vmatprep.mubr.f32.mxu0 0.0
    %291 = vmatmul.mubr.f32.gmra.mxu0 %v218
    %v292 = vpop.f32.mrf.mxu0
    %v293 = vadd.f32 0.0, %v292
    %v294 = vpop.f32.mrf.mxu0
    %295 = vmatprep.mubr.f32.mxu0 0.0
    %296 = vmatmul.mubr.f32.gmra.mxu0 %v219
    %v297 = vpop.f32.mrf.mxu0
    %v298 = vadd.f32 0.0, %v297
    %v299 = vpop.f32.mrf.mxu0
    %300 = vmatprep.mubr.f32.mxu0 0.0
    %301 = vmatmul.mubr.f32.gmra.mxu0 %v220
    %v302 = vpop.f32.mrf.mxu0
    %v303 = vadd.f32 0.0, %v302
    %v304 = vpop.f32.mrf.mxu0
    %305 = vdwg.mxu0
    %v306 = vld [vmem:[%s3] sm:$0xff]
    %v307 = vld [vmem:[%s3 + $0x8] sm:$0xff]
    %v308 = vld [vmem:[%s3 + $0x10] sm:$0xff]
    %v309 = vld [vmem:[%s3 + $0x18] sm:$0xff]
    %v310 = vld [vmem:[%s3 + $0x20] sm:$0xff]
    %v311 = vld [vmem:[%s3 + $0x28] sm:$0xff]
    %v312 = vld [vmem:[%s3 + $0x30] sm:$0xff]
    %v313 = vld [vmem:[%s3 + $0x38] sm:$0xff]
    %v314 = vld [vmem:[%s3 + $0x40] sm:$0xff]
    %v315 = vld [vmem:[%s3 + $0x48] sm:$0xff]
    %v316 = vld [vmem:[%s3 + $0x50] sm:$0xff]
    %v317 = vld [vmem:[%s3 + $0x58] sm:$0xff]
    %v318 = vld [vmem:[%s3 + $0x60] sm:$0xff]
    %v319 = vld [vmem:[%s3 + $0x68] sm:$0xff]
    %v320 = vld [vmem:[%s3 + $0x70] sm:$0xff]
    %v321 = vld [vmem:[%s3 + $0x78] sm:$0xff]
    %s322 = scalar_lea.vmem %s2, 32
    %v323 = vld [vmem:[%s322] sm:$0xff]
    %v324 = vld [vmem:[%s322 + $0x8] sm:$0xff]
    %v325 = vld [vmem:[%s322 + $0x10] sm:$0xff]
    %v326 = vld [vmem:[%s322 + $0x18] sm:$0xff]
    %327 = vmatprep.subr.mxu0 0.0
    %328 = vmatpush1.msra.mxu0 %v216
    %329 = vmatprep.subr.mxu0 0.0
    %330 = vmatpush1.msra.mxu0 %v215
    %331 = vmatprep.subr.mxu0 0.0
    %332 = vmatpush1.msra.mxu0 %v214
    %333 = vmatprep.subr.mxu0 0.0
    %334 = vmatpush1.msra.mxu0 %v213
    %335 = vmatprep.subr.mxu0 0.0
    %336 = vmatpush1.msra.mxu0 %v212
    %337 = vmatprep.subr.mxu0 0.0
    %338 = vmatpush1.msra.mxu0 %v211
    %339 = vmatprep.subr.mxu0 0.0
    %340 = vmatpush1.msra.mxu0 %v210
    %341 = vmatprep.subr.mxu0 0.0
    %342 = vmatpush1.msra.mxu0 %v209
    %343 = vmatprep.subr.mxu0 0.0
    %344 = vmatpush1.msra.mxu0 %v208
    %345 = vmatprep.subr.mxu0 0.0
    %346 = vmatpush1.msra.mxu0 %v207
    %347 = vmatprep.subr.mxu0 0.0
    %348 = vmatpush1.msra.mxu0 %v206
    %349 = vmatprep.subr.mxu0 0.0
    %350 = vmatpush1.msra.mxu0 %v205
    %351 = vmatprep.subr.mxu0 0.0
    %352 = vmatpush1.msra.mxu0 %v204
    %353 = vmatprep.subr.mxu0 0.0
    %354 = vmatpush1.msra.mxu0 %v203
    %355 = vmatprep.subr.mxu0 0.0
    %356 = vmatpush1.msra.mxu0 %v202
    %357 = vmatprep.subr.mxu0 0.0
    %358 = vmatpush1.msra.mxu0 %v201
    %359 = vmatprep.subr.mxu0 0.0
    %360 = vmatpush2.msra.mxu0 0.0
    %361 = vmatprep.subr.mxu0 0.0
    %362 = vmatpush2.msra.mxu0 0.0
    %363 = vmatprep.subr.mxu0 0.0
    %364 = vmatpush2.msra.mxu0 0.0
    %365 = vmatprep.subr.mxu0 0.0
    %366 = vmatpush2.msra.mxu0 0.0
    %367 = vmatprep.subr.mxu0 0.0
    %368 = vmatpush2.msra.mxu0 0.0
    %369 = vmatprep.subr.mxu0 0.0
    %370 = vmatpush2.msra.mxu0 0.0
    %371 = vmatprep.subr.mxu0 0.0
    %372 = vmatpush2.msra.mxu0 0.0
    %373 = vmatprep.subr.mxu0 0.0
    %374 = vmatpush2.msra.mxu0 0.0
    %375 = vmatprep.subr.mxu0 0.0
    %376 = vmatpush2.msra.mxu0 0.0
    %377 = vmatprep.subr.mxu0 0.0
    %378 = vmatpush2.msra.mxu0 0.0
    %379 = vmatprep.subr.mxu0 0.0
    %380 = vmatpush2.msra.mxu0 0.0
    %381 = vmatprep.subr.mxu0 0.0
    %382 = vmatpush2.msra.mxu0 0.0
    %383 = vmatprep.subr.mxu0 0.0
    %384 = vmatpush2.msra.mxu0 0.0
    %385 = vmatprep.subr.mxu0 0.0
    %386 = vmatpush2.msra.mxu0 0.0
    %387 = vmatprep.subr.mxu0 0.0
    %388 = vmatpush2.msra.mxu0 0.0
    %389 = vmatprep.subr.mxu0 0.0
    %390 = vmatpush2.msra.mxu0 0.0
    %391 = vmatprep.mubr.f32.mxu0 0.0
    %392 = vmatmul.mubr.f32.gmra.mxu0 %v323
    %v393 = vpop.f32.mrf.mxu0
    %v394 = vadd.f32 0.0, %v393
    %v395 = vpop.f32.mrf.mxu0
    %396 = vmatprep.mubr.f32.mxu0 0.0
    %397 = vmatmul.mubr.f32.gmra.mxu0 %v324
    %v398 = vpop.f32.mrf.mxu0
    %v399 = vadd.f32 0.0, %v398
    %v400 = vpop.f32.mrf.mxu0
    %401 = vmatprep.mubr.f32.mxu0 0.0
    %402 = vmatmul.mubr.f32.gmra.mxu0 %v325
    %v403 = vpop.f32.mrf.mxu0
    %v404 = vadd.f32 0.0, %v403
    %v405 = vpop.f32.mrf.mxu0
    %406 = vmatprep.mubr.f32.mxu0 0.0
    %407 = vmatmul.mubr.f32.gmra.mxu0 %v326
    %v408 = vpop.f32.mrf.mxu0
    %v409 = vadd.f32 0.0, %v408
    %v410 = vpop.f32.mrf.mxu0
    %411 = vdwg.mxu0
    %s412 = scalar_lea.vmem %s3, 128
    %v413 = vld [vmem:[%s412] sm:$0xff]
    %v414 = vld [vmem:[%s412 + $0x8] sm:$0xff]
    %v415 = vld [vmem:[%s412 + $0x10] sm:$0xff]
    %v416 = vld [vmem:[%s412 + $0x18] sm:$0xff]
    %v417 = vld [vmem:[%s412 + $0x20] sm:$0xff]
    %v418 = vld [vmem:[%s412 + $0x28] sm:$0xff]
    %v419 = vld [vmem:[%s412 + $0x30] sm:$0xff]
    %v420 = vld [vmem:[%s412 + $0x38] sm:$0xff]
    %v421 = vld [vmem:[%s412 + $0x40] sm:$0xff]
    %v422 = vld [vmem:[%s412 + $0x48] sm:$0xff]
    %v423 = vld [vmem:[%s412 + $0x50] sm:$0xff]
    %v424 = vld [vmem:[%s412 + $0x58] sm:$0xff]
    %v425 = vld [vmem:[%s412 + $0x60] sm:$0xff]
    %v426 = vld [vmem:[%s412 + $0x68] sm:$0xff]
    %v427 = vld [vmem:[%s412 + $0x70] sm:$0xff]
    %v428 = vld [vmem:[%s412 + $0x78] sm:$0xff]
    %429 = vmatprep.subr.mxu0 0.0
    %430 = vmatpush1.msra.mxu0 %v428
    %431 = vmatprep.subr.mxu0 0.0
    %432 = vmatpush1.msra.mxu0 %v427
    %433 = vmatprep.subr.mxu0 0.0
    %434 = vmatpush1.msra.mxu0 %v426
    %435 = vmatprep.subr.mxu0 0.0
    %436 = vmatpush1.msra.mxu0 %v425
    %437 = vmatprep.subr.mxu0 0.0
    %438 = vmatpush1.msra.mxu0 %v424
    %439 = vmatprep.subr.mxu0 0.0
    %440 = vmatpush1.msra.mxu0 %v423
    %441 = vmatprep.subr.mxu0 0.0
    %442 = vmatpush1.msra.mxu0 %v422
    %443 = vmatprep.subr.mxu0 0.0
    %444 = vmatpush1.msra.mxu0 %v421
    %445 = vmatprep.subr.mxu0 0.0
    %446 = vmatpush1.msra.mxu0 %v420
    %447 = vmatprep.subr.mxu0 0.0
    %448 = vmatpush1.msra.mxu0 %v419
    %449 = vmatprep.subr.mxu0 0.0
    %450 = vmatpush1.msra.mxu0 %v418
    %451 = vmatprep.subr.mxu0 0.0
    %452 = vmatpush1.msra.mxu0 %v417
    %453 = vmatprep.subr.mxu0 0.0
    %454 = vmatpush1.msra.mxu0 %v416
    %455 = vmatprep.subr.mxu0 0.0
    %456 = vmatpush1.msra.mxu0 %v415
    %457 = vmatprep.subr.mxu0 0.0
    %458 = vmatpush1.msra.mxu0 %v414
    %459 = vmatprep.subr.mxu0 0.0
    %460 = vmatpush1.msra.mxu0 %v413
    %461 = vmatprep.subr.mxu0 0.0
    %462 = vmatpush2.msra.mxu0 0.0
    %463 = vmatprep.subr.mxu0 0.0
    %464 = vmatpush2.msra.mxu0 0.0
    %465 = vmatprep.subr.mxu0 0.0
    %466 = vmatpush2.msra.mxu0 0.0
    %467 = vmatprep.subr.mxu0 0.0
    %468 = vmatpush2.msra.mxu0 0.0
    %469 = vmatprep.subr.mxu0 0.0
    %470 = vmatpush2.msra.mxu0 0.0
    %471 = vmatprep.subr.mxu0 0.0
    %472 = vmatpush2.msra.mxu0 0.0
    %473 = vmatprep.subr.mxu0 0.0
    %474 = vmatpush2.msra.mxu0 0.0
    %475 = vmatprep.subr.mxu0 0.0
    %476 = vmatpush2.msra.mxu0 0.0
    %477 = vmatprep.subr.mxu0 0.0
    %478 = vmatpush2.msra.mxu0 0.0
    %479 = vmatprep.subr.mxu0 0.0
    %480 = vmatpush2.msra.mxu0 0.0
    %481 = vmatprep.subr.mxu0 0.0
    %482 = vmatpush2.msra.mxu0 0.0
    %483 = vmatprep.subr.mxu0 0.0
    %484 = vmatpush2.msra.mxu0 0.0
    %485 = vmatprep.subr.mxu0 0.0
    %486 = vmatpush2.msra.mxu0 0.0
    %487 = vmatprep.subr.mxu0 0.0
    %488 = vmatpush2.msra.mxu0 0.0
    %489 = vmatprep.subr.mxu0 0.0
    %490 = vmatpush2.msra.mxu0 0.0
    %491 = vmatprep.subr.mxu0 0.0
    %492 = vmatpush2.msra.mxu0 0.0
    %493 = vmatprep.mubr.f32.mxu0 0.0
    %494 = vmatmul.mubr.f32.gmra.mxu0 %v394
    %v495 = vpop.f32.mrf.mxu0
    %v496 = vadd.f32 0.0, %v495
    %v497 = vpop.f32.mrf.mxu0
    %498 = vmatprep.mubr.f32.mxu0 0.0
    %499 = vmatmul.mubr.f32.gmra.mxu0 %v399
    %v500 = vpop.f32.mrf.mxu0
    %v501 = vadd.f32 0.0, %v500
    %v502 = vpop.f32.mrf.mxu0
    %503 = vmatprep.mubr.f32.mxu0 0.0
    %504 = vmatmul.mubr.f32.gmra.mxu0 %v404
    %v505 = vpop.f32.mrf.mxu0
    %v506 = vadd.f32 0.0, %v505
    %v507 = vpop.f32.mrf.mxu0
    %508 = vmatprep.mubr.f32.mxu0 0.0
    %509 = vmatmul.mubr.f32.gmra.mxu0 %v409
    %v510 = vpop.f32.mrf.mxu0
    %v511 = vadd.f32 0.0, %v510
    %v512 = vpop.f32.mrf.mxu0
    %513 = vdwg.mxu0
    %514 = vmatprep.subr.mxu0 0.0
    %515 = vmatpush1.msra.mxu0 %v321
    %516 = vmatprep.subr.mxu0 0.0
    %517 = vmatpush1.msra.mxu0 %v320
    %518 = vmatprep.subr.mxu0 0.0
    %519 = vmatpush1.msra.mxu0 %v319
    %520 = vmatprep.subr.mxu0 0.0
    %521 = vmatpush1.msra.mxu0 %v318
    %522 = vmatprep.subr.mxu0 0.0
    %523 = vmatpush1.msra.mxu0 %v317
    %524 = vmatprep.subr.mxu0 0.0
    %525 = vmatpush1.msra.mxu0 %v316
    %526 = vmatprep.subr.mxu0 0.0
    %527 = vmatpush1.msra.mxu0 %v315
    %528 = vmatprep.subr.mxu0 0.0
    %529 = vmatpush1.msra.mxu0 %v314
    %530 = vmatprep.subr.mxu0 0.0
    %531 = vmatpush1.msra.mxu0 %v313
    %532 = vmatprep.subr.mxu0 0.0
    %533 = vmatpush1.msra.mxu0 %v312
    %534 = vmatprep.subr.mxu0 0.0
    %535 = vmatpush1.msra.mxu0 %v311
    %536 = vmatprep.subr.mxu0 0.0
    %537 = vmatpush1.msra.mxu0 %v310
    %538 = vmatprep.subr.mxu0 0.0
    %539 = vmatpush1.msra.mxu0 %v309
    %540 = vmatprep.subr.mxu0 0.0
    %541 = vmatpush1.msra.mxu0 %v308
    %542 = vmatprep.subr.mxu0 0.0
    %543 = vmatpush1.msra.mxu0 %v307
    %544 = vmatprep.subr.mxu0 0.0
    %545 = vmatpush1.msra.mxu0 %v306
    %546 = vmatprep.subr.mxu0 0.0
    %547 = vmatpush2.msra.mxu0 0.0
    %548 = vmatprep.subr.mxu0 0.0
    %549 = vmatpush2.msra.mxu0 0.0
    %550 = vmatprep.subr.mxu0 0.0
    %551 = vmatpush2.msra.mxu0 0.0
    %552 = vmatprep.subr.mxu0 0.0
    %553 = vmatpush2.msra.mxu0 0.0
    %554 = vmatprep.subr.mxu0 0.0
    %555 = vmatpush2.msra.mxu0 0.0
    %556 = vmatprep.subr.mxu0 0.0
    %557 = vmatpush2.msra.mxu0 0.0
    %558 = vmatprep.subr.mxu0 0.0
    %559 = vmatpush2.msra.mxu0 0.0
    %560 = vmatprep.subr.mxu0 0.0
    %561 = vmatpush2.msra.mxu0 0.0
    %562 = vmatprep.subr.mxu0 0.0
    %563 = vmatpush2.msra.mxu0 0.0
    %564 = vmatprep.subr.mxu0 0.0
    %565 = vmatpush2.msra.mxu0 0.0
    %566 = vmatprep.subr.mxu0 0.0
    %567 = vmatpush2.msra.mxu0 0.0
    %568 = vmatprep.subr.mxu0 0.0
    %569 = vmatpush2.msra.mxu0 0.0
    %570 = vmatprep.subr.mxu0 0.0
    %571 = vmatpush2.msra.mxu0 0.0
    %572 = vmatprep.subr.mxu0 0.0
    %573 = vmatpush2.msra.mxu0 0.0
    %574 = vmatprep.subr.mxu0 0.0
    %575 = vmatpush2.msra.mxu0 0.0
    %576 = vmatprep.subr.mxu0 0.0
    %577 = vmatpush2.msra.mxu0 0.0
    %578 = vmatprep.mubr.f32.mxu0 0.0
    %579 = vmatmul.mubr.f32.gmra.mxu0 %v288
    %v580 = vpop.f32.mrf.mxu0
    %v581 = vadd.f32 %v496, %v580
    %v582 = vpop.f32.mrf.mxu0
    %583 = vmatprep.mubr.f32.mxu0 0.0
    %584 = vmatmul.mubr.f32.gmra.mxu0 %v293
    %v585 = vpop.f32.mrf.mxu0
    %v586 = vadd.f32 %v501, %v585
    %v587 = vpop.f32.mrf.mxu0
    %588 = vmatprep.mubr.f32.mxu0 0.0
    %589 = vmatmul.mubr.f32.gmra.mxu0 %v298
    %v590 = vpop.f32.mrf.mxu0
    %v591 = vadd.f32 %v506, %v590
    %v592 = vpop.f32.mrf.mxu0
    %593 = vmatprep.mubr.f32.mxu0 0.0
    %594 = vmatmul.mubr.f32.gmra.mxu0 %v303
    %v595 = vpop.f32.mrf.mxu0
    %v596 = vadd.f32 %v511, %v595
    %v597 = vpop.f32.mrf.mxu0
    %598 = vdwg.mxu0
    %s599 = scalar_lea.vmem %s2, 64
    %v600 = vld [vmem:[%s599] sm:$0xff]
    %v601 = vld [vmem:[%s599 + $0x8] sm:$0xff]
    %v602 = vld [vmem:[%s599 + $0x10] sm:$0xff]
    %v603 = vld [vmem:[%s599 + $0x18] sm:$0xff]
    %604 = vmatprep.subr.mxu0 0.0
    %605 = vmatpush1.msra.mxu0 %v216
    %606 = vmatprep.subr.mxu0 0.0
    %607 = vmatpush1.msra.mxu0 %v215
    %608 = vmatprep.subr.mxu0 0.0
    %609 = vmatpush1.msra.mxu0 %v214
    %610 = vmatprep.subr.mxu0 0.0
    %611 = vmatpush1.msra.mxu0 %v213
    %612 = vmatprep.subr.mxu0 0.0
    %613 = vmatpush1.msra.mxu0 %v212
    %614 = vmatprep.subr.mxu0 0.0
    %615 = vmatpush1.msra.mxu0 %v211
    %616 = vmatprep.subr.mxu0 0.0
    %617 = vmatpush1.msra.mxu0 %v210
    %618 = vmatprep.subr.mxu0 0.0
    %619 = vmatpush1.msra.mxu0 %v209
    %620 = vmatprep.subr.mxu0 0.0
    %621 = vmatpush1.msra.mxu0 %v208
    %622 = vmatprep.subr.mxu0 0.0
    %623 = vmatpush1.msra.mxu0 %v207
    %624 = vmatprep.subr.mxu0 0.0
    %625 = vmatpush1.msra.mxu0 %v206
    %626 = vmatprep.subr.mxu0 0.0
    %627 = vmatpush1.msra.mxu0 %v205
    %628 = vmatprep.subr.mxu0 0.0
    %629 = vmatpush1.msra.mxu0 %v204
    %630 = vmatprep.subr.mxu0 0.0
    %631 = vmatpush1.msra.mxu0 %v203
    %632 = vmatprep.subr.mxu0 0.0
    %633 = vmatpush1.msra.mxu0 %v202
    %634 = vmatprep.subr.mxu0 0.0
    %635 = vmatpush1.msra.mxu0 %v201
    %636 = vmatprep.subr.mxu0 0.0
    %637 = vmatpush2.msra.mxu0 0.0
    %638 = vmatprep.subr.mxu0 0.0
    %639 = vmatpush2.msra.mxu0 0.0
    %640 = vmatprep.subr.mxu0 0.0
    %641 = vmatpush2.msra.mxu0 0.0
    %642 = vmatprep.subr.mxu0 0.0
    %643 = vmatpush2.msra.mxu0 0.0
    %644 = vmatprep.subr.mxu0 0.0
    %645 = vmatpush2.msra.mxu0 0.0
    %646 = vmatprep.subr.mxu0 0.0
    %647 = vmatpush2.msra.mxu0 0.0
    %648 = vmatprep.subr.mxu0 0.0
    %649 = vmatpush2.msra.mxu0 0.0
    %650 = vmatprep.subr.mxu0 0.0
    %651 = vmatpush2.msra.mxu0 0.0
    %652 = vmatprep.subr.mxu0 0.0
    %653 = vmatpush2.msra.mxu0 0.0
    %654 = vmatprep.subr.mxu0 0.0
    %655 = vmatpush2.msra.mxu0 0.0
    %656 = vmatprep.subr.mxu0 0.0
    %657 = vmatpush2.msra.mxu0 0.0
    %658 = vmatprep.subr.mxu0 0.0
    %659 = vmatpush2.msra.mxu0 0.0
    %660 = vmatprep.subr.mxu0 0.0
    %661 = vmatpush2.msra.mxu0 0.0
    %662 = vmatprep.subr.mxu0 0.0
    %663 = vmatpush2.msra.mxu0 0.0
    %664 = vmatprep.subr.mxu0 0.0
    %665 = vmatpush2.msra.mxu0 0.0
    %666 = vmatprep.subr.mxu0 0.0
    %667 = vmatpush2.msra.mxu0 0.0
    %668 = vmatprep.mubr.f32.mxu0 0.0
    %669 = vmatmul.mubr.f32.gmra.mxu0 %v600
    %v670 = vpop.f32.mrf.mxu0
    %v671 = vadd.f32 0.0, %v670
    %v672 = vpop.f32.mrf.mxu0
    %673 = vmatprep.mubr.f32.mxu0 0.0
    %674 = vmatmul.mubr.f32.gmra.mxu0 %v601
    %v675 = vpop.f32.mrf.mxu0
    %v676 = vadd.f32 0.0, %v675
    %v677 = vpop.f32.mrf.mxu0
    %678 = vmatprep.mubr.f32.mxu0 0.0
    %679 = vmatmul.mubr.f32.gmra.mxu0 %v602
    %v680 = vpop.f32.mrf.mxu0
    %v681 = vadd.f32 0.0, %v680
    %v682 = vpop.f32.mrf.mxu0
    %683 = vmatprep.mubr.f32.mxu0 0.0
    %684 = vmatmul.mubr.f32.gmra.mxu0 %v603
    %v685 = vpop.f32.mrf.mxu0
    %v686 = vadd.f32 0.0, %v685
    %v687 = vpop.f32.mrf.mxu0
    %688 = vdwg.mxu0
    %s689 = scalar_lea.vmem %s3, 256
    %v690 = vld [vmem:[%s689] sm:$0xff]
    %v691 = vld [vmem:[%s689 + $0x8] sm:$0xff]
    %v692 = vld [vmem:[%s689 + $0x10] sm:$0xff]
    %v693 = vld [vmem:[%s689 + $0x18] sm:$0xff]
    %v694 = vld [vmem:[%s689 + $0x20] sm:$0xff]
    %v695 = vld [vmem:[%s689 + $0x28] sm:$0xff]
    %v696 = vld [vmem:[%s689 + $0x30] sm:$0xff]
    %v697 = vld [vmem:[%s689 + $0x38] sm:$0xff]
    %v698 = vld [vmem:[%s689 + $0x40] sm:$0xff]
    %v699 = vld [vmem:[%s689 + $0x48] sm:$0xff]
    %v700 = vld [vmem:[%s689 + $0x50] sm:$0xff]
    %v701 = vld [vmem:[%s689 + $0x58] sm:$0xff]
    %v702 = vld [vmem:[%s689 + $0x60] sm:$0xff]
    %v703 = vld [vmem:[%s689 + $0x68] sm:$0xff]
    %v704 = vld [vmem:[%s689 + $0x70] sm:$0xff]
    %v705 = vld [vmem:[%s689 + $0x78] sm:$0xff]
    %706 = vmatprep.subr.mxu0 0.0
    %707 = vmatpush1.msra.mxu0 %v705
    %708 = vmatprep.subr.mxu0 0.0
    %709 = vmatpush1.msra.mxu0 %v704
    %710 = vmatprep.subr.mxu0 0.0
    %711 = vmatpush1.msra.mxu0 %v703
    %712 = vmatprep.subr.mxu0 0.0
    %713 = vmatpush1.msra.mxu0 %v702
    %714 = vmatprep.subr.mxu0 0.0
    %715 = vmatpush1.msra.mxu0 %v701
    %716 = vmatprep.subr.mxu0 0.0
    %717 = vmatpush1.msra.mxu0 %v700
    %718 = vmatprep.subr.mxu0 0.0
    %719 = vmatpush1.msra.mxu0 %v699
    %720 = vmatprep.subr.mxu0 0.0
    %721 = vmatpush1.msra.mxu0 %v698
    %722 = vmatprep.subr.mxu0 0.0
    %723 = vmatpush1.msra.mxu0 %v697
    %724 = vmatprep.subr.mxu0 0.0
    %725 = vmatpush1.msra.mxu0 %v696
    %726 = vmatprep.subr.mxu0 0.0
    %727 = vmatpush1.msra.mxu0 %v695
    %728 = vmatprep.subr.mxu0 0.0
    %729 = vmatpush1.msra.mxu0 %v694
    %730 = vmatprep.subr.mxu0 0.0
    %731 = vmatpush1.msra.mxu0 %v693
    %732 = vmatprep.subr.mxu0 0.0
    %733 = vmatpush1.msra.mxu0 %v692
    %734 = vmatprep.subr.mxu0 0.0
    %735 = vmatpush1.msra.mxu0 %v691
    %736 = vmatprep.subr.mxu0 0.0
    %737 = vmatpush1.msra.mxu0 %v690
    %738 = vmatprep.subr.mxu0 0.0
    %739 = vmatpush2.msra.mxu0 0.0
    %740 = vmatprep.subr.mxu0 0.0
    %741 = vmatpush2.msra.mxu0 0.0
    %742 = vmatprep.subr.mxu0 0.0
    %743 = vmatpush2.msra.mxu0 0.0
    %744 = vmatprep.subr.mxu0 0.0
    %745 = vmatpush2.msra.mxu0 0.0
    %746 = vmatprep.subr.mxu0 0.0
    %747 = vmatpush2.msra.mxu0 0.0
    %748 = vmatprep.subr.mxu0 0.0
    %749 = vmatpush2.msra.mxu0 0.0
    %750 = vmatprep.subr.mxu0 0.0
    %751 = vmatpush2.msra.mxu0 0.0
    %752 = vmatprep.subr.mxu0 0.0
    %753 = vmatpush2.msra.mxu0 0.0
    %754 = vmatprep.subr.mxu0 0.0
    %755 = vmatpush2.msra.mxu0 0.0
    %756 = vmatprep.subr.mxu0 0.0
    %757 = vmatpush2.msra.mxu0 0.0
    %758 = vmatprep.subr.mxu0 0.0
    %759 = vmatpush2.msra.mxu0 0.0
    %760 = vmatprep.subr.mxu0 0.0
    %761 = vmatpush2.msra.mxu0 0.0
    %762 = vmatprep.subr.mxu0 0.0
    %763 = vmatpush2.msra.mxu0 0.0
    %764 = vmatprep.subr.mxu0 0.0
    %765 = vmatpush2.msra.mxu0 0.0
    %766 = vmatprep.subr.mxu0 0.0
    %767 = vmatpush2.msra.mxu0 0.0
    %768 = vmatprep.subr.mxu0 0.0
    %769 = vmatpush2.msra.mxu0 0.0
    %770 = vmatprep.mubr.f32.mxu0 0.0
    %771 = vmatmul.mubr.f32.gmra.mxu0 %v671
    %v772 = vpop.f32.mrf.mxu0
    %v773 = vadd.f32 0.0, %v772
    %v774 = vpop.f32.mrf.mxu0
    %775 = vmatprep.mubr.f32.mxu0 0.0
    %776 = vmatmul.mubr.f32.gmra.mxu0 %v676
    %v777 = vpop.f32.mrf.mxu0
    %v778 = vadd.f32 0.0, %v777
    %v779 = vpop.f32.mrf.mxu0
    %780 = vmatprep.mubr.f32.mxu0 0.0
    %781 = vmatmul.mubr.f32.gmra.mxu0 %v681
    %v782 = vpop.f32.mrf.mxu0
    %v783 = vadd.f32 0.0, %v782
    %v784 = vpop.f32.mrf.mxu0
    %785 = vmatprep.mubr.f32.mxu0 0.0
    %786 = vmatmul.mubr.f32.gmra.mxu0 %v686
    %v787 = vpop.f32.mrf.mxu0
    %v788 = vadd.f32 0.0, %v787
    %v789 = vpop.f32.mrf.mxu0
    %790 = vdwg.mxu0
    %v791 = vadd.f32 %v581, %v773
    %v792 = vadd.f32 %v586, %v778
    %v793 = vadd.f32 %v591, %v783
    %v794 = vadd.f32 %v596, %v788
    %s795 = scalar_lea.vmem %s2, 96
    %v796 = vld [vmem:[%s795] sm:$0xff]
    %v797 = vld [vmem:[%s795 + $0x8] sm:$0xff]
    %v798 = vld [vmem:[%s795 + $0x10] sm:$0xff]
    %v799 = vld [vmem:[%s795 + $0x18] sm:$0xff]
    %800 = vmatprep.subr.mxu0 0.0
    %801 = vmatpush1.msra.mxu0 %v216
    %802 = vmatprep.subr.mxu0 0.0
    %803 = vmatpush1.msra.mxu0 %v215
    %804 = vmatprep.subr.mxu0 0.0
    %805 = vmatpush1.msra.mxu0 %v214
    %806 = vmatprep.subr.mxu0 0.0
    %807 = vmatpush1.msra.mxu0 %v213
    %808 = vmatprep.subr.mxu0 0.0
    %809 = vmatpush1.msra.mxu0 %v212
    %810 = vmatprep.subr.mxu0 0.0
    %811 = vmatpush1.msra.mxu0 %v211
    %812 = vmatprep.subr.mxu0 0.0
    %813 = vmatpush1.msra.mxu0 %v210
    %814 = vmatprep.subr.mxu0 0.0
    %815 = vmatpush1.msra.mxu0 %v209
    %816 = vmatprep.subr.mxu0 0.0
    %817 = vmatpush1.msra.mxu0 %v208
    %818 = vmatprep.subr.mxu0 0.0
    %819 = vmatpush1.msra.mxu0 %v207
    %820 = vmatprep.subr.mxu0 0.0
    %821 = vmatpush1.msra.mxu0 %v206
    %822 = vmatprep.subr.mxu0 0.0
    %823 = vmatpush1.msra.mxu0 %v205
    %824 = vmatprep.subr.mxu0 0.0
    %825 = vmatpush1.msra.mxu0 %v204
    %826 = vmatprep.subr.mxu0 0.0
    %827 = vmatpush1.msra.mxu0 %v203
    %828 = vmatprep.subr.mxu0 0.0
    %829 = vmatpush1.msra.mxu0 %v202
    %830 = vmatprep.subr.mxu0 0.0
    %831 = vmatpush1.msra.mxu0 %v201
    %832 = vmatprep.subr.mxu0 0.0
    %833 = vmatpush2.msra.mxu0 0.0
    %834 = vmatprep.subr.mxu0 0.0
    %835 = vmatpush2.msra.mxu0 0.0
    %836 = vmatprep.subr.mxu0 0.0
    %837 = vmatpush2.msra.mxu0 0.0
    %838 = vmatprep.subr.mxu0 0.0
    %839 = vmatpush2.msra.mxu0 0.0
    %840 = vmatprep.subr.mxu0 0.0
    %841 = vmatpush2.msra.mxu0 0.0
    %842 = vmatprep.subr.mxu0 0.0
    %843 = vmatpush2.msra.mxu0 0.0
    %844 = vmatprep.subr.mxu0 0.0
    %845 = vmatpush2.msra.mxu0 0.0
    %846 = vmatprep.subr.mxu0 0.0
    %847 = vmatpush2.msra.mxu0 0.0
    %848 = vmatprep.subr.mxu0 0.0
    %849 = vmatpush2.msra.mxu0 0.0
    %850 = vmatprep.subr.mxu0 0.0
    %851 = vmatpush2.msra.mxu0 0.0
    %852 = vmatprep.subr.mxu0 0.0
    %853 = vmatpush2.msra.mxu0 0.0
    %854 = vmatprep.subr.mxu0 0.0
    %855 = vmatpush2.msra.mxu0 0.0
    %856 = vmatprep.subr.mxu0 0.0
    %857 = vmatpush2.msra.mxu0 0.0
    %858 = vmatprep.subr.mxu0 0.0
    %859 = vmatpush2.msra.mxu0 0.0
    %860 = vmatprep.subr.mxu0 0.0
    %861 = vmatpush2.msra.mxu0 0.0
    %862 = vmatprep.subr.mxu0 0.0
    %863 = vmatpush2.msra.mxu0 0.0
    %864 = vmatprep.mubr.f32.mxu0 0.0
    %865 = vmatmul.mubr.f32.gmra.mxu0 %v796
    %v866 = vpop.f32.mrf.mxu0
    %v867 = vadd.f32 0.0, %v866
    %v868 = vpop.f32.mrf.mxu0
    %869 = vmatprep.mubr.f32.mxu0 0.0
    %870 = vmatmul.mubr.f32.gmra.mxu0 %v797
    %v871 = vpop.f32.mrf.mxu0
    %v872 = vadd.f32 0.0, %v871
    %v873 = vpop.f32.mrf.mxu0
    %874 = vmatprep.mubr.f32.mxu0 0.0
    %875 = vmatmul.mubr.f32.gmra.mxu0 %v798
    %v876 = vpop.f32.mrf.mxu0
    %v877 = vadd.f32 0.0, %v876
    %v878 = vpop.f32.mrf.mxu0
    %879 = vmatprep.mubr.f32.mxu0 0.0
    %880 = vmatmul.mubr.f32.gmra.mxu0 %v799
    %v881 = vpop.f32.mrf.mxu0
    %v882 = vadd.f32 0.0, %v881
    %v883 = vpop.f32.mrf.mxu0
    %884 = vdwg.mxu0
    %s885 = scalar_lea.vmem %s3, 384
    %v886 = vld [vmem:[%s885] sm:$0xff]
    %v887 = vld [vmem:[%s885 + $0x8] sm:$0xff]
    %v888 = vld [vmem:[%s885 + $0x10] sm:$0xff]
    %v889 = vld [vmem:[%s885 + $0x18] sm:$0xff]
    %v890 = vld [vmem:[%s885 + $0x20] sm:$0xff]
    %v891 = vld [vmem:[%s885 + $0x28] sm:$0xff]
    %v892 = vld [vmem:[%s885 + $0x30] sm:$0xff]
    %v893 = vld [vmem:[%s885 + $0x38] sm:$0xff]
    %v894 = vld [vmem:[%s885 + $0x40] sm:$0xff]
    %v895 = vld [vmem:[%s885 + $0x48] sm:$0xff]
    %v896 = vld [vmem:[%s885 + $0x50] sm:$0xff]
    %v897 = vld [vmem:[%s885 + $0x58] sm:$0xff]
    %v898 = vld [vmem:[%s885 + $0x60] sm:$0xff]
    %v899 = vld [vmem:[%s885 + $0x68] sm:$0xff]
    %v900 = vld [vmem:[%s885 + $0x70] sm:$0xff]
    %v901 = vld [vmem:[%s885 + $0x78] sm:$0xff]
    %902 = vmatprep.subr.mxu0 0.0
    %903 = vmatpush1.msra.mxu0 %v901
    %904 = vmatprep.subr.mxu0 0.0
    %905 = vmatpush1.msra.mxu0 %v900
    %906 = vmatprep.subr.mxu0 0.0
    %907 = vmatpush1.msra.mxu0 %v899
    %908 = vmatprep.subr.mxu0 0.0
    %909 = vmatpush1.msra.mxu0 %v898
    %910 = vmatprep.subr.mxu0 0.0
    %911 = vmatpush1.msra.mxu0 %v897
    %912 = vmatprep.subr.mxu0 0.0
    %913 = vmatpush1.msra.mxu0 %v896
    %914 = vmatprep.subr.mxu0 0.0
    %915 = vmatpush1.msra.mxu0 %v895
    %916 = vmatprep.subr.mxu0 0.0
    %917 = vmatpush1.msra.mxu0 %v894
    %918 = vmatprep.subr.mxu0 0.0
    %919 = vmatpush1.msra.mxu0 %v893
    %920 = vmatprep.subr.mxu0 0.0
    %921 = vmatpush1.msra.mxu0 %v892
    %922 = vmatprep.subr.mxu0 0.0
    %923 = vmatpush1.msra.mxu0 %v891
    %924 = vmatprep.subr.mxu0 0.0
    %925 = vmatpush1.msra.mxu0 %v890
    %926 = vmatprep.subr.mxu0 0.0
    %927 = vmatpush1.msra.mxu0 %v889
    %928 = vmatprep.subr.mxu0 0.0
    %929 = vmatpush1.msra.mxu0 %v888
    %930 = vmatprep.subr.mxu0 0.0
    %931 = vmatpush1.msra.mxu0 %v887
    %932 = vmatprep.subr.mxu0 0.0
    %933 = vmatpush1.msra.mxu0 %v886
    %934 = vmatprep.subr.mxu0 0.0
    %935 = vmatpush2.msra.mxu0 0.0
    %936 = vmatprep.subr.mxu0 0.0
    %937 = vmatpush2.msra.mxu0 0.0
    %938 = vmatprep.subr.mxu0 0.0
    %939 = vmatpush2.msra.mxu0 0.0
    %940 = vmatprep.subr.mxu0 0.0
    %941 = vmatpush2.msra.mxu0 0.0
    %942 = vmatprep.subr.mxu0 0.0
    %943 = vmatpush2.msra.mxu0 0.0
    %944 = vmatprep.subr.mxu0 0.0
    %945 = vmatpush2.msra.mxu0 0.0
    %946 = vmatprep.subr.mxu0 0.0
    %947 = vmatpush2.msra.mxu0 0.0
    %948 = vmatprep.subr.mxu0 0.0
    %949 = vmatpush2.msra.mxu0 0.0
    %950 = vmatprep.subr.mxu0 0.0
    %951 = vmatpush2.msra.mxu0 0.0
    %952 = vmatprep.subr.mxu0 0.0
    %953 = vmatpush2.msra.mxu0 0.0
    %954 = vmatprep.subr.mxu0 0.0
    %955 = vmatpush2.msra.mxu0 0.0
    %956 = vmatprep.subr.mxu0 0.0
    %957 = vmatpush2.msra.mxu0 0.0
    %958 = vmatprep.subr.mxu0 0.0
    %959 = vmatpush2.msra.mxu0 0.0
    %960 = vmatprep.subr.mxu0 0.0
    %961 = vmatpush2.msra.mxu0 0.0
    %962 = vmatprep.subr.mxu0 0.0
    %963 = vmatpush2.msra.mxu0 0.0
    %964 = vmatprep.subr.mxu0 0.0
    %965 = vmatpush2.msra.mxu0 0.0
    %966 = vmatprep.mubr.f32.mxu0 0.0
    %967 = vmatmul.mubr.f32.gmra.mxu0 %v867
    %v968 = vpop.f32.mrf.mxu0
    %v969 = vadd.f32 0.0, %v968
    %v970 = vpop.f32.mrf.mxu0
    %971 = vmatprep.mubr.f32.mxu0 0.0
    %972 = vmatmul.mubr.f32.gmra.mxu0 %v872
    %v973 = vpop.f32.mrf.mxu0
    %v974 = vadd.f32 0.0, %v973
    %v975 = vpop.f32.mrf.mxu0
    %976 = vmatprep.mubr.f32.mxu0 0.0
    %977 = vmatmul.mubr.f32.gmra.mxu0 %v877
    %v978 = vpop.f32.mrf.mxu0
    %v979 = vadd.f32 0.0, %v978
    %v980 = vpop.f32.mrf.mxu0
    %981 = vmatprep.mubr.f32.mxu0 0.0
    %982 = vmatmul.mubr.f32.gmra.mxu0 %v882
    %v983 = vpop.f32.mrf.mxu0
    %v984 = vadd.f32 0.0, %v983
    %v985 = vpop.f32.mrf.mxu0
    %986 = vdwg.mxu0
    %v987 = vadd.f32 %v791, %v969
    %v988 = vadd.f32 %v792, %v974
    %v989 = vadd.f32 %v793, %v979
    %v990 = vadd.f32 %v794, %v984
    %s991 = scalar_lea.vmem %s2, 128
    %v992 = vld [vmem:[%s991] sm:$0xff]
    %v993 = vld [vmem:[%s991 + $0x8] sm:$0xff]
    %v994 = vld [vmem:[%s991 + $0x10] sm:$0xff]
    %v995 = vld [vmem:[%s991 + $0x18] sm:$0xff]
    %996 = vmatprep.subr.mxu0 0.0
    %997 = vmatpush1.msra.mxu0 %v216
    %998 = vmatprep.subr.mxu0 0.0
    %999 = vmatpush1.msra.mxu0 %v215
    %1000 = vmatprep.subr.mxu0 0.0
    %1001 = vmatpush1.msra.mxu0 %v214
    %1002 = vmatprep.subr.mxu0 0.0
    %1003 = vmatpush1.msra.mxu0 %v213
    %1004 = vmatprep.subr.mxu0 0.0
    %1005 = vmatpush1.msra.mxu0 %v212
    %1006 = vmatprep.subr.mxu0 0.0
    %1007 = vmatpush1.msra.mxu0 %v211
    %1008 = vmatprep.subr.mxu0 0.0
    %1009 = vmatpush1.msra.mxu0 %v210
    %1010 = vmatprep.subr.mxu0 0.0
    %1011 = vmatpush1.msra.mxu0 %v209
    %1012 = vmatprep.subr.mxu0 0.0
    %1013 = vmatpush1.msra.mxu0 %v208
    %1014 = vmatprep.subr.mxu0 0.0
    %1015 = vmatpush1.msra.mxu0 %v207
    %1016 = vmatprep.subr.mxu0 0.0
    %1017 = vmatpush1.msra.mxu0 %v206
    %1018 = vmatprep.subr.mxu0 0.0
    %1019 = vmatpush1.msra.mxu0 %v205
    %1020 = vmatprep.subr.mxu0 0.0
    %1021 = vmatpush1.msra.mxu0 %v204
    %1022 = vmatprep.subr.mxu0 0.0
    %1023 = vmatpush1.msra.mxu0 %v203
    %1024 = vmatprep.subr.mxu0 0.0
    %1025 = vmatpush1.msra.mxu0 %v202
    %1026 = vmatprep.subr.mxu0 0.0
    %1027 = vmatpush1.msra.mxu0 %v201
    %1028 = vmatprep.subr.mxu0 0.0
    %1029 = vmatpush2.msra.mxu0 0.0
    %1030 = vmatprep.subr.mxu0 0.0
    %1031 = vmatpush2.msra.mxu0 0.0
    %1032 = vmatprep.subr.mxu0 0.0
    %1033 = vmatpush2.msra.mxu0 0.0
    %1034 = vmatprep.subr.mxu0 0.0
    %1035 = vmatpush2.msra.mxu0 0.0
    %1036 = vmatprep.subr.mxu0 0.0
    %1037 = vmatpush2.msra.mxu0 0.0
    %1038 = vmatprep.subr.mxu0 0.0
    %1039 = vmatpush2.msra.mxu0 0.0
    %1040 = vmatprep.subr.mxu0 0.0
    %1041 = vmatpush2.msra.mxu0 0.0
    %1042 = vmatprep.subr.mxu0 0.0
    %1043 = vmatpush2.msra.mxu0 0.0
    %1044 = vmatprep.subr.mxu0 0.0
    %1045 = vmatpush2.msra.mxu0 0.0
    %1046 = vmatprep.subr.mxu0 0.0
    %1047 = vmatpush2.msra.mxu0 0.0
    %1048 = vmatprep.subr.mxu0 0.0
    %1049 = vmatpush2.msra.mxu0 0.0
    %1050 = vmatprep.subr.mxu0 0.0
    %1051 = vmatpush2.msra.mxu0 0.0
    %1052 = vmatprep.subr.mxu0 0.0
    %1053 = vmatpush2.msra.mxu0 0.0
    %1054 = vmatprep.subr.mxu0 0.0
    %1055 = vmatpush2.msra.mxu0 0.0
    %1056 = vmatprep.subr.mxu0 0.0
    %1057 = vmatpush2.msra.mxu0 0.0
    %1058 = vmatprep.subr.mxu0 0.0
    %1059 = vmatpush2.msra.mxu0 0.0
    %1060 = vmatprep.mubr.f32.mxu0 0.0
    %1061 = vmatmul.mubr.f32.gmra.mxu0 %v992
    %v1062 = vpop.f32.mrf.mxu0
    %v1063 = vadd.f32 0.0, %v1062
    %v1064 = vpop.f32.mrf.mxu0
    %1065 = vmatprep.mubr.f32.mxu0 0.0
    %1066 = vmatmul.mubr.f32.gmra.mxu0 %v993
    %v1067 = vpop.f32.mrf.mxu0
    %v1068 = vadd.f32 0.0, %v1067
    %v1069 = vpop.f32.mrf.mxu0
    %1070 = vmatprep.mubr.f32.mxu0 0.0
    %1071 = vmatmul.mubr.f32.gmra.mxu0 %v994
    %v1072 = vpop.f32.mrf.mxu0
    %v1073 = vadd.f32 0.0, %v1072
    %v1074 = vpop.f32.mrf.mxu0
    %1075 = vmatprep.mubr.f32.mxu0 0.0
    %1076 = vmatmul.mubr.f32.gmra.mxu0 %v995
    %v1077 = vpop.f32.mrf.mxu0
    %v1078 = vadd.f32 0.0, %v1077
    %v1079 = vpop.f32.mrf.mxu0
    %1080 = vdwg.mxu0
    %s1081 = scalar_lea.vmem %s3, 512
    %v1082 = vld [vmem:[%s1081] sm:$0xff]
    %v1083 = vld [vmem:[%s1081 + $0x8] sm:$0xff]
    %v1084 = vld [vmem:[%s1081 + $0x10] sm:$0xff]
    %v1085 = vld [vmem:[%s1081 + $0x18] sm:$0xff]
    %v1086 = vld [vmem:[%s1081 + $0x20] sm:$0xff]
    %v1087 = vld [vmem:[%s1081 + $0x28] sm:$0xff]
    %v1088 = vld [vmem:[%s1081 + $0x30] sm:$0xff]
    %v1089 = vld [vmem:[%s1081 + $0x38] sm:$0xff]
    %v1090 = vld [vmem:[%s1081 + $0x40] sm:$0xff]
    %v1091 = vld [vmem:[%s1081 + $0x48] sm:$0xff]
    %v1092 = vld [vmem:[%s1081 + $0x50] sm:$0xff]
    %v1093 = vld [vmem:[%s1081 + $0x58] sm:$0xff]
    %v1094 = vld [vmem:[%s1081 + $0x60] sm:$0xff]
    %v1095 = vld [vmem:[%s1081 + $0x68] sm:$0xff]
    %v1096 = vld [vmem:[%s1081 + $0x70] sm:$0xff]
    %v1097 = vld [vmem:[%s1081 + $0x78] sm:$0xff]
    %1098 = vmatprep.subr.mxu0 0.0
    %1099 = vmatpush1.msra.mxu0 %v1097
    %1100 = vmatprep.subr.mxu0 0.0
    %1101 = vmatpush1.msra.mxu0 %v1096
    %1102 = vmatprep.subr.mxu0 0.0
    %1103 = vmatpush1.msra.mxu0 %v1095
    %1104 = vmatprep.subr.mxu0 0.0
    %1105 = vmatpush1.msra.mxu0 %v1094
    %1106 = vmatprep.subr.mxu0 0.0
    %1107 = vmatpush1.msra.mxu0 %v1093
    %1108 = vmatprep.subr.mxu0 0.0
    %1109 = vmatpush1.msra.mxu0 %v1092
    %1110 = vmatprep.subr.mxu0 0.0
    %1111 = vmatpush1.msra.mxu0 %v1091
    %1112 = vmatprep.subr.mxu0 0.0
    %1113 = vmatpush1.msra.mxu0 %v1090
    %1114 = vmatprep.subr.mxu0 0.0
    %1115 = vmatpush1.msra.mxu0 %v1089
    %1116 = vmatprep.subr.mxu0 0.0
    %1117 = vmatpush1.msra.mxu0 %v1088
    %1118 = vmatprep.subr.mxu0 0.0
    %1119 = vmatpush1.msra.mxu0 %v1087
    %1120 = vmatprep.subr.mxu0 0.0
    %1121 = vmatpush1.msra.mxu0 %v1086
    %1122 = vmatprep.subr.mxu0 0.0
    %1123 = vmatpush1.msra.mxu0 %v1085
    %1124 = vmatprep.subr.mxu0 0.0
    %1125 = vmatpush1.msra.mxu0 %v1084
    %1126 = vmatprep.subr.mxu0 0.0
    %1127 = vmatpush1.msra.mxu0 %v1083
    %1128 = vmatprep.subr.mxu0 0.0
    %1129 = vmatpush1.msra.mxu0 %v1082
    %1130 = vmatprep.subr.mxu0 0.0
    %1131 = vmatpush2.msra.mxu0 0.0
    %1132 = vmatprep.subr.mxu0 0.0
    %1133 = vmatpush2.msra.mxu0 0.0
    %1134 = vmatprep.subr.mxu0 0.0
    %1135 = vmatpush2.msra.mxu0 0.0
    %1136 = vmatprep.subr.mxu0 0.0
    %1137 = vmatpush2.msra.mxu0 0.0
    %1138 = vmatprep.subr.mxu0 0.0
    %1139 = vmatpush2.msra.mxu0 0.0
    %1140 = vmatprep.subr.mxu0 0.0
    %1141 = vmatpush2.msra.mxu0 0.0
    %1142 = vmatprep.subr.mxu0 0.0
    %1143 = vmatpush2.msra.mxu0 0.0
    %1144 = vmatprep.subr.mxu0 0.0
    %1145 = vmatpush2.msra.mxu0 0.0
    %1146 = vmatprep.subr.mxu0 0.0
    %1147 = vmatpush2.msra.mxu0 0.0
    %1148 = vmatprep.subr.mxu0 0.0
    %1149 = vmatpush2.msra.mxu0 0.0
    %1150 = vmatprep.subr.mxu0 0.0
    %1151 = vmatpush2.msra.mxu0 0.0
    %1152 = vmatprep.subr.mxu0 0.0
    %1153 = vmatpush2.msra.mxu0 0.0
    %1154 = vmatprep.subr.mxu0 0.0
    %1155 = vmatpush2.msra.mxu0 0.0
    %1156 = vmatprep.subr.mxu0 0.0
    %1157 = vmatpush2.msra.mxu0 0.0
    %1158 = vmatprep.subr.mxu0 0.0
    %1159 = vmatpush2.msra.mxu0 0.0
    %1160 = vmatprep.subr.mxu0 0.0
    %1161 = vmatpush2.msra.mxu0 0.0
    %1162 = vmatprep.mubr.f32.mxu0 0.0
    %1163 = vmatmul.mubr.f32.gmra.mxu0 %v1063
    %v1164 = vpop.f32.mrf.mxu0
    %v1165 = vadd.f32 0.0, %v1164
    %v1166 = vpop.f32.mrf.mxu0
    %1167 = vmatprep.mubr.f32.mxu0 0.0
    %1168 = vmatmul.mubr.f32.gmra.mxu0 %v1068
    %v1169 = vpop.f32.mrf.mxu0
    %v1170 = vadd.f32 0.0, %v1169
    %v1171 = vpop.f32.mrf.mxu0
    %1172 = vmatprep.mubr.f32.mxu0 0.0
    %1173 = vmatmul.mubr.f32.gmra.mxu0 %v1073
    %v1174 = vpop.f32.mrf.mxu0
    %v1175 = vadd.f32 0.0, %v1174
    %v1176 = vpop.f32.mrf.mxu0
    %1177 = vmatprep.mubr.f32.mxu0 0.0
    %1178 = vmatmul.mubr.f32.gmra.mxu0 %v1078
    %v1179 = vpop.f32.mrf.mxu0
    %v1180 = vadd.f32 0.0, %v1179
    %v1181 = vpop.f32.mrf.mxu0
    %1182 = vdwg.mxu0
    %v1183 = vadd.f32 %v987, %v1165
    %v1184 = vadd.f32 %v988, %v1170
    %v1185 = vadd.f32 %v989, %v1175
    %v1186 = vadd.f32 %v990, %v1180
    %s1187 = scalar_lea.vmem %s2, 160
    %v1188 = vld [vmem:[%s1187] sm:$0xff]
    %v1189 = vld [vmem:[%s1187 + $0x8] sm:$0xff]
    %v1190 = vld [vmem:[%s1187 + $0x10] sm:$0xff]
    %v1191 = vld [vmem:[%s1187 + $0x18] sm:$0xff]
    %1192 = vmatprep.subr.mxu0 0.0
    %1193 = vmatpush1.msra.mxu0 %v216
    %1194 = vmatprep.subr.mxu0 0.0
    %1195 = vmatpush1.msra.mxu0 %v215
    %1196 = vmatprep.subr.mxu0 0.0
    %1197 = vmatpush1.msra.mxu0 %v214
    %1198 = vmatprep.subr.mxu0 0.0
    %1199 = vmatpush1.msra.mxu0 %v213
    %1200 = vmatprep.subr.mxu0 0.0
    %1201 = vmatpush1.msra.mxu0 %v212
    %1202 = vmatprep.subr.mxu0 0.0
    %1203 = vmatpush1.msra.mxu0 %v211
    %1204 = vmatprep.subr.mxu0 0.0
    %1205 = vmatpush1.msra.mxu0 %v210
    %1206 = vmatprep.subr.mxu0 0.0
    %1207 = vmatpush1.msra.mxu0 %v209
    %1208 = vmatprep.subr.mxu0 0.0
    %1209 = vmatpush1.msra.mxu0 %v208
    %1210 = vmatprep.subr.mxu0 0.0
    %1211 = vmatpush1.msra.mxu0 %v207
    %1212 = vmatprep.subr.mxu0 0.0
    %1213 = vmatpush1.msra.mxu0 %v206
    %1214 = vmatprep.subr.mxu0 0.0
    %1215 = vmatpush1.msra.mxu0 %v205
    %1216 = vmatprep.subr.mxu0 0.0
    %1217 = vmatpush1.msra.mxu0 %v204
    %1218 = vmatprep.subr.mxu0 0.0
    %1219 = vmatpush1.msra.mxu0 %v203
    %1220 = vmatprep.subr.mxu0 0.0
    %1221 = vmatpush1.msra.mxu0 %v202
    %1222 = vmatprep.subr.mxu0 0.0
    %1223 = vmatpush1.msra.mxu0 %v201
    %1224 = vmatprep.subr.mxu0 0.0
    %1225 = vmatpush2.msra.mxu0 0.0
    %1226 = vmatprep.subr.mxu0 0.0
    %1227 = vmatpush2.msra.mxu0 0.0
    %1228 = vmatprep.subr.mxu0 0.0
    %1229 = vmatpush2.msra.mxu0 0.0
    %1230 = vmatprep.subr.mxu0 0.0
    %1231 = vmatpush2.msra.mxu0 0.0
    %1232 = vmatprep.subr.mxu0 0.0
    %1233 = vmatpush2.msra.mxu0 0.0
    %1234 = vmatprep.subr.mxu0 0.0
    %1235 = vmatpush2.msra.mxu0 0.0
    %1236 = vmatprep.subr.mxu0 0.0
    %1237 = vmatpush2.msra.mxu0 0.0
    %1238 = vmatprep.subr.mxu0 0.0
    %1239 = vmatpush2.msra.mxu0 0.0
    %1240 = vmatprep.subr.mxu0 0.0
    %1241 = vmatpush2.msra.mxu0 0.0
    %1242 = vmatprep.subr.mxu0 0.0
    %1243 = vmatpush2.msra.mxu0 0.0
    %1244 = vmatprep.subr.mxu0 0.0
    %1245 = vmatpush2.msra.mxu0 0.0
    %1246 = vmatprep.subr.mxu0 0.0
    %1247 = vmatpush2.msra.mxu0 0.0
    %1248 = vmatprep.subr.mxu0 0.0
    %1249 = vmatpush2.msra.mxu0 0.0
    %1250 = vmatprep.subr.mxu0 0.0
    %1251 = vmatpush2.msra.mxu0 0.0
    %1252 = vmatprep.subr.mxu0 0.0
    %1253 = vmatpush2.msra.mxu0 0.0
    %1254 = vmatprep.subr.mxu0 0.0
    %1255 = vmatpush2.msra.mxu0 0.0
    %1256 = vmatprep.mubr.f32.mxu0 0.0
    %1257 = vmatmul.mubr.f32.gmra.mxu0 %v1188
    %v1258 = vpop.f32.mrf.mxu0
    %v1259 = vadd.f32 0.0, %v1258
    %v1260 = vpop.f32.mrf.mxu0
    %1261 = vmatprep.mubr.f32.mxu0 0.0
    %1262 = vmatmul.mubr.f32.gmra.mxu0 %v1189
    %v1263 = vpop.f32.mrf.mxu0
    %v1264 = vadd.f32 0.0, %v1263
    %v1265 = vpop.f32.mrf.mxu0
    %1266 = vmatprep.mubr.f32.mxu0 0.0
    %1267 = vmatmul.mubr.f32.gmra.mxu0 %v1190
    %v1268 = vpop.f32.mrf.mxu0
    %v1269 = vadd.f32 0.0, %v1268
    %v1270 = vpop.f32.mrf.mxu0
    %1271 = vmatprep.mubr.f32.mxu0 0.0
    %1272 = vmatmul.mubr.f32.gmra.mxu0 %v1191
    %v1273 = vpop.f32.mrf.mxu0
    %v1274 = vadd.f32 0.0, %v1273
    %v1275 = vpop.f32.mrf.mxu0
    %1276 = vdwg.mxu0
    %s1277 = scalar_lea.vmem %s3, 640
    %v1278 = vld [vmem:[%s1277] sm:$0xff]
    %v1279 = vld [vmem:[%s1277 + $0x8] sm:$0xff]
    %v1280 = vld [vmem:[%s1277 + $0x10] sm:$0xff]
    %v1281 = vld [vmem:[%s1277 + $0x18] sm:$0xff]
    %v1282 = vld [vmem:[%s1277 + $0x20] sm:$0xff]
    %v1283 = vld [vmem:[%s1277 + $0x28] sm:$0xff]
    %v1284 = vld [vmem:[%s1277 + $0x30] sm:$0xff]
    %v1285 = vld [vmem:[%s1277 + $0x38] sm:$0xff]
    %v1286 = vld [vmem:[%s1277 + $0x40] sm:$0xff]
    %v1287 = vld [vmem:[%s1277 + $0x48] sm:$0xff]
    %v1288 = vld [vmem:[%s1277 + $0x50] sm:$0xff]
    %v1289 = vld [vmem:[%s1277 + $0x58] sm:$0xff]
    %v1290 = vld [vmem:[%s1277 + $0x60] sm:$0xff]
    %v1291 = vld [vmem:[%s1277 + $0x68] sm:$0xff]
    %v1292 = vld [vmem:[%s1277 + $0x70] sm:$0xff]
    %v1293 = vld [vmem:[%s1277 + $0x78] sm:$0xff]
    %1294 = vmatprep.subr.mxu0 0.0
    %1295 = vmatpush1.msra.mxu0 %v1293
    %1296 = vmatprep.subr.mxu0 0.0
    %1297 = vmatpush1.msra.mxu0 %v1292
    %1298 = vmatprep.subr.mxu0 0.0
    %1299 = vmatpush1.msra.mxu0 %v1291
    %1300 = vmatprep.subr.mxu0 0.0
    %1301 = vmatpush1.msra.mxu0 %v1290
    %1302 = vmatprep.subr.mxu0 0.0
    %1303 = vmatpush1.msra.mxu0 %v1289
    %1304 = vmatprep.subr.mxu0 0.0
    %1305 = vmatpush1.msra.mxu0 %v1288
    %1306 = vmatprep.subr.mxu0 0.0
    %1307 = vmatpush1.msra.mxu0 %v1287
    %1308 = vmatprep.subr.mxu0 0.0
    %1309 = vmatpush1.msra.mxu0 %v1286
    %1310 = vmatprep.subr.mxu0 0.0
    %1311 = vmatpush1.msra.mxu0 %v1285
    %1312 = vmatprep.subr.mxu0 0.0
    %1313 = vmatpush1.msra.mxu0 %v1284
    %1314 = vmatprep.subr.mxu0 0.0
    %1315 = vmatpush1.msra.mxu0 %v1283
    %1316 = vmatprep.subr.mxu0 0.0
    %1317 = vmatpush1.msra.mxu0 %v1282
    %1318 = vmatprep.subr.mxu0 0.0
    %1319 = vmatpush1.msra.mxu0 %v1281
    %1320 = vmatprep.subr.mxu0 0.0
    %1321 = vmatpush1.msra.mxu0 %v1280
    %1322 = vmatprep.subr.mxu0 0.0
    %1323 = vmatpush1.msra.mxu0 %v1279
    %1324 = vmatprep.subr.mxu0 0.0
    %1325 = vmatpush1.msra.mxu0 %v1278
    %1326 = vmatprep.subr.mxu0 0.0
    %1327 = vmatpush2.msra.mxu0 0.0
    %1328 = vmatprep.subr.mxu0 0.0
    %1329 = vmatpush2.msra.mxu0 0.0
    %1330 = vmatprep.subr.mxu0 0.0
    %1331 = vmatpush2.msra.mxu0 0.0
    %1332 = vmatprep.subr.mxu0 0.0
    %1333 = vmatpush2.msra.mxu0 0.0
    %1334 = vmatprep.subr.mxu0 0.0
    %1335 = vmatpush2.msra.mxu0 0.0
    %1336 = vmatprep.subr.mxu0 0.0
    %1337 = vmatpush2.msra.mxu0 0.0
    %1338 = vmatprep.subr.mxu0 0.0
    %1339 = vmatpush2.msra.mxu0 0.0
    %1340 = vmatprep.subr.mxu0 0.0
    %1341 = vmatpush2.msra.mxu0 0.0
    %1342 = vmatprep.subr.mxu0 0.0
    %1343 = vmatpush2.msra.mxu0 0.0
    %1344 = vmatprep.subr.mxu0 0.0
    %1345 = vmatpush2.msra.mxu0 0.0
    %1346 = vmatprep.subr.mxu0 0.0
    %1347 = vmatpush2.msra.mxu0 0.0
    %1348 = vmatprep.subr.mxu0 0.0
    %1349 = vmatpush2.msra.mxu0 0.0
    %1350 = vmatprep.subr.mxu0 0.0
    %1351 = vmatpush2.msra.mxu0 0.0
    %1352 = vmatprep.subr.mxu0 0.0
    %1353 = vmatpush2.msra.mxu0 0.0
    %1354 = vmatprep.subr.mxu0 0.0
    %1355 = vmatpush2.msra.mxu0 0.0
    %1356 = vmatprep.subr.mxu0 0.0
    %1357 = vmatpush2.msra.mxu0 0.0
    %1358 = vmatprep.mubr.f32.mxu0 0.0
    %1359 = vmatmul.mubr.f32.gmra.mxu0 %v1259
    %v1360 = vpop.f32.mrf.mxu0
    %v1361 = vadd.f32 0.0, %v1360
    %v1362 = vpop.f32.mrf.mxu0
    %1363 = vmatprep.mubr.f32.mxu0 0.0
    %1364 = vmatmul.mubr.f32.gmra.mxu0 %v1264
    %v1365 = vpop.f32.mrf.mxu0
    %v1366 = vadd.f32 0.0, %v1365
    %v1367 = vpop.f32.mrf.mxu0
    %1368 = vmatprep.mubr.f32.mxu0 0.0
    %1369 = vmatmul.mubr.f32.gmra.mxu0 %v1269
    %v1370 = vpop.f32.mrf.mxu0
    %v1371 = vadd.f32 0.0, %v1370
    %v1372 = vpop.f32.mrf.mxu0
    %1373 = vmatprep.mubr.f32.mxu0 0.0
    %1374 = vmatmul.mubr.f32.gmra.mxu0 %v1274
    %v1375 = vpop.f32.mrf.mxu0
    %v1376 = vadd.f32 0.0, %v1375
    %v1377 = vpop.f32.mrf.mxu0
    %1378 = vdwg.mxu0
    %v1379 = vadd.f32 %v1183, %v1361
    %v1380 = vadd.f32 %v1184, %v1366
    %v1381 = vadd.f32 %v1185, %v1371
    %v1382 = vadd.f32 %v1186, %v1376
    %s1383 = scalar_lea.vmem %s2, 192
    %v1384 = vld [vmem:[%s1383] sm:$0xff]
    %v1385 = vld [vmem:[%s1383 + $0x8] sm:$0xff]
    %v1386 = vld [vmem:[%s1383 + $0x10] sm:$0xff]
    %v1387 = vld [vmem:[%s1383 + $0x18] sm:$0xff]
    %1388 = vmatprep.subr.mxu0 0.0
    %1389 = vmatpush1.msra.mxu0 %v216
    %1390 = vmatprep.subr.mxu0 0.0
    %1391 = vmatpush1.msra.mxu0 %v215
    %1392 = vmatprep.subr.mxu0 0.0
    %1393 = vmatpush1.msra.mxu0 %v214
    %1394 = vmatprep.subr.mxu0 0.0
    %1395 = vmatpush1.msra.mxu0 %v213
    %1396 = vmatprep.subr.mxu0 0.0
    %1397 = vmatpush1.msra.mxu0 %v212
    %1398 = vmatprep.subr.mxu0 0.0
    %1399 = vmatpush1.msra.mxu0 %v211
    %1400 = vmatprep.subr.mxu0 0.0
    %1401 = vmatpush1.msra.mxu0 %v210
    %1402 = vmatprep.subr.mxu0 0.0
    %1403 = vmatpush1.msra.mxu0 %v209
    %1404 = vmatprep.subr.mxu0 0.0
    %1405 = vmatpush1.msra.mxu0 %v208
    %1406 = vmatprep.subr.mxu0 0.0
    %1407 = vmatpush1.msra.mxu0 %v207
    %1408 = vmatprep.subr.mxu0 0.0
    %1409 = vmatpush1.msra.mxu0 %v206
    %1410 = vmatprep.subr.mxu0 0.0
    %1411 = vmatpush1.msra.mxu0 %v205
    %1412 = vmatprep.subr.mxu0 0.0
    %1413 = vmatpush1.msra.mxu0 %v204
    %1414 = vmatprep.subr.mxu0 0.0
    %1415 = vmatpush1.msra.mxu0 %v203
    %1416 = vmatprep.subr.mxu0 0.0
    %1417 = vmatpush1.msra.mxu0 %v202
    %1418 = vmatprep.subr.mxu0 0.0
    %1419 = vmatpush1.msra.mxu0 %v201
    %1420 = vmatprep.subr.mxu0 0.0
    %1421 = vmatpush2.msra.mxu0 0.0
    %1422 = vmatprep.subr.mxu0 0.0
    %1423 = vmatpush2.msra.mxu0 0.0
    %1424 = vmatprep.subr.mxu0 0.0
    %1425 = vmatpush2.msra.mxu0 0.0
    %1426 = vmatprep.subr.mxu0 0.0
    %1427 = vmatpush2.msra.mxu0 0.0
    %1428 = vmatprep.subr.mxu0 0.0
    %1429 = vmatpush2.msra.mxu0 0.0
    %1430 = vmatprep.subr.mxu0 0.0
    %1431 = vmatpush2.msra.mxu0 0.0
    %1432 = vmatprep.subr.mxu0 0.0
    %1433 = vmatpush2.msra.mxu0 0.0
    %1434 = vmatprep.subr.mxu0 0.0
    %1435 = vmatpush2.msra.mxu0 0.0
    %1436 = vmatprep.subr.mxu0 0.0
    %1437 = vmatpush2.msra.mxu0 0.0
    %1438 = vmatprep.subr.mxu0 0.0
    %1439 = vmatpush2.msra.mxu0 0.0
    %1440 = vmatprep.subr.mxu0 0.0
    %1441 = vmatpush2.msra.mxu0 0.0
    %1442 = vmatprep.subr.mxu0 0.0
    %1443 = vmatpush2.msra.mxu0 0.0
    %1444 = vmatprep.subr.mxu0 0.0
    %1445 = vmatpush2.msra.mxu0 0.0
    %1446 = vmatprep.subr.mxu0 0.0
    %1447 = vmatpush2.msra.mxu0 0.0
    %1448 = vmatprep.subr.mxu0 0.0
    %1449 = vmatpush2.msra.mxu0 0.0
    %1450 = vmatprep.subr.mxu0 0.0
    %1451 = vmatpush2.msra.mxu0 0.0
    %1452 = vmatprep.mubr.f32.mxu0 0.0
    %1453 = vmatmul.mubr.f32.gmra.mxu0 %v1384
    %v1454 = vpop.f32.mrf.mxu0
    %v1455 = vadd.f32 0.0, %v1454
    %v1456 = vpop.f32.mrf.mxu0
    %1457 = vmatprep.mubr.f32.mxu0 0.0
    %1458 = vmatmul.mubr.f32.gmra.mxu0 %v1385
    %v1459 = vpop.f32.mrf.mxu0
    %v1460 = vadd.f32 0.0, %v1459
    %v1461 = vpop.f32.mrf.mxu0
    %1462 = vmatprep.mubr.f32.mxu0 0.0
    %1463 = vmatmul.mubr.f32.gmra.mxu0 %v1386
    %v1464 = vpop.f32.mrf.mxu0
    %v1465 = vadd.f32 0.0, %v1464
    %v1466 = vpop.f32.mrf.mxu0
    %1467 = vmatprep.mubr.f32.mxu0 0.0
    %1468 = vmatmul.mubr.f32.gmra.mxu0 %v1387
    %v1469 = vpop.f32.mrf.mxu0
    %v1470 = vadd.f32 0.0, %v1469
    %v1471 = vpop.f32.mrf.mxu0
    %1472 = vdwg.mxu0
    %s1473 = scalar_lea.vmem %s3, 768
    %v1474 = vld [vmem:[%s1473] sm:$0xff]
    %v1475 = vld [vmem:[%s1473 + $0x8] sm:$0xff]
    %v1476 = vld [vmem:[%s1473 + $0x10] sm:$0xff]
    %v1477 = vld [vmem:[%s1473 + $0x18] sm:$0xff]
    %v1478 = vld [vmem:[%s1473 + $0x20] sm:$0xff]
    %v1479 = vld [vmem:[%s1473 + $0x28] sm:$0xff]
    %v1480 = vld [vmem:[%s1473 + $0x30] sm:$0xff]
    %v1481 = vld [vmem:[%s1473 + $0x38] sm:$0xff]
    %v1482 = vld [vmem:[%s1473 + $0x40] sm:$0xff]
    %v1483 = vld [vmem:[%s1473 + $0x48] sm:$0xff]
    %v1484 = vld [vmem:[%s1473 + $0x50] sm:$0xff]
    %v1485 = vld [vmem:[%s1473 + $0x58] sm:$0xff]
    %v1486 = vld [vmem:[%s1473 + $0x60] sm:$0xff]
    %v1487 = vld [vmem:[%s1473 + $0x68] sm:$0xff]
    %v1488 = vld [vmem:[%s1473 + $0x70] sm:$0xff]
    %v1489 = vld [vmem:[%s1473 + $0x78] sm:$0xff]
    %1490 = vmatprep.subr.mxu0 0.0
    %1491 = vmatpush1.msra.mxu0 %v1489
    %1492 = vmatprep.subr.mxu0 0.0
    %1493 = vmatpush1.msra.mxu0 %v1488
    %1494 = vmatprep.subr.mxu0 0.0
    %1495 = vmatpush1.msra.mxu0 %v1487
    %1496 = vmatprep.subr.mxu0 0.0
    %1497 = vmatpush1.msra.mxu0 %v1486
    %1498 = vmatprep.subr.mxu0 0.0
    %1499 = vmatpush1.msra.mxu0 %v1485
    %1500 = vmatprep.subr.mxu0 0.0
    %1501 = vmatpush1.msra.mxu0 %v1484
    %1502 = vmatprep.subr.mxu0 0.0
    %1503 = vmatpush1.msra.mxu0 %v1483
    %1504 = vmatprep.subr.mxu0 0.0
    %1505 = vmatpush1.msra.mxu0 %v1482
    %1506 = vmatprep.subr.mxu0 0.0
    %1507 = vmatpush1.msra.mxu0 %v1481
    %1508 = vmatprep.subr.mxu0 0.0
    %1509 = vmatpush1.msra.mxu0 %v1480
    %1510 = vmatprep.subr.mxu0 0.0
    %1511 = vmatpush1.msra.mxu0 %v1479
    %1512 = vmatprep.subr.mxu0 0.0
    %1513 = vmatpush1.msra.mxu0 %v1478
    %1514 = vmatprep.subr.mxu0 0.0
    %1515 = vmatpush1.msra.mxu0 %v1477
    %1516 = vmatprep.subr.mxu0 0.0
    %1517 = vmatpush1.msra.mxu0 %v1476
    %1518 = vmatprep.subr.mxu0 0.0
    %1519 = vmatpush1.msra.mxu0 %v1475
    %1520 = vmatprep.subr.mxu0 0.0
    %1521 = vmatpush1.msra.mxu0 %v1474
    %1522 = vmatprep.subr.mxu0 0.0
    %1523 = vmatpush2.msra.mxu0 0.0
    %1524 = vmatprep.subr.mxu0 0.0
    %1525 = vmatpush2.msra.mxu0 0.0
    %1526 = vmatprep.subr.mxu0 0.0
    %1527 = vmatpush2.msra.mxu0 0.0
    %1528 = vmatprep.subr.mxu0 0.0
    %1529 = vmatpush2.msra.mxu0 0.0
    %1530 = vmatprep.subr.mxu0 0.0
    %1531 = vmatpush2.msra.mxu0 0.0
    %1532 = vmatprep.subr.mxu0 0.0
    %1533 = vmatpush2.msra.mxu0 0.0
    %1534 = vmatprep.subr.mxu0 0.0
    %1535 = vmatpush2.msra.mxu0 0.0
    %1536 = vmatprep.subr.mxu0 0.0
    %1537 = vmatpush2.msra.mxu0 0.0
    %1538 = vmatprep.subr.mxu0 0.0
    %1539 = vmatpush2.msra.mxu0 0.0
    %1540 = vmatprep.subr.mxu0 0.0
    %1541 = vmatpush2.msra.mxu0 0.0
    %1542 = vmatprep.subr.mxu0 0.0
    %1543 = vmatpush2.msra.mxu0 0.0
    %1544 = vmatprep.subr.mxu0 0.0
    %1545 = vmatpush2.msra.mxu0 0.0
    %1546 = vmatprep.subr.mxu0 0.0
    %1547 = vmatpush2.msra.mxu0 0.0
    %1548 = vmatprep.subr.mxu0 0.0
    %1549 = vmatpush2.msra.mxu0 0.0
    %1550 = vmatprep.subr.mxu0 0.0
    %1551 = vmatpush2.msra.mxu0 0.0
    %1552 = vmatprep.subr.mxu0 0.0
    %1553 = vmatpush2.msra.mxu0 0.0
    %1554 = vmatprep.mubr.f32.mxu0 0.0
    %1555 = vmatmul.mubr.f32.gmra.mxu0 %v1455
    %v1556 = vpop.f32.mrf.mxu0
    %v1557 = vadd.f32 0.0, %v1556
    %v1558 = vpop.f32.mrf.mxu0
    %1559 = vmatprep.mubr.f32.mxu0 0.0
    %1560 = vmatmul.mubr.f32.gmra.mxu0 %v1460
    %v1561 = vpop.f32.mrf.mxu0
    %v1562 = vadd.f32 0.0, %v1561
    %v1563 = vpop.f32.mrf.mxu0
    %1564 = vmatprep.mubr.f32.mxu0 0.0
    %1565 = vmatmul.mubr.f32.gmra.mxu0 %v1465
    %v1566 = vpop.f32.mrf.mxu0
    %v1567 = vadd.f32 0.0, %v1566
    %v1568 = vpop.f32.mrf.mxu0
    %1569 = vmatprep.mubr.f32.mxu0 0.0
    %1570 = vmatmul.mubr.f32.gmra.mxu0 %v1470
    %v1571 = vpop.f32.mrf.mxu0
    %v1572 = vadd.f32 0.0, %v1571
    %v1573 = vpop.f32.mrf.mxu0
    %1574 = vdwg.mxu0
    %v1575 = vadd.f32 %v1379, %v1557
    %v1576 = vadd.f32 %v1380, %v1562
    %v1577 = vadd.f32 %v1381, %v1567
    %v1578 = vadd.f32 %v1382, %v1572
    %s1579 = scalar_lea.vmem %s2, 224
    %v1580 = vld [vmem:[%s1579] sm:$0xff]
    %v1581 = vld [vmem:[%s1579 + $0x8] sm:$0xff]
    %v1582 = vld [vmem:[%s1579 + $0x10] sm:$0xff]
    %v1583 = vld [vmem:[%s1579 + $0x18] sm:$0xff]
    %1584 = vmatprep.subr.mxu0 0.0
    %1585 = vmatpush1.msra.mxu0 %v216
    %1586 = vmatprep.subr.mxu0 0.0
    %1587 = vmatpush1.msra.mxu0 %v215
    %1588 = vmatprep.subr.mxu0 0.0
    %1589 = vmatpush1.msra.mxu0 %v214
    %1590 = vmatprep.subr.mxu0 0.0
    %1591 = vmatpush1.msra.mxu0 %v213
    %1592 = vmatprep.subr.mxu0 0.0
    %1593 = vmatpush1.msra.mxu0 %v212
    %1594 = vmatprep.subr.mxu0 0.0
    %1595 = vmatpush1.msra.mxu0 %v211
    %1596 = vmatprep.subr.mxu0 0.0
    %1597 = vmatpush1.msra.mxu0 %v210
    %1598 = vmatprep.subr.mxu0 0.0
    %1599 = vmatpush1.msra.mxu0 %v209
    %1600 = vmatprep.subr.mxu0 0.0
    %1601 = vmatpush1.msra.mxu0 %v208
    %1602 = vmatprep.subr.mxu0 0.0
    %1603 = vmatpush1.msra.mxu0 %v207
    %1604 = vmatprep.subr.mxu0 0.0
    %1605 = vmatpush1.msra.mxu0 %v206
    %1606 = vmatprep.subr.mxu0 0.0
    %1607 = vmatpush1.msra.mxu0 %v205
    %1608 = vmatprep.subr.mxu0 0.0
    %1609 = vmatpush1.msra.mxu0 %v204
    %1610 = vmatprep.subr.mxu0 0.0
    %1611 = vmatpush1.msra.mxu0 %v203
    %1612 = vmatprep.subr.mxu0 0.0
    %1613 = vmatpush1.msra.mxu0 %v202
    %1614 = vmatprep.subr.mxu0 0.0
    %1615 = vmatpush1.msra.mxu0 %v201
    %1616 = vmatprep.subr.mxu0 0.0
    %1617 = vmatpush2.msra.mxu0 0.0
    %1618 = vmatprep.subr.mxu0 0.0
    %1619 = vmatpush2.msra.mxu0 0.0
    %1620 = vmatprep.subr.mxu0 0.0
    %1621 = vmatpush2.msra.mxu0 0.0
    %1622 = vmatprep.subr.mxu0 0.0
    %1623 = vmatpush2.msra.mxu0 0.0
    %1624 = vmatprep.subr.mxu0 0.0
    %1625 = vmatpush2.msra.mxu0 0.0
    %1626 = vmatprep.subr.mxu0 0.0
    %1627 = vmatpush2.msra.mxu0 0.0
    %1628 = vmatprep.subr.mxu0 0.0
    %1629 = vmatpush2.msra.mxu0 0.0
    %1630 = vmatprep.subr.mxu0 0.0
    %1631 = vmatpush2.msra.mxu0 0.0
    %1632 = vmatprep.subr.mxu0 0.0
    %1633 = vmatpush2.msra.mxu0 0.0
    %1634 = vmatprep.subr.mxu0 0.0
    %1635 = vmatpush2.msra.mxu0 0.0
    %1636 = vmatprep.subr.mxu0 0.0
    %1637 = vmatpush2.msra.mxu0 0.0
    %1638 = vmatprep.subr.mxu0 0.0
    %1639 = vmatpush2.msra.mxu0 0.0
    %1640 = vmatprep.subr.mxu0 0.0
    %1641 = vmatpush2.msra.mxu0 0.0
    %1642 = vmatprep.subr.mxu0 0.0
    %1643 = vmatpush2.msra.mxu0 0.0
    %1644 = vmatprep.subr.mxu0 0.0
    %1645 = vmatpush2.msra.mxu0 0.0
    %1646 = vmatprep.subr.mxu0 0.0
    %1647 = vmatpush2.msra.mxu0 0.0
    %1648 = vmatprep.mubr.f32.mxu0 0.0
    %1649 = vmatmul.mubr.f32.gmra.mxu0 %v1580
    %v1650 = vpop.f32.mrf.mxu0
    %v1651 = vadd.f32 0.0, %v1650
    %v1652 = vpop.f32.mrf.mxu0
    %1653 = vmatprep.mubr.f32.mxu0 0.0
    %1654 = vmatmul.mubr.f32.gmra.mxu0 %v1581
    %v1655 = vpop.f32.mrf.mxu0
    %v1656 = vadd.f32 0.0, %v1655
    %v1657 = vpop.f32.mrf.mxu0
    %1658 = vmatprep.mubr.f32.mxu0 0.0
    %1659 = vmatmul.mubr.f32.gmra.mxu0 %v1582
    %v1660 = vpop.f32.mrf.mxu0
    %v1661 = vadd.f32 0.0, %v1660
    %v1662 = vpop.f32.mrf.mxu0
    %1663 = vmatprep.mubr.f32.mxu0 0.0
    %1664 = vmatmul.mubr.f32.gmra.mxu0 %v1583
    %v1665 = vpop.f32.mrf.mxu0
    %v1666 = vadd.f32 0.0, %v1665
    %v1667 = vpop.f32.mrf.mxu0
    %1668 = vdwg.mxu0
    %s1669 = scalar_lea.vmem %s3, 896
    %v1670 = vld [vmem:[%s1669] sm:$0xff]
    %v1671 = vld [vmem:[%s1669 + $0x8] sm:$0xff]
    %v1672 = vld [vmem:[%s1669 + $0x10] sm:$0xff]
    %v1673 = vld [vmem:[%s1669 + $0x18] sm:$0xff]
    %v1674 = vld [vmem:[%s1669 + $0x20] sm:$0xff]
    %v1675 = vld [vmem:[%s1669 + $0x28] sm:$0xff]
    %v1676 = vld [vmem:[%s1669 + $0x30] sm:$0xff]
    %v1677 = vld [vmem:[%s1669 + $0x38] sm:$0xff]
    %v1678 = vld [vmem:[%s1669 + $0x40] sm:$0xff]
    %v1679 = vld [vmem:[%s1669 + $0x48] sm:$0xff]
    %v1680 = vld [vmem:[%s1669 + $0x50] sm:$0xff]
    %v1681 = vld [vmem:[%s1669 + $0x58] sm:$0xff]
    %v1682 = vld [vmem:[%s1669 + $0x60] sm:$0xff]
    %v1683 = vld [vmem:[%s1669 + $0x68] sm:$0xff]
    %v1684 = vld [vmem:[%s1669 + $0x70] sm:$0xff]
    %v1685 = vld [vmem:[%s1669 + $0x78] sm:$0xff]
    %1686 = vmatprep.subr.mxu0 0.0
    %1687 = vmatpush1.msra.mxu0 %v1685
    %1688 = vmatprep.subr.mxu0 0.0
    %1689 = vmatpush1.msra.mxu0 %v1684
    %1690 = vmatprep.subr.mxu0 0.0
    %1691 = vmatpush1.msra.mxu0 %v1683
    %1692 = vmatprep.subr.mxu0 0.0
    %1693 = vmatpush1.msra.mxu0 %v1682
    %1694 = vmatprep.subr.mxu0 0.0
    %1695 = vmatpush1.msra.mxu0 %v1681
    %1696 = vmatprep.subr.mxu0 0.0
    %1697 = vmatpush1.msra.mxu0 %v1680
    %1698 = vmatprep.subr.mxu0 0.0
    %1699 = vmatpush1.msra.mxu0 %v1679
    %1700 = vmatprep.subr.mxu0 0.0
    %1701 = vmatpush1.msra.mxu0 %v1678
    %1702 = vmatprep.subr.mxu0 0.0
    %1703 = vmatpush1.msra.mxu0 %v1677
    %1704 = vmatprep.subr.mxu0 0.0
    %1705 = vmatpush1.msra.mxu0 %v1676
    %1706 = vmatprep.subr.mxu0 0.0
    %1707 = vmatpush1.msra.mxu0 %v1675
    %1708 = vmatprep.subr.mxu0 0.0
    %1709 = vmatpush1.msra.mxu0 %v1674
    %1710 = vmatprep.subr.mxu0 0.0
    %1711 = vmatpush1.msra.mxu0 %v1673
    %1712 = vmatprep.subr.mxu0 0.0
    %1713 = vmatpush1.msra.mxu0 %v1672
    %1714 = vmatprep.subr.mxu0 0.0
    %1715 = vmatpush1.msra.mxu0 %v1671
    %1716 = vmatprep.subr.mxu0 0.0
    %1717 = vmatpush1.msra.mxu0 %v1670
    %1718 = vmatprep.subr.mxu0 0.0
    %1719 = vmatpush2.msra.mxu0 0.0
    %1720 = vmatprep.subr.mxu0 0.0
    %1721 = vmatpush2.msra.mxu0 0.0
    %1722 = vmatprep.subr.mxu0 0.0
    %1723 = vmatpush2.msra.mxu0 0.0
    %1724 = vmatprep.subr.mxu0 0.0
    %1725 = vmatpush2.msra.mxu0 0.0
    %1726 = vmatprep.subr.mxu0 0.0
    %1727 = vmatpush2.msra.mxu0 0.0
    %1728 = vmatprep.subr.mxu0 0.0
    %1729 = vmatpush2.msra.mxu0 0.0
    %1730 = vmatprep.subr.mxu0 0.0
    %1731 = vmatpush2.msra.mxu0 0.0
    %1732 = vmatprep.subr.mxu0 0.0
    %1733 = vmatpush2.msra.mxu0 0.0
    %1734 = vmatprep.subr.mxu0 0.0
    %1735 = vmatpush2.msra.mxu0 0.0
    %1736 = vmatprep.subr.mxu0 0.0
    %1737 = vmatpush2.msra.mxu0 0.0
    %1738 = vmatprep.subr.mxu0 0.0
    %1739 = vmatpush2.msra.mxu0 0.0
    %1740 = vmatprep.subr.mxu0 0.0
    %1741 = vmatpush2.msra.mxu0 0.0
    %1742 = vmatprep.subr.mxu0 0.0
    %1743 = vmatpush2.msra.mxu0 0.0
    %1744 = vmatprep.subr.mxu0 0.0
    %1745 = vmatpush2.msra.mxu0 0.0
    %1746 = vmatprep.subr.mxu0 0.0
    %1747 = vmatpush2.msra.mxu0 0.0
    %1748 = vmatprep.subr.mxu0 0.0
    %1749 = vmatpush2.msra.mxu0 0.0
    %1750 = vmatprep.mubr.f32.mxu0 0.0
    %1751 = vmatmul.mubr.f32.gmra.mxu0 %v1651
    %v1752 = vpop.f32.mrf.mxu0
    %v1753 = vadd.f32 0.0, %v1752
    %v1754 = vpop.f32.mrf.mxu0
    %1755 = vmatprep.mubr.f32.mxu0 0.0
    %1756 = vmatmul.mubr.f32.gmra.mxu0 %v1656
    %v1757 = vpop.f32.mrf.mxu0
    %v1758 = vadd.f32 0.0, %v1757
    %v1759 = vpop.f32.mrf.mxu0
    %1760 = vmatprep.mubr.f32.mxu0 0.0
    %1761 = vmatmul.mubr.f32.gmra.mxu0 %v1661
    %v1762 = vpop.f32.mrf.mxu0
    %v1763 = vadd.f32 0.0, %v1762
    %v1764 = vpop.f32.mrf.mxu0
    %1765 = vmatprep.mubr.f32.mxu0 0.0
    %1766 = vmatmul.mubr.f32.gmra.mxu0 %v1666
    %v1767 = vpop.f32.mrf.mxu0
    %v1768 = vadd.f32 0.0, %v1767
    %v1769 = vpop.f32.mrf.mxu0
    %1770 = vdwg.mxu0
    %v1771 = vadd.f32 %v1575, %v1753
    %v1772 = vadd.f32 %v1576, %v1758
    %v1773 = vadd.f32 %v1577, %v1763
    %v1774 = vadd.f32 %v1578, %v1768
    %s1775 = scalar_lea.vmem %s2, 256
    %v1776 = vld [vmem:[%s1775] sm:$0xff]
    %v1777 = vld [vmem:[%s1775 + $0x8] sm:$0xff]
    %v1778 = vld [vmem:[%s1775 + $0x10] sm:$0xff]
    %v1779 = vld [vmem:[%s1775 + $0x18] sm:$0xff]
    %1780 = vmatprep.subr.mxu0 0.0
    %1781 = vmatpush1.msra.mxu0 %v216
    %1782 = vmatprep.subr.mxu0 0.0
    %1783 = vmatpush1.msra.mxu0 %v215
    %1784 = vmatprep.subr.mxu0 0.0
    %1785 = vmatpush1.msra.mxu0 %v214
    %1786 = vmatprep.subr.mxu0 0.0
    %1787 = vmatpush1.msra.mxu0 %v213
    %1788 = vmatprep.subr.mxu0 0.0
    %1789 = vmatpush1.msra.mxu0 %v212
    %1790 = vmatprep.subr.mxu0 0.0
    %1791 = vmatpush1.msra.mxu0 %v211
    %1792 = vmatprep.subr.mxu0 0.0
    %1793 = vmatpush1.msra.mxu0 %v210
    %1794 = vmatprep.subr.mxu0 0.0
    %1795 = vmatpush1.msra.mxu0 %v209
    %1796 = vmatprep.subr.mxu0 0.0
    %1797 = vmatpush1.msra.mxu0 %v208
    %1798 = vmatprep.subr.mxu0 0.0
    %1799 = vmatpush1.msra.mxu0 %v207
    %1800 = vmatprep.subr.mxu0 0.0
    %1801 = vmatpush1.msra.mxu0 %v206
    %1802 = vmatprep.subr.mxu0 0.0
    %1803 = vmatpush1.msra.mxu0 %v205
    %1804 = vmatprep.subr.mxu0 0.0
    %1805 = vmatpush1.msra.mxu0 %v204
    %1806 = vmatprep.subr.mxu0 0.0
    %1807 = vmatpush1.msra.mxu0 %v203
    %1808 = vmatprep.subr.mxu0 0.0
    %1809 = vmatpush1.msra.mxu0 %v202
    %1810 = vmatprep.subr.mxu0 0.0
    %1811 = vmatpush1.msra.mxu0 %v201
    %1812 = vmatprep.subr.mxu0 0.0
    %1813 = vmatpush2.msra.mxu0 0.0
    %1814 = vmatprep.subr.mxu0 0.0
    %1815 = vmatpush2.msra.mxu0 0.0
    %1816 = vmatprep.subr.mxu0 0.0
    %1817 = vmatpush2.msra.mxu0 0.0
    %1818 = vmatprep.subr.mxu0 0.0
    %1819 = vmatpush2.msra.mxu0 0.0
    %1820 = vmatprep.subr.mxu0 0.0
    %1821 = vmatpush2.msra.mxu0 0.0
    %1822 = vmatprep.subr.mxu0 0.0
    %1823 = vmatpush2.msra.mxu0 0.0
    %1824 = vmatprep.subr.mxu0 0.0
    %1825 = vmatpush2.msra.mxu0 0.0
    %1826 = vmatprep.subr.mxu0 0.0
    %1827 = vmatpush2.msra.mxu0 0.0
    %1828 = vmatprep.subr.mxu0 0.0
    %1829 = vmatpush2.msra.mxu0 0.0
    %1830 = vmatprep.subr.mxu0 0.0
    %1831 = vmatpush2.msra.mxu0 0.0
    %1832 = vmatprep.subr.mxu0 0.0
    %1833 = vmatpush2.msra.mxu0 0.0
    %1834 = vmatprep.subr.mxu0 0.0
    %1835 = vmatpush2.msra.mxu0 0.0
    %1836 = vmatprep.subr.mxu0 0.0
    %1837 = vmatpush2.msra.mxu0 0.0
    %1838 = vmatprep.subr.mxu0 0.0
    %1839 = vmatpush2.msra.mxu0 0.0
    %1840 = vmatprep.subr.mxu0 0.0
    %1841 = vmatpush2.msra.mxu0 0.0
    %1842 = vmatprep.subr.mxu0 0.0
    %1843 = vmatpush2.msra.mxu0 0.0
    %1844 = vmatprep.mubr.f32.mxu0 0.0
    %1845 = vmatmul.mubr.f32.gmra.mxu0 %v1776
    %v1846 = vpop.f32.mrf.mxu0
    %v1847 = vadd.f32 0.0, %v1846
    %v1848 = vpop.f32.mrf.mxu0
    %1849 = vmatprep.mubr.f32.mxu0 0.0
    %1850 = vmatmul.mubr.f32.gmra.mxu0 %v1777
    %v1851 = vpop.f32.mrf.mxu0
    %v1852 = vadd.f32 0.0, %v1851
    %v1853 = vpop.f32.mrf.mxu0
    %1854 = vmatprep.mubr.f32.mxu0 0.0
    %1855 = vmatmul.mubr.f32.gmra.mxu0 %v1778
    %v1856 = vpop.f32.mrf.mxu0
    %v1857 = vadd.f32 0.0, %v1856
    %v1858 = vpop.f32.mrf.mxu0
    %1859 = vmatprep.mubr.f32.mxu0 0.0
    %1860 = vmatmul.mubr.f32.gmra.mxu0 %v1779
    %v1861 = vpop.f32.mrf.mxu0
    %v1862 = vadd.f32 0.0, %v1861
    %v1863 = vpop.f32.mrf.mxu0
    %1864 = vdwg.mxu0
    %s1865 = scalar_lea.vmem %s3, 1024
    %v1866 = vld [vmem:[%s1865] sm:$0xff]
    %v1867 = vld [vmem:[%s1865 + $0x8] sm:$0xff]
    %v1868 = vld [vmem:[%s1865 + $0x10] sm:$0xff]
    %v1869 = vld [vmem:[%s1865 + $0x18] sm:$0xff]
    %v1870 = vld [vmem:[%s1865 + $0x20] sm:$0xff]
    %v1871 = vld [vmem:[%s1865 + $0x28] sm:$0xff]
    %v1872 = vld [vmem:[%s1865 + $0x30] sm:$0xff]
    %v1873 = vld [vmem:[%s1865 + $0x38] sm:$0xff]
    %v1874 = vld [vmem:[%s1865 + $0x40] sm:$0xff]
    %v1875 = vld [vmem:[%s1865 + $0x48] sm:$0xff]
    %v1876 = vld [vmem:[%s1865 + $0x50] sm:$0xff]
    %v1877 = vld [vmem:[%s1865 + $0x58] sm:$0xff]
    %v1878 = vld [vmem:[%s1865 + $0x60] sm:$0xff]
    %v1879 = vld [vmem:[%s1865 + $0x68] sm:$0xff]
    %v1880 = vld [vmem:[%s1865 + $0x70] sm:$0xff]
    %v1881 = vld [vmem:[%s1865 + $0x78] sm:$0xff]
    %1882 = vmatprep.subr.mxu0 0.0
    %1883 = vmatpush1.msra.mxu0 %v1881
    %1884 = vmatprep.subr.mxu0 0.0
    %1885 = vmatpush1.msra.mxu0 %v1880
    %1886 = vmatprep.subr.mxu0 0.0
    %1887 = vmatpush1.msra.mxu0 %v1879
    %1888 = vmatprep.subr.mxu0 0.0
    %1889 = vmatpush1.msra.mxu0 %v1878
    %1890 = vmatprep.subr.mxu0 0.0
    %1891 = vmatpush1.msra.mxu0 %v1877
    %1892 = vmatprep.subr.mxu0 0.0
    %1893 = vmatpush1.msra.mxu0 %v1876
    %1894 = vmatprep.subr.mxu0 0.0
    %1895 = vmatpush1.msra.mxu0 %v1875
    %1896 = vmatprep.subr.mxu0 0.0
    %1897 = vmatpush1.msra.mxu0 %v1874
    %1898 = vmatprep.subr.mxu0 0.0
    %1899 = vmatpush1.msra.mxu0 %v1873
    %1900 = vmatprep.subr.mxu0 0.0
    %1901 = vmatpush1.msra.mxu0 %v1872
    %1902 = vmatprep.subr.mxu0 0.0
    %1903 = vmatpush1.msra.mxu0 %v1871
    %1904 = vmatprep.subr.mxu0 0.0
    %1905 = vmatpush1.msra.mxu0 %v1870
    %1906 = vmatprep.subr.mxu0 0.0
    %1907 = vmatpush1.msra.mxu0 %v1869
    %1908 = vmatprep.subr.mxu0 0.0
    %1909 = vmatpush1.msra.mxu0 %v1868
    %1910 = vmatprep.subr.mxu0 0.0
    %1911 = vmatpush1.msra.mxu0 %v1867
    %1912 = vmatprep.subr.mxu0 0.0
    %1913 = vmatpush1.msra.mxu0 %v1866
    %1914 = vmatprep.subr.mxu0 0.0
    %1915 = vmatpush2.msra.mxu0 0.0
    %1916 = vmatprep.subr.mxu0 0.0
    %1917 = vmatpush2.msra.mxu0 0.0
    %1918 = vmatprep.subr.mxu0 0.0
    %1919 = vmatpush2.msra.mxu0 0.0
    %1920 = vmatprep.subr.mxu0 0.0
    %1921 = vmatpush2.msra.mxu0 0.0
    %1922 = vmatprep.subr.mxu0 0.0
    %1923 = vmatpush2.msra.mxu0 0.0
    %1924 = vmatprep.subr.mxu0 0.0
    %1925 = vmatpush2.msra.mxu0 0.0
    %1926 = vmatprep.subr.mxu0 0.0
    %1927 = vmatpush2.msra.mxu0 0.0
    %1928 = vmatprep.subr.mxu0 0.0
    %1929 = vmatpush2.msra.mxu0 0.0
    %1930 = vmatprep.subr.mxu0 0.0
    %1931 = vmatpush2.msra.mxu0 0.0
    %1932 = vmatprep.subr.mxu0 0.0
    %1933 = vmatpush2.msra.mxu0 0.0
    %1934 = vmatprep.subr.mxu0 0.0
    %1935 = vmatpush2.msra.mxu0 0.0
    %1936 = vmatprep.subr.mxu0 0.0
    %1937 = vmatpush2.msra.mxu0 0.0
    %1938 = vmatprep.subr.mxu0 0.0
    %1939 = vmatpush2.msra.mxu0 0.0
    %1940 = vmatprep.subr.mxu0 0.0
    %1941 = vmatpush2.msra.mxu0 0.0
    %1942 = vmatprep.subr.mxu0 0.0
    %1943 = vmatpush2.msra.mxu0 0.0
    %1944 = vmatprep.subr.mxu0 0.0
    %1945 = vmatpush2.msra.mxu0 0.0
    %1946 = vmatprep.mubr.f32.mxu0 0.0
    %1947 = vmatmul.mubr.f32.gmra.mxu0 %v1847
    %v1948 = vpop.f32.mrf.mxu0
    %v1949 = vadd.f32 0.0, %v1948
    %v1950 = vpop.f32.mrf.mxu0
    %1951 = vmatprep.mubr.f32.mxu0 0.0
    %1952 = vmatmul.mubr.f32.gmra.mxu0 %v1852
    %v1953 = vpop.f32.mrf.mxu0
    %v1954 = vadd.f32 0.0, %v1953
    %v1955 = vpop.f32.mrf.mxu0
    %1956 = vmatprep.mubr.f32.mxu0 0.0
    %1957 = vmatmul.mubr.f32.gmra.mxu0 %v1857
    %v1958 = vpop.f32.mrf.mxu0
    %v1959 = vadd.f32 0.0, %v1958
    %v1960 = vpop.f32.mrf.mxu0
    %1961 = vmatprep.mubr.f32.mxu0 0.0
    %1962 = vmatmul.mubr.f32.gmra.mxu0 %v1862
    %v1963 = vpop.f32.mrf.mxu0
    %v1964 = vadd.f32 0.0, %v1963
    %v1965 = vpop.f32.mrf.mxu0
    %1966 = vdwg.mxu0
    %v1967 = vadd.f32 %v1771, %v1949
    %v1968 = vadd.f32 %v1772, %v1954
    %v1969 = vadd.f32 %v1773, %v1959
    %v1970 = vadd.f32 %v1774, %v1964
    %v1971 = vmax.f32 %v1967, 0.0
    %v1972 = vmax.f32 %v1968, 0.0
    %v1973 = vmax.f32 %v1969, 0.0
    %v1974 = vmax.f32 %v1970, 0.0
    %v1975 = vld [vmem:[%s4] sm:$0x3]
    %vm1976 = vcmask 261120
    %v1978 = vsel %vm1976, %v1975, 0
    %1980 = vmatprep.subr.mxu0 0.0
    %1981 = vmatpush1.msra.mxu0 0.0
    %1982 = vmatprep.subr.mxu0 0.0
    %1983 = vmatpush1.msra.mxu0 0.0
    %1984 = vmatprep.subr.mxu0 0.0
    %1985 = vmatpush1.msra.mxu0 0.0
    %1986 = vmatprep.subr.mxu0 0.0
    %1987 = vmatpush1.msra.mxu0 0.0
    %1988 = vmatprep.subr.mxu0 0.0
    %1989 = vmatpush1.msra.mxu0 0.0
    %1990 = vmatprep.subr.mxu0 0.0
    %1991 = vmatpush1.msra.mxu0 0.0
    %1992 = vmatprep.subr.mxu0 0.0
    %1993 = vmatpush1.msra.mxu0 0.0
    %1994 = vmatprep.subr.mxu0 0.0
    %1995 = vmatpush1.msra.mxu0 0.0
    %1996 = vmatprep.subr.mxu0 0.0
    %1997 = vmatpush1.msra.mxu0 0.0
    %1998 = vmatprep.subr.mxu0 0.0
    %1999 = vmatpush1.msra.mxu0 0.0
    %2000 = vmatprep.subr.mxu0 0.0
    %2001 = vmatpush1.msra.mxu0 0.0
    %2002 = vmatprep.subr.mxu0 0.0
    %2003 = vmatpush1.msra.mxu0 0.0
    %2004 = vmatprep.subr.mxu0 0.0
    %2005 = vmatpush1.msra.mxu0 %v1974
    %2006 = vmatprep.subr.mxu0 0.0
    %2007 = vmatpush1.msra.mxu0 %v1973
    %2008 = vmatprep.subr.mxu0 0.0
    %2009 = vmatpush1.msra.mxu0 %v1972
    %2010 = vmatprep.subr.mxu0 0.0
    %2011 = vmatpush1.msra.mxu0 %v1971
    %2012 = vmatprep.subr.mxu0 0.0
    %2013 = vmatpush2.msra.mxu0 0.0
    %2014 = vmatprep.subr.mxu0 0.0
    %2015 = vmatpush2.msra.mxu0 0.0
    %2016 = vmatprep.subr.mxu0 0.0
    %2017 = vmatpush2.msra.mxu0 0.0
    %2018 = vmatprep.subr.mxu0 0.0
    %2019 = vmatpush2.msra.mxu0 0.0
    %2020 = vmatprep.subr.mxu0 0.0
    %2021 = vmatpush2.msra.mxu0 0.0
    %2022 = vmatprep.subr.mxu0 0.0
    %2023 = vmatpush2.msra.mxu0 0.0
    %2024 = vmatprep.subr.mxu0 0.0
    %2025 = vmatpush2.msra.mxu0 0.0
    %2026 = vmatprep.subr.mxu0 0.0
    %2027 = vmatpush2.msra.mxu0 0.0
    %2028 = vmatprep.subr.mxu0 0.0
    %2029 = vmatpush2.msra.mxu0 0.0
    %2030 = vmatprep.subr.mxu0 0.0
    %2031 = vmatpush2.msra.mxu0 0.0
    %2032 = vmatprep.subr.mxu0 0.0
    %2033 = vmatpush2.msra.mxu0 0.0
    %2034 = vmatprep.subr.mxu0 0.0
    %2035 = vmatpush2.msra.mxu0 0.0
    %2036 = vmatprep.subr.mxu0 0.0
    %2037 = vmatpush2.msra.mxu0 0.0
    %2038 = vmatprep.subr.mxu0 0.0
    %2039 = vmatpush2.msra.mxu0 0.0
    %2040 = vmatprep.subr.mxu0 0.0
    %2041 = vmatpush2.msra.mxu0 0.0
    %2042 = vmatprep.subr.mxu0 0.0
    %2043 = vmatpush2.msra.mxu0 0.0
    %2044 = vmatprep.mubr.f32.mxu0 0.0
    %2045 = vmatmul.mubr.f32.gmra.mxu0 %v1978
    %v2046 = vpop.f32.mrf.mxu0
    %v2047 = vadd.f32 0.0, %v2046
    %v2048 = vpop.f32.mrf.mxu0
    %2049 = vdwg.mxu0
    %v2050 = vld [vmem:[%s5] sm:$0xff]
    %v2051 = vld [vmem:[%s5 + $0x8] sm:$0xff]
    %v2052 = vld [vmem:[%s5 + $0x10] sm:$0xff]
    %v2053 = vld [vmem:[%s5 + $0x18] sm:$0xff]
    %v2054 = vld [vmem:[%s5 + $0x20] sm:$0xff]
    %v2055 = vld [vmem:[%s5 + $0x28] sm:$0xff]
    %v2056 = vld [vmem:[%s5 + $0x30] sm:$0xff]
    %v2057 = vld [vmem:[%s5 + $0x38] sm:$0xff]
    %v2058 = vld [vmem:[%s5 + $0x40] sm:$0xff]
    %v2059 = vld [vmem:[%s5 + $0x48] sm:$0xff]
    %v2060 = vld [vmem:[%s5 + $0x50] sm:$0xff]
    %v2061 = vld [vmem:[%s5 + $0x58] sm:$0xff]
    %v2062 = vld [vmem:[%s5 + $0x60] sm:$0xff]
    %v2063 = vld [vmem:[%s5 + $0x68] sm:$0xff]
    %v2064 = vld [vmem:[%s5 + $0x70] sm:$0xff]
    %v2065 = vld [vmem:[%s5 + $0x78] sm:$0xff]
    %s2066 = scalar_lea.vmem %s4, 2
    %v2067 = vld [vmem:[%s2066] sm:$0x3]
    %v2069 = vsel %vm1976, %v2067, 0
    %2071 = vmatprep.subr.mxu0 0.0
    %2072 = vmatpush1.msra.mxu0 0.0
    %2073 = vmatprep.subr.mxu0 0.0
    %2074 = vmatpush1.msra.mxu0 0.0
    %2075 = vmatprep.subr.mxu0 0.0
    %2076 = vmatpush1.msra.mxu0 0.0
    %2077 = vmatprep.subr.mxu0 0.0
    %2078 = vmatpush1.msra.mxu0 0.0
    %2079 = vmatprep.subr.mxu0 0.0
    %2080 = vmatpush1.msra.mxu0 0.0
    %2081 = vmatprep.subr.mxu0 0.0
    %2082 = vmatpush1.msra.mxu0 0.0
    %2083 = vmatprep.subr.mxu0 0.0
    %2084 = vmatpush1.msra.mxu0 0.0
    %2085 = vmatprep.subr.mxu0 0.0
    %2086 = vmatpush1.msra.mxu0 0.0
    %2087 = vmatprep.subr.mxu0 0.0
    %2088 = vmatpush1.msra.mxu0 0.0
    %2089 = vmatprep.subr.mxu0 0.0
    %2090 = vmatpush1.msra.mxu0 0.0
    %2091 = vmatprep.subr.mxu0 0.0
    %2092 = vmatpush1.msra.mxu0 0.0
    %2093 = vmatprep.subr.mxu0 0.0
    %2094 = vmatpush1.msra.mxu0 0.0
    %2095 = vmatprep.subr.mxu0 0.0
    %2096 = vmatpush1.msra.mxu0 %v1974
    %2097 = vmatprep.subr.mxu0 0.0
    %2098 = vmatpush1.msra.mxu0 %v1973
    %2099 = vmatprep.subr.mxu0 0.0
    %2100 = vmatpush1.msra.mxu0 %v1972
    %2101 = vmatprep.subr.mxu0 0.0
    %2102 = vmatpush1.msra.mxu0 %v1971
    %2103 = vmatprep.subr.mxu0 0.0
    %2104 = vmatpush2.msra.mxu0 0.0
    %2105 = vmatprep.subr.mxu0 0.0
    %2106 = vmatpush2.msra.mxu0 0.0
    %2107 = vmatprep.subr.mxu0 0.0
    %2108 = vmatpush2.msra.mxu0 0.0
    %2109 = vmatprep.subr.mxu0 0.0
    %2110 = vmatpush2.msra.mxu0 0.0
    %2111 = vmatprep.subr.mxu0 0.0
    %2112 = vmatpush2.msra.mxu0 0.0
    %2113 = vmatprep.subr.mxu0 0.0
    %2114 = vmatpush2.msra.mxu0 0.0
    %2115 = vmatprep.subr.mxu0 0.0
    %2116 = vmatpush2.msra.mxu0 0.0
    %2117 = vmatprep.subr.mxu0 0.0
    %2118 = vmatpush2.msra.mxu0 0.0
    %2119 = vmatprep.subr.mxu0 0.0
    %2120 = vmatpush2.msra.mxu0 0.0
    %2121 = vmatprep.subr.mxu0 0.0
    %2122 = vmatpush2.msra.mxu0 0.0
    %2123 = vmatprep.subr.mxu0 0.0
    %2124 = vmatpush2.msra.mxu0 0.0
    %2125 = vmatprep.subr.mxu0 0.0
    %2126 = vmatpush2.msra.mxu0 0.0
    %2127 = vmatprep.subr.mxu0 0.0
    %2128 = vmatpush2.msra.mxu0 0.0
    %2129 = vmatprep.subr.mxu0 0.0
    %2130 = vmatpush2.msra.mxu0 0.0
    %2131 = vmatprep.subr.mxu0 0.0
    %2132 = vmatpush2.msra.mxu0 0.0
    %2133 = vmatprep.subr.mxu0 0.0
    %2134 = vmatpush2.msra.mxu0 0.0
    %2135 = vmatprep.mubr.f32.mxu0 0.0
    %2136 = vmatmul.mubr.f32.gmra.mxu0 %v2069
    %v2137 = vpop.f32.mrf.mxu0
    %v2138 = vadd.f32 0.0, %v2137
    %v2139 = vpop.f32.mrf.mxu0
    %2140 = vdwg.mxu0
    %s2141 = scalar_lea.vmem %s5, 128
    %v2142 = vld [vmem:[%s2141] sm:$0xff]
    %v2143 = vld [vmem:[%s2141 + $0x8] sm:$0xff]
    %v2144 = vld [vmem:[%s2141 + $0x10] sm:$0xff]
    %v2145 = vld [vmem:[%s2141 + $0x18] sm:$0xff]
    %v2146 = vld [vmem:[%s2141 + $0x20] sm:$0xff]
    %v2147 = vld [vmem:[%s2141 + $0x28] sm:$0xff]
    %v2148 = vld [vmem:[%s2141 + $0x30] sm:$0xff]
    %v2149 = vld [vmem:[%s2141 + $0x38] sm:$0xff]
    %v2150 = vld [vmem:[%s2141 + $0x40] sm:$0xff]
    %v2151 = vld [vmem:[%s2141 + $0x48] sm:$0xff]
    %v2152 = vld [vmem:[%s2141 + $0x50] sm:$0xff]
    %v2153 = vld [vmem:[%s2141 + $0x58] sm:$0xff]
    %v2154 = vld [vmem:[%s2141 + $0x60] sm:$0xff]
    %v2155 = vld [vmem:[%s2141 + $0x68] sm:$0xff]
    %v2156 = vld [vmem:[%s2141 + $0x70] sm:$0xff]
    %v2157 = vld [vmem:[%s2141 + $0x78] sm:$0xff]
    %2158 = vmatprep.subr.mxu0 0.0
    %2159 = vmatpush1.msra.mxu0 %v2157
    %2160 = vmatprep.subr.mxu0 0.0
    %2161 = vmatpush1.msra.mxu0 %v2156
    %2162 = vmatprep.subr.mxu0 0.0
    %2163 = vmatpush1.msra.mxu0 %v2155
    %2164 = vmatprep.subr.mxu0 0.0
    %2165 = vmatpush1.msra.mxu0 %v2154
    %2166 = vmatprep.subr.mxu0 0.0
    %2167 = vmatpush1.msra.mxu0 %v2153
    %2168 = vmatprep.subr.mxu0 0.0
    %2169 = vmatpush1.msra.mxu0 %v2152
    %2170 = vmatprep.subr.mxu0 0.0
    %2171 = vmatpush1.msra.mxu0 %v2151
    %2172 = vmatprep.subr.mxu0 0.0
    %2173 = vmatpush1.msra.mxu0 %v2150
    %2174 = vmatprep.subr.mxu0 0.0
    %2175 = vmatpush1.msra.mxu0 %v2149
    %2176 = vmatprep.subr.mxu0 0.0
    %2177 = vmatpush1.msra.mxu0 %v2148
    %2178 = vmatprep.subr.mxu0 0.0
    %2179 = vmatpush1.msra.mxu0 %v2147
    %2180 = vmatprep.subr.mxu0 0.0
    %2181 = vmatpush1.msra.mxu0 %v2146
    %2182 = vmatprep.subr.mxu0 0.0
    %2183 = vmatpush1.msra.mxu0 %v2145
    %2184 = vmatprep.subr.mxu0 0.0
    %2185 = vmatpush1.msra.mxu0 %v2144
    %2186 = vmatprep.subr.mxu0 0.0
    %2187 = vmatpush1.msra.mxu0 %v2143
    %2188 = vmatprep.subr.mxu0 0.0
    %2189 = vmatpush1.msra.mxu0 %v2142
    %2190 = vmatprep.subr.mxu0 0.0
    %2191 = vmatpush2.msra.mxu0 0.0
    %2192 = vmatprep.subr.mxu0 0.0
    %2193 = vmatpush2.msra.mxu0 0.0
    %2194 = vmatprep.subr.mxu0 0.0
    %2195 = vmatpush2.msra.mxu0 0.0
    %2196 = vmatprep.subr.mxu0 0.0
    %2197 = vmatpush2.msra.mxu0 0.0
    %2198 = vmatprep.subr.mxu0 0.0
    %2199 = vmatpush2.msra.mxu0 0.0
    %2200 = vmatprep.subr.mxu0 0.0
    %2201 = vmatpush2.msra.mxu0 0.0
    %2202 = vmatprep.subr.mxu0 0.0
    %2203 = vmatpush2.msra.mxu0 0.0
    %2204 = vmatprep.subr.mxu0 0.0
    %2205 = vmatpush2.msra.mxu0 0.0
    %2206 = vmatprep.subr.mxu0 0.0
    %2207 = vmatpush2.msra.mxu0 0.0
    %2208 = vmatprep.subr.mxu0 0.0
    %2209 = vmatpush2.msra.mxu0 0.0
    %2210 = vmatprep.subr.mxu0 0.0
    %2211 = vmatpush2.msra.mxu0 0.0
    %2212 = vmatprep.subr.mxu0 0.0
    %2213 = vmatpush2.msra.mxu0 0.0
    %2214 = vmatprep.subr.mxu0 0.0
    %2215 = vmatpush2.msra.mxu0 0.0
    %2216 = vmatprep.subr.mxu0 0.0
    %2217 = vmatpush2.msra.mxu0 0.0
    %2218 = vmatprep.subr.mxu0 0.0
    %2219 = vmatpush2.msra.mxu0 0.0
    %2220 = vmatprep.subr.mxu0 0.0
    %2221 = vmatpush2.msra.mxu0 0.0
    %2222 = vmatprep.mubr.f32.mxu0 0.0
    %2223 = vmatmul.mubr.f32.gmra.mxu0 %v2138
    %v2224 = vpop.f32.mrf.mxu0
    %v2225 = vadd.f32 0.0, %v2224
    %v2226 = vpop.f32.mrf.mxu0
    %2227 = vdwg.mxu0
    %2228 = vmatprep.subr.mxu0 0.0
    %2229 = vmatpush1.msra.mxu0 %v2065
    %2230 = vmatprep.subr.mxu0 0.0
    %2231 = vmatpush1.msra.mxu0 %v2064
    %2232 = vmatprep.subr.mxu0 0.0
    %2233 = vmatpush1.msra.mxu0 %v2063
    %2234 = vmatprep.subr.mxu0 0.0
    %2235 = vmatpush1.msra.mxu0 %v2062
    %2236 = vmatprep.subr.mxu0 0.0
    %2237 = vmatpush1.msra.mxu0 %v2061
    %2238 = vmatprep.subr.mxu0 0.0
    %2239 = vmatpush1.msra.mxu0 %v2060
    %2240 = vmatprep.subr.mxu0 0.0
    %2241 = vmatpush1.msra.mxu0 %v2059
    %2242 = vmatprep.subr.mxu0 0.0
    %2243 = vmatpush1.msra.mxu0 %v2058
    %2244 = vmatprep.subr.mxu0 0.0
    %2245 = vmatpush1.msra.mxu0 %v2057
    %2246 = vmatprep.subr.mxu0 0.0
    %2247 = vmatpush1.msra.mxu0 %v2056
    %2248 = vmatprep.subr.mxu0 0.0
    %2249 = vmatpush1.msra.mxu0 %v2055
    %2250 = vmatprep.subr.mxu0 0.0
    %2251 = vmatpush1.msra.mxu0 %v2054
    %2252 = vmatprep.subr.mxu0 0.0
    %2253 = vmatpush1.msra.mxu0 %v2053
    %2254 = vmatprep.subr.mxu0 0.0
    %2255 = vmatpush1.msra.mxu0 %v2052
    %2256 = vmatprep.subr.mxu0 0.0
    %2257 = vmatpush1.msra.mxu0 %v2051
    %2258 = vmatprep.subr.mxu0 0.0
    %2259 = vmatpush1.msra.mxu0 %v2050
    %2260 = vmatprep.subr.mxu0 0.0
    %2261 = vmatpush2.msra.mxu0 0.0
    %2262 = vmatprep.subr.mxu0 0.0
    %2263 = vmatpush2.msra.mxu0 0.0
    %2264 = vmatprep.subr.mxu0 0.0
    %2265 = vmatpush2.msra.mxu0 0.0
    %2266 = vmatprep.subr.mxu0 0.0
    %2267 = vmatpush2.msra.mxu0 0.0
    %2268 = vmatprep.subr.mxu0 0.0
    %2269 = vmatpush2.msra.mxu0 0.0
    %2270 = vmatprep.subr.mxu0 0.0
    %2271 = vmatpush2.msra.mxu0 0.0
    %2272 = vmatprep.subr.mxu0 0.0
    %2273 = vmatpush2.msra.mxu0 0.0
    %2274 = vmatprep.subr.mxu0 0.0
    %2275 = vmatpush2.msra.mxu0 0.0
    %2276 = vmatprep.subr.mxu0 0.0
    %2277 = vmatpush2.msra.mxu0 0.0
    %2278 = vmatprep.subr.mxu0 0.0
    %2279 = vmatpush2.msra.mxu0 0.0
    %2280 = vmatprep.subr.mxu0 0.0
    %2281 = vmatpush2.msra.mxu0 0.0
    %2282 = vmatprep.subr.mxu0 0.0
    %2283 = vmatpush2.msra.mxu0 0.0
    %2284 = vmatprep.subr.mxu0 0.0
    %2285 = vmatpush2.msra.mxu0 0.0
    %2286 = vmatprep.subr.mxu0 0.0
    %2287 = vmatpush2.msra.mxu0 0.0
    %2288 = vmatprep.subr.mxu0 0.0
    %2289 = vmatpush2.msra.mxu0 0.0
    %2290 = vmatprep.subr.mxu0 0.0
    %2291 = vmatpush2.msra.mxu0 0.0
    %2292 = vmatprep.mubr.f32.mxu0 0.0
    %2293 = vmatmul.mubr.f32.gmra.mxu0 %v2047
    %v2294 = vpop.f32.mrf.mxu0
    %v2295 = vadd.f32 %v2225, %v2294
    %v2296 = vpop.f32.mrf.mxu0
    %2297 = vdwg.mxu0
    %s2298 = scalar_lea.vmem %s4, 4
    %v2299 = vld [vmem:[%s2298] sm:$0x3]
    %v2301 = vsel %vm1976, %v2299, 0
    %2303 = vmatprep.subr.mxu0 0.0
    %2304 = vmatpush1.msra.mxu0 0.0
    %2305 = vmatprep.subr.mxu0 0.0
    %2306 = vmatpush1.msra.mxu0 0.0
    %2307 = vmatprep.subr.mxu0 0.0
    %2308 = vmatpush1.msra.mxu0 0.0
    %2309 = vmatprep.subr.mxu0 0.0
    %2310 = vmatpush1.msra.mxu0 0.0
    %2311 = vmatprep.subr.mxu0 0.0
    %2312 = vmatpush1.msra.mxu0 0.0
    %2313 = vmatprep.subr.mxu0 0.0
    %2314 = vmatpush1.msra.mxu0 0.0
    %2315 = vmatprep.subr.mxu0 0.0
    %2316 = vmatpush1.msra.mxu0 0.0
    %2317 = vmatprep.subr.mxu0 0.0
    %2318 = vmatpush1.msra.mxu0 0.0
    %2319 = vmatprep.subr.mxu0 0.0
    %2320 = vmatpush1.msra.mxu0 0.0
    %2321 = vmatprep.subr.mxu0 0.0
    %2322 = vmatpush1.msra.mxu0 0.0
    %2323 = vmatprep.subr.mxu0 0.0
    %2324 = vmatpush1.msra.mxu0 0.0
    %2325 = vmatprep.subr.mxu0 0.0
    %2326 = vmatpush1.msra.mxu0 0.0
    %2327 = vmatprep.subr.mxu0 0.0
    %2328 = vmatpush1.msra.mxu0 %v1974
    %2329 = vmatprep.subr.mxu0 0.0
    %2330 = vmatpush1.msra.mxu0 %v1973
    %2331 = vmatprep.subr.mxu0 0.0
    %2332 = vmatpush1.msra.mxu0 %v1972
    %2333 = vmatprep.subr.mxu0 0.0
    %2334 = vmatpush1.msra.mxu0 %v1971
    %2335 = vmatprep.subr.mxu0 0.0
    %2336 = vmatpush2.msra.mxu0 0.0
    %2337 = vmatprep.subr.mxu0 0.0
    %2338 = vmatpush2.msra.mxu0 0.0
    %2339 = vmatprep.subr.mxu0 0.0
    %2340 = vmatpush2.msra.mxu0 0.0
    %2341 = vmatprep.subr.mxu0 0.0
    %2342 = vmatpush2.msra.mxu0 0.0
    %2343 = vmatprep.subr.mxu0 0.0
    %2344 = vmatpush2.msra.mxu0 0.0
    %2345 = vmatprep.subr.mxu0 0.0
    %2346 = vmatpush2.msra.mxu0 0.0
    %2347 = vmatprep.subr.mxu0 0.0
    %2348 = vmatpush2.msra.mxu0 0.0
    %2349 = vmatprep.subr.mxu0 0.0
    %2350 = vmatpush2.msra.mxu0 0.0
    %2351 = vmatprep.subr.mxu0 0.0
    %2352 = vmatpush2.msra.mxu0 0.0
    %2353 = vmatprep.subr.mxu0 0.0
    %2354 = vmatpush2.msra.mxu0 0.0
    %2355 = vmatprep.subr.mxu0 0.0
    %2356 = vmatpush2.msra.mxu0 0.0
    %2357 = vmatprep.subr.mxu0 0.0
    %2358 = vmatpush2.msra.mxu0 0.0
    %2359 = vmatprep.subr.mxu0 0.0
    %2360 = vmatpush2.msra.mxu0 0.0
    %2361 = vmatprep.subr.mxu0 0.0
    %2362 = vmatpush2.msra.mxu0 0.0
    %2363 = vmatprep.subr.mxu0 0.0
    %2364 = vmatpush2.msra.mxu0 0.0
    %2365 = vmatprep.subr.mxu0 0.0
    %2366 = vmatpush2.msra.mxu0 0.0
    %2367 = vmatprep.mubr.f32.mxu0 0.0
    %2368 = vmatmul.mubr.f32.gmra.mxu0 %v2301
    %v2369 = vpop.f32.mrf.mxu0
    %v2370 = vadd.f32 0.0, %v2369
    %v2371 = vpop.f32.mrf.mxu0
    %2372 = vdwg.mxu0
    %s2373 = scalar_lea.vmem %s5, 256
    %v2374 = vld [vmem:[%s2373] sm:$0xff]
    %v2375 = vld [vmem:[%s2373 + $0x8] sm:$0xff]
    %v2376 = vld [vmem:[%s2373 + $0x10] sm:$0xff]
    %v2377 = vld [vmem:[%s2373 + $0x18] sm:$0xff]
    %v2378 = vld [vmem:[%s2373 + $0x20] sm:$0xff]
    %v2379 = vld [vmem:[%s2373 + $0x28] sm:$0xff]
    %v2380 = vld [vmem:[%s2373 + $0x30] sm:$0xff]
    %v2381 = vld [vmem:[%s2373 + $0x38] sm:$0xff]
    %v2382 = vld [vmem:[%s2373 + $0x40] sm:$0xff]
    %v2383 = vld [vmem:[%s2373 + $0x48] sm:$0xff]
    %v2384 = vld [vmem:[%s2373 + $0x50] sm:$0xff]
    %v2385 = vld [vmem:[%s2373 + $0x58] sm:$0xff]
    %v2386 = vld [vmem:[%s2373 + $0x60] sm:$0xff]
    %v2387 = vld [vmem:[%s2373 + $0x68] sm:$0xff]
    %v2388 = vld [vmem:[%s2373 + $0x70] sm:$0xff]
    %v2389 = vld [vmem:[%s2373 + $0x78] sm:$0xff]
    %2390 = vmatprep.subr.mxu0 0.0
    %2391 = vmatpush1.msra.mxu0 %v2389
    %2392 = vmatprep.subr.mxu0 0.0
    %2393 = vmatpush1.msra.mxu0 %v2388
    %2394 = vmatprep.subr.mxu0 0.0
    %2395 = vmatpush1.msra.mxu0 %v2387
    %2396 = vmatprep.subr.mxu0 0.0
    %2397 = vmatpush1.msra.mxu0 %v2386
    %2398 = vmatprep.subr.mxu0 0.0
    %2399 = vmatpush1.msra.mxu0 %v2385
    %2400 = vmatprep.subr.mxu0 0.0
    %2401 = vmatpush1.msra.mxu0 %v2384
    %2402 = vmatprep.subr.mxu0 0.0
    %2403 = vmatpush1.msra.mxu0 %v2383
    %2404 = vmatprep.subr.mxu0 0.0
    %2405 = vmatpush1.msra.mxu0 %v2382
    %2406 = vmatprep.subr.mxu0 0.0
    %2407 = vmatpush1.msra.mxu0 %v2381
    %2408 = vmatprep.subr.mxu0 0.0
    %2409 = vmatpush1.msra.mxu0 %v2380
    %2410 = vmatprep.subr.mxu0 0.0
    %2411 = vmatpush1.msra.mxu0 %v2379
    %2412 = vmatprep.subr.mxu0 0.0
    %2413 = vmatpush1.msra.mxu0 %v2378
    %2414 = vmatprep.subr.mxu0 0.0
    %2415 = vmatpush1.msra.mxu0 %v2377
    %2416 = vmatprep.subr.mxu0 0.0
    %2417 = vmatpush1.msra.mxu0 %v2376
    %2418 = vmatprep.subr.mxu0 0.0
    %2419 = vmatpush1.msra.mxu0 %v2375
    %2420 = vmatprep.subr.mxu0 0.0
    %2421 = vmatpush1.msra.mxu0 %v2374
    %2422 = vmatprep.subr.mxu0 0.0
    %2423 = vmatpush2.msra.mxu0 0.0
    %2424 = vmatprep.subr.mxu0 0.0
    %2425 = vmatpush2.msra.mxu0 0.0
    %2426 = vmatprep.subr.mxu0 0.0
    %2427 = vmatpush2.msra.mxu0 0.0
    %2428 = vmatprep.subr.mxu0 0.0
    %2429 = vmatpush2.msra.mxu0 0.0
    %2430 = vmatprep.subr.mxu0 0.0
    %2431 = vmatpush2.msra.mxu0 0.0
    %2432 = vmatprep.subr.mxu0 0.0
    %2433 = vmatpush2.msra.mxu0 0.0
    %2434 = vmatprep.subr.mxu0 0.0
    %2435 = vmatpush2.msra.mxu0 0.0
    %2436 = vmatprep.subr.mxu0 0.0
    %2437 = vmatpush2.msra.mxu0 0.0
    %2438 = vmatprep.subr.mxu0 0.0
    %2439 = vmatpush2.msra.mxu0 0.0
    %2440 = vmatprep.subr.mxu0 0.0
    %2441 = vmatpush2.msra.mxu0 0.0
    %2442 = vmatprep.subr.mxu0 0.0
    %2443 = vmatpush2.msra.mxu0 0.0
    %2444 = vmatprep.subr.mxu0 0.0
    %2445 = vmatpush2.msra.mxu0 0.0
    %2446 = vmatprep.subr.mxu0 0.0
    %2447 = vmatpush2.msra.mxu0 0.0
    %2448 = vmatprep.subr.mxu0 0.0
    %2449 = vmatpush2.msra.mxu0 0.0
    %2450 = vmatprep.subr.mxu0 0.0
    %2451 = vmatpush2.msra.mxu0 0.0
    %2452 = vmatprep.subr.mxu0 0.0
    %2453 = vmatpush2.msra.mxu0 0.0
    %2454 = vmatprep.mubr.f32.mxu0 0.0
    %2455 = vmatmul.mubr.f32.gmra.mxu0 %v2370
    %v2456 = vpop.f32.mrf.mxu0
    %v2457 = vadd.f32 0.0, %v2456
    %v2458 = vpop.f32.mrf.mxu0
    %2459 = vdwg.mxu0
    %v2460 = vadd.f32 %v2295, %v2457
    %s2461 = scalar_lea.vmem %s4, 6
    %v2462 = vld [vmem:[%s2461] sm:$0x3]
    %v2464 = vsel %vm1976, %v2462, 0
    %2466 = vmatprep.subr.mxu0 0.0
    %2467 = vmatpush1.msra.mxu0 0.0
    %2468 = vmatprep.subr.mxu0 0.0
    %2469 = vmatpush1.msra.mxu0 0.0
    %2470 = vmatprep.subr.mxu0 0.0
    %2471 = vmatpush1.msra.mxu0 0.0
    %2472 = vmatprep.subr.mxu0 0.0
    %2473 = vmatpush1.msra.mxu0 0.0
    %2474 = vmatprep.subr.mxu0 0.0
    %2475 = vmatpush1.msra.mxu0 0.0
    %2476 = vmatprep.subr.mxu0 0.0
    %2477 = vmatpush1.msra.mxu0 0.0
    %2478 = vmatprep.subr.mxu0 0.0
    %2479 = vmatpush1.msra.mxu0 0.0
    %2480 = vmatprep.subr.mxu0 0.0
    %2481 = vmatpush1.msra.mxu0 0.0
    %2482 = vmatprep.subr.mxu0 0.0
    %2483 = vmatpush1.msra.mxu0 0.0
    %2484 = vmatprep.subr.mxu0 0.0
    %2485 = vmatpush1.msra.mxu0 0.0
    %2486 = vmatprep.subr.mxu0 0.0
    %2487 = vmatpush1.msra.mxu0 0.0
    %2488 = vmatprep.subr.mxu0 0.0
    %2489 = vmatpush1.msra.mxu0 0.0
    %2490 = vmatprep.subr.mxu0 0.0
    %2491 = vmatpush1.msra.mxu0 %v1974
    %2492 = vmatprep.subr.mxu0 0.0
    %2493 = vmatpush1.msra.mxu0 %v1973
    %2494 = vmatprep.subr.mxu0 0.0
    %2495 = vmatpush1.msra.mxu0 %v1972
    %2496 = vmatprep.subr.mxu0 0.0
    %2497 = vmatpush1.msra.mxu0 %v1971
    %2498 = vmatprep.subr.mxu0 0.0
    %2499 = vmatpush2.msra.mxu0 0.0
    %2500 = vmatprep.subr.mxu0 0.0
    %2501 = vmatpush2.msra.mxu0 0.0
    %2502 = vmatprep.subr.mxu0 0.0
    %2503 = vmatpush2.msra.mxu0 0.0
    %2504 = vmatprep.subr.mxu0 0.0
    %2505 = vmatpush2.msra.mxu0 0.0
    %2506 = vmatprep.subr.mxu0 0.0
    %2507 = vmatpush2.msra.mxu0 0.0
    %2508 = vmatprep.subr.mxu0 0.0
    %2509 = vmatpush2.msra.mxu0 0.0
    %2510 = vmatprep.subr.mxu0 0.0
    %2511 = vmatpush2.msra.mxu0 0.0
    %2512 = vmatprep.subr.mxu0 0.0
    %2513 = vmatpush2.msra.mxu0 0.0
    %2514 = vmatprep.subr.mxu0 0.0
    %2515 = vmatpush2.msra.mxu0 0.0
    %2516 = vmatprep.subr.mxu0 0.0
    %2517 = vmatpush2.msra.mxu0 0.0
    %2518 = vmatprep.subr.mxu0 0.0
    %2519 = vmatpush2.msra.mxu0 0.0
    %2520 = vmatprep.subr.mxu0 0.0
    %2521 = vmatpush2.msra.mxu0 0.0
    %2522 = vmatprep.subr.mxu0 0.0
    %2523 = vmatpush2.msra.mxu0 0.0
    %2524 = vmatprep.subr.mxu0 0.0
    %2525 = vmatpush2.msra.mxu0 0.0
    %2526 = vmatprep.subr.mxu0 0.0
    %2527 = vmatpush2.msra.mxu0 0.0
    %2528 = vmatprep.subr.mxu0 0.0
    %2529 = vmatpush2.msra.mxu0 0.0
    %2530 = vmatprep.mubr.f32.mxu0 0.0
    %2531 = vmatmul.mubr.f32.gmra.mxu0 %v2464
    %v2532 = vpop.f32.mrf.mxu0
    %v2533 = vadd.f32 0.0, %v2532
    %v2534 = vpop.f32.mrf.mxu0
    %2535 = vdwg.mxu0
    %s2536 = scalar_lea.vmem %s5, 384
    %v2537 = vld [vmem:[%s2536] sm:$0xff]
    %v2538 = vld [vmem:[%s2536 + $0x8] sm:$0xff]
    %v2539 = vld [vmem:[%s2536 + $0x10] sm:$0xff]
    %v2540 = vld [vmem:[%s2536 + $0x18] sm:$0xff]
    %v2541 = vld [vmem:[%s2536 + $0x20] sm:$0xff]
    %v2542 = vld [vmem:[%s2536 + $0x28] sm:$0xff]
    %v2543 = vld [vmem:[%s2536 + $0x30] sm:$0xff]
    %v2544 = vld [vmem:[%s2536 + $0x38] sm:$0xff]
    %v2545 = vld [vmem:[%s2536 + $0x40] sm:$0xff]
    %v2546 = vld [vmem:[%s2536 + $0x48] sm:$0xff]
    %v2547 = vld [vmem:[%s2536 + $0x50] sm:$0xff]
    %v2548 = vld [vmem:[%s2536 + $0x58] sm:$0xff]
    %v2549 = vld [vmem:[%s2536 + $0x60] sm:$0xff]
    %v2550 = vld [vmem:[%s2536 + $0x68] sm:$0xff]
    %v2551 = vld [vmem:[%s2536 + $0x70] sm:$0xff]
    %v2552 = vld [vmem:[%s2536 + $0x78] sm:$0xff]
    %2553 = vmatprep.subr.mxu0 0.0
    %2554 = vmatpush1.msra.mxu0 %v2552
    %2555 = vmatprep.subr.mxu0 0.0
    %2556 = vmatpush1.msra.mxu0 %v2551
    %2557 = vmatprep.subr.mxu0 0.0
    %2558 = vmatpush1.msra.mxu0 %v2550
    %2559 = vmatprep.subr.mxu0 0.0
    %2560 = vmatpush1.msra.mxu0 %v2549
    %2561 = vmatprep.subr.mxu0 0.0
    %2562 = vmatpush1.msra.mxu0 %v2548
    %2563 = vmatprep.subr.mxu0 0.0
    %2564 = vmatpush1.msra.mxu0 %v2547
    %2565 = vmatprep.subr.mxu0 0.0
    %2566 = vmatpush1.msra.mxu0 %v2546
    %2567 = vmatprep.subr.mxu0 0.0
    %2568 = vmatpush1.msra.mxu0 %v2545
    %2569 = vmatprep.subr.mxu0 0.0
    %2570 = vmatpush1.msra.mxu0 %v2544
    %2571 = vmatprep.subr.mxu0 0.0
    %2572 = vmatpush1.msra.mxu0 %v2543
    %2573 = vmatprep.subr.mxu0 0.0
    %2574 = vmatpush1.msra.mxu0 %v2542
    %2575 = vmatprep.subr.mxu0 0.0
    %2576 = vmatpush1.msra.mxu0 %v2541
    %2577 = vmatprep.subr.mxu0 0.0
    %2578 = vmatpush1.msra.mxu0 %v2540
    %2579 = vmatprep.subr.mxu0 0.0
    %2580 = vmatpush1.msra.mxu0 %v2539
    %2581 = vmatprep.subr.mxu0 0.0
    %2582 = vmatpush1.msra.mxu0 %v2538
    %2583 = vmatprep.subr.mxu0 0.0
    %2584 = vmatpush1.msra.mxu0 %v2537
    %2585 = vmatprep.subr.mxu0 0.0
    %2586 = vmatpush2.msra.mxu0 0.0
    %2587 = vmatprep.subr.mxu0 0.0
    %2588 = vmatpush2.msra.mxu0 0.0
    %2589 = vmatprep.subr.mxu0 0.0
    %2590 = vmatpush2.msra.mxu0 0.0
    %2591 = vmatprep.subr.mxu0 0.0
    %2592 = vmatpush2.msra.mxu0 0.0
    %2593 = vmatprep.subr.mxu0 0.0
    %2594 = vmatpush2.msra.mxu0 0.0
    %2595 = vmatprep.subr.mxu0 0.0
    %2596 = vmatpush2.msra.mxu0 0.0
    %2597 = vmatprep.subr.mxu0 0.0
    %2598 = vmatpush2.msra.mxu0 0.0
    %2599 = vmatprep.subr.mxu0 0.0
    %2600 = vmatpush2.msra.mxu0 0.0
    %2601 = vmatprep.subr.mxu0 0.0
    %2602 = vmatpush2.msra.mxu0 0.0
    %2603 = vmatprep.subr.mxu0 0.0
    %2604 = vmatpush2.msra.mxu0 0.0
    %2605 = vmatprep.subr.mxu0 0.0
    %2606 = vmatpush2.msra.mxu0 0.0
    %2607 = vmatprep.subr.mxu0 0.0
    %2608 = vmatpush2.msra.mxu0 0.0
    %2609 = vmatprep.subr.mxu0 0.0
    %2610 = vmatpush2.msra.mxu0 0.0
    %2611 = vmatprep.subr.mxu0 0.0
    %2612 = vmatpush2.msra.mxu0 0.0
    %2613 = vmatprep.subr.mxu0 0.0
    %2614 = vmatpush2.msra.mxu0 0.0
    %2615 = vmatprep.subr.mxu0 0.0
    %2616 = vmatpush2.msra.mxu0 0.0
    %2617 = vmatprep.mubr.f32.mxu0 0.0
    %2618 = vmatmul.mubr.f32.gmra.mxu0 %v2533
    %v2619 = vpop.f32.mrf.mxu0
    %v2620 = vadd.f32 0.0, %v2619
    %v2621 = vpop.f32.mrf.mxu0
    %2622 = vdwg.mxu0
    %v2623 = vadd.f32 %v2460, %v2620
    %s2624 = scalar_lea.vmem %s4, 8
    %v2625 = vld [vmem:[%s2624] sm:$0x3]
    %v2627 = vsel %vm1976, %v2625, 0
    %2629 = vmatprep.subr.mxu0 0.0
    %2630 = vmatpush1.msra.mxu0 0.0
    %2631 = vmatprep.subr.mxu0 0.0
    %2632 = vmatpush1.msra.mxu0 0.0
    %2633 = vmatprep.subr.mxu0 0.0
    %2634 = vmatpush1.msra.mxu0 0.0
    %2635 = vmatprep.subr.mxu0 0.0
    %2636 = vmatpush1.msra.mxu0 0.0
    %2637 = vmatprep.subr.mxu0 0.0
    %2638 = vmatpush1.msra.mxu0 0.0
    %2639 = vmatprep.subr.mxu0 0.0
    %2640 = vmatpush1.msra.mxu0 0.0
    %2641 = vmatprep.subr.mxu0 0.0
    %2642 = vmatpush1.msra.mxu0 0.0
    %2643 = vmatprep.subr.mxu0 0.0
    %2644 = vmatpush1.msra.mxu0 0.0
    %2645 = vmatprep.subr.mxu0 0.0
    %2646 = vmatpush1.msra.mxu0 0.0
    %2647 = vmatprep.subr.mxu0 0.0
    %2648 = vmatpush1.msra.mxu0 0.0
    %2649 = vmatprep.subr.mxu0 0.0
    %2650 = vmatpush1.msra.mxu0 0.0
    %2651 = vmatprep.subr.mxu0 0.0
    %2652 = vmatpush1.msra.mxu0 0.0
    %2653 = vmatprep.subr.mxu0 0.0
    %2654 = vmatpush1.msra.mxu0 %v1974
    %2655 = vmatprep.subr.mxu0 0.0
    %2656 = vmatpush1.msra.mxu0 %v1973
    %2657 = vmatprep.subr.mxu0 0.0
    %2658 = vmatpush1.msra.mxu0 %v1972
    %2659 = vmatprep.subr.mxu0 0.0
    %2660 = vmatpush1.msra.mxu0 %v1971
    %2661 = vmatprep.subr.mxu0 0.0
    %2662 = vmatpush2.msra.mxu0 0.0
    %2663 = vmatprep.subr.mxu0 0.0
    %2664 = vmatpush2.msra.mxu0 0.0
    %2665 = vmatprep.subr.mxu0 0.0
    %2666 = vmatpush2.msra.mxu0 0.0
    %2667 = vmatprep.subr.mxu0 0.0
    %2668 = vmatpush2.msra.mxu0 0.0
    %2669 = vmatprep.subr.mxu0 0.0
    %2670 = vmatpush2.msra.mxu0 0.0
    %2671 = vmatprep.subr.mxu0 0.0
    %2672 = vmatpush2.msra.mxu0 0.0
    %2673 = vmatprep.subr.mxu0 0.0
    %2674 = vmatpush2.msra.mxu0 0.0
    %2675 = vmatprep.subr.mxu0 0.0
    %2676 = vmatpush2.msra.mxu0 0.0
    %2677 = vmatprep.subr.mxu0 0.0
    %2678 = vmatpush2.msra.mxu0 0.0
    %2679 = vmatprep.subr.mxu0 0.0
    %2680 = vmatpush2.msra.mxu0 0.0
    %2681 = vmatprep.subr.mxu0 0.0
    %2682 = vmatpush2.msra.mxu0 0.0
    %2683 = vmatprep.subr.mxu0 0.0
    %2684 = vmatpush2.msra.mxu0 0.0
    %2685 = vmatprep.subr.mxu0 0.0
    %2686 = vmatpush2.msra.mxu0 0.0
    %2687 = vmatprep.subr.mxu0 0.0
    %2688 = vmatpush2.msra.mxu0 0.0
    %2689 = vmatprep.subr.mxu0 0.0
    %2690 = vmatpush2.msra.mxu0 0.0
    %2691 = vmatprep.subr.mxu0 0.0
    %2692 = vmatpush2.msra.mxu0 0.0
    %2693 = vmatprep.mubr.f32.mxu0 0.0
    %2694 = vmatmul.mubr.f32.gmra.mxu0 %v2627
    %v2695 = vpop.f32.mrf.mxu0
    %v2696 = vadd.f32 0.0, %v2695
    %v2697 = vpop.f32.mrf.mxu0
    %2698 = vdwg.mxu0
    %s2699 = scalar_lea.vmem %s5, 512
    %v2700 = vld [vmem:[%s2699] sm:$0xff]
    %v2701 = vld [vmem:[%s2699 + $0x8] sm:$0xff]
    %v2702 = vld [vmem:[%s2699 + $0x10] sm:$0xff]
    %v2703 = vld [vmem:[%s2699 + $0x18] sm:$0xff]
    %v2704 = vld [vmem:[%s2699 + $0x20] sm:$0xff]
    %v2705 = vld [vmem:[%s2699 + $0x28] sm:$0xff]
    %v2706 = vld [vmem:[%s2699 + $0x30] sm:$0xff]
    %v2707 = vld [vmem:[%s2699 + $0x38] sm:$0xff]
    %v2708 = vld [vmem:[%s2699 + $0x40] sm:$0xff]
    %v2709 = vld [vmem:[%s2699 + $0x48] sm:$0xff]
    %v2710 = vld [vmem:[%s2699 + $0x50] sm:$0xff]
    %v2711 = vld [vmem:[%s2699 + $0x58] sm:$0xff]
    %v2712 = vld [vmem:[%s2699 + $0x60] sm:$0xff]
    %v2713 = vld [vmem:[%s2699 + $0x68] sm:$0xff]
    %v2714 = vld [vmem:[%s2699 + $0x70] sm:$0xff]
    %v2715 = vld [vmem:[%s2699 + $0x78] sm:$0xff]
    %2716 = vmatprep.subr.mxu0 0.0
    %2717 = vmatpush1.msra.mxu0 %v2715
    %2718 = vmatprep.subr.mxu0 0.0
    %2719 = vmatpush1.msra.mxu0 %v2714
    %2720 = vmatprep.subr.mxu0 0.0
    %2721 = vmatpush1.msra.mxu0 %v2713
    %2722 = vmatprep.subr.mxu0 0.0
    %2723 = vmatpush1.msra.mxu0 %v2712
    %2724 = vmatprep.subr.mxu0 0.0
    %2725 = vmatpush1.msra.mxu0 %v2711
    %2726 = vmatprep.subr.mxu0 0.0
    %2727 = vmatpush1.msra.mxu0 %v2710
    %2728 = vmatprep.subr.mxu0 0.0
    %2729 = vmatpush1.msra.mxu0 %v2709
    %2730 = vmatprep.subr.mxu0 0.0
    %2731 = vmatpush1.msra.mxu0 %v2708
    %2732 = vmatprep.subr.mxu0 0.0
    %2733 = vmatpush1.msra.mxu0 %v2707
    %2734 = vmatprep.subr.mxu0 0.0
    %2735 = vmatpush1.msra.mxu0 %v2706
    %2736 = vmatprep.subr.mxu0 0.0
    %2737 = vmatpush1.msra.mxu0 %v2705
    %2738 = vmatprep.subr.mxu0 0.0
    %2739 = vmatpush1.msra.mxu0 %v2704
    %2740 = vmatprep.subr.mxu0 0.0
    %2741 = vmatpush1.msra.mxu0 %v2703
    %2742 = vmatprep.subr.mxu0 0.0
    %2743 = vmatpush1.msra.mxu0 %v2702
    %2744 = vmatprep.subr.mxu0 0.0
    %2745 = vmatpush1.msra.mxu0 %v2701
    %2746 = vmatprep.subr.mxu0 0.0
    %2747 = vmatpush1.msra.mxu0 %v2700
    %2748 = vmatprep.subr.mxu0 0.0
    %2749 = vmatpush2.msra.mxu0 0.0
    %2750 = vmatprep.subr.mxu0 0.0
    %2751 = vmatpush2.msra.mxu0 0.0
    %2752 = vmatprep.subr.mxu0 0.0
    %2753 = vmatpush2.msra.mxu0 0.0
    %2754 = vmatprep.subr.mxu0 0.0
    %2755 = vmatpush2.msra.mxu0 0.0
    %2756 = vmatprep.subr.mxu0 0.0
    %2757 = vmatpush2.msra.mxu0 0.0
    %2758 = vmatprep.subr.mxu0 0.0
    %2759 = vmatpush2.msra.mxu0 0.0
    %2760 = vmatprep.subr.mxu0 0.0
    %2761 = vmatpush2.msra.mxu0 0.0
    %2762 = vmatprep.subr.mxu0 0.0
    %2763 = vmatpush2.msra.mxu0 0.0
    %2764 = vmatprep.subr.mxu0 0.0
    %2765 = vmatpush2.msra.mxu0 0.0
    %2766 = vmatprep.subr.mxu0 0.0
    %2767 = vmatpush2.msra.mxu0 0.0
    %2768 = vmatprep.subr.mxu0 0.0
    %2769 = vmatpush2.msra.mxu0 0.0
    %2770 = vmatprep.subr.mxu0 0.0
    %2771 = vmatpush2.msra.mxu0 0.0
    %2772 = vmatprep.subr.mxu0 0.0
    %2773 = vmatpush2.msra.mxu0 0.0
    %2774 = vmatprep.subr.mxu0 0.0
    %2775 = vmatpush2.msra.mxu0 0.0
    %2776 = vmatprep.subr.mxu0 0.0
    %2777 = vmatpush2.msra.mxu0 0.0
    %2778 = vmatprep.subr.mxu0 0.0
    %2779 = vmatpush2.msra.mxu0 0.0
    %2780 = vmatprep.mubr.f32.mxu0 0.0
    %2781 = vmatmul.mubr.f32.gmra.mxu0 %v2696
    %v2782 = vpop.f32.mrf.mxu0
    %v2783 = vadd.f32 0.0, %v2782
    %v2784 = vpop.f32.mrf.mxu0
    %2785 = vdwg.mxu0
    %v2786 = vadd.f32 %v2623, %v2783
    %s2787 = scalar_lea.vmem %s4, 10
    %v2788 = vld [vmem:[%s2787] sm:$0x3]
    %v2790 = vsel %vm1976, %v2788, 0
    %2792 = vmatprep.subr.mxu0 0.0
    %2793 = vmatpush1.msra.mxu0 0.0
    %2794 = vmatprep.subr.mxu0 0.0
    %2795 = vmatpush1.msra.mxu0 0.0
    %2796 = vmatprep.subr.mxu0 0.0
    %2797 = vmatpush1.msra.mxu0 0.0
    %2798 = vmatprep.subr.mxu0 0.0
    %2799 = vmatpush1.msra.mxu0 0.0
    %2800 = vmatprep.subr.mxu0 0.0
    %2801 = vmatpush1.msra.mxu0 0.0
    %2802 = vmatprep.subr.mxu0 0.0
    %2803 = vmatpush1.msra.mxu0 0.0
    %2804 = vmatprep.subr.mxu0 0.0
    %2805 = vmatpush1.msra.mxu0 0.0
    %2806 = vmatprep.subr.mxu0 0.0
    %2807 = vmatpush1.msra.mxu0 0.0
    %2808 = vmatprep.subr.mxu0 0.0
    %2809 = vmatpush1.msra.mxu0 0.0
    %2810 = vmatprep.subr.mxu0 0.0
    %2811 = vmatpush1.msra.mxu0 0.0
    %2812 = vmatprep.subr.mxu0 0.0
    %2813 = vmatpush1.msra.mxu0 0.0
    %2814 = vmatprep.subr.mxu0 0.0
    %2815 = vmatpush1.msra.mxu0 0.0
    %2816 = vmatprep.subr.mxu0 0.0
    %2817 = vmatpush1.msra.mxu0 %v1974
    %2818 = vmatprep.subr.mxu0 0.0
    %2819 = vmatpush1.msra.mxu0 %v1973
    %2820 = vmatprep.subr.mxu0 0.0
    %2821 = vmatpush1.msra.mxu0 %v1972
    %2822 = vmatprep.subr.mxu0 0.0
    %2823 = vmatpush1.msra.mxu0 %v1971
    %2824 = vmatprep.subr.mxu0 0.0
    %2825 = vmatpush2.msra.mxu0 0.0
    %2826 = vmatprep.subr.mxu0 0.0
    %2827 = vmatpush2.msra.mxu0 0.0
    %2828 = vmatprep.subr.mxu0 0.0
    %2829 = vmatpush2.msra.mxu0 0.0
    %2830 = vmatprep.subr.mxu0 0.0
    %2831 = vmatpush2.msra.mxu0 0.0
    %2832 = vmatprep.subr.mxu0 0.0
    %2833 = vmatpush2.msra.mxu0 0.0
    %2834 = vmatprep.subr.mxu0 0.0
    %2835 = vmatpush2.msra.mxu0 0.0
    %2836 = vmatprep.subr.mxu0 0.0
    %2837 = vmatpush2.msra.mxu0 0.0
    %2838 = vmatprep.subr.mxu0 0.0
    %2839 = vmatpush2.msra.mxu0 0.0
    %2840 = vmatprep.subr.mxu0 0.0
    %2841 = vmatpush2.msra.mxu0 0.0
    %2842 = vmatprep.subr.mxu0 0.0
    %2843 = vmatpush2.msra.mxu0 0.0
    %2844 = vmatprep.subr.mxu0 0.0
    %2845 = vmatpush2.msra.mxu0 0.0
    %2846 = vmatprep.subr.mxu0 0.0
    %2847 = vmatpush2.msra.mxu0 0.0
    %2848 = vmatprep.subr.mxu0 0.0
    %2849 = vmatpush2.msra.mxu0 0.0
    %2850 = vmatprep.subr.mxu0 0.0
    %2851 = vmatpush2.msra.mxu0 0.0
    %2852 = vmatprep.subr.mxu0 0.0
    %2853 = vmatpush2.msra.mxu0 0.0
    %2854 = vmatprep.subr.mxu0 0.0
    %2855 = vmatpush2.msra.mxu0 0.0
    %2856 = vmatprep.mubr.f32.mxu0 0.0
    %2857 = vmatmul.mubr.f32.gmra.mxu0 %v2790
    %v2858 = vpop.f32.mrf.mxu0
    %v2859 = vadd.f32 0.0, %v2858
    %v2860 = vpop.f32.mrf.mxu0
    %2861 = vdwg.mxu0
    %s2862 = scalar_lea.vmem %s5, 640
    %v2863 = vld [vmem:[%s2862] sm:$0xff]
    %v2864 = vld [vmem:[%s2862 + $0x8] sm:$0xff]
    %v2865 = vld [vmem:[%s2862 + $0x10] sm:$0xff]
    %v2866 = vld [vmem:[%s2862 + $0x18] sm:$0xff]
    %v2867 = vld [vmem:[%s2862 + $0x20] sm:$0xff]
    %v2868 = vld [vmem:[%s2862 + $0x28] sm:$0xff]
    %v2869 = vld [vmem:[%s2862 + $0x30] sm:$0xff]
    %v2870 = vld [vmem:[%s2862 + $0x38] sm:$0xff]
    %v2871 = vld [vmem:[%s2862 + $0x40] sm:$0xff]
    %v2872 = vld [vmem:[%s2862 + $0x48] sm:$0xff]
    %v2873 = vld [vmem:[%s2862 + $0x50] sm:$0xff]
    %v2874 = vld [vmem:[%s2862 + $0x58] sm:$0xff]
    %v2875 = vld [vmem:[%s2862 + $0x60] sm:$0xff]
    %v2876 = vld [vmem:[%s2862 + $0x68] sm:$0xff]
    %v2877 = vld [vmem:[%s2862 + $0x70] sm:$0xff]
    %v2878 = vld [vmem:[%s2862 + $0x78] sm:$0xff]
    %2879 = vmatprep.subr.mxu0 0.0
    %2880 = vmatpush1.msra.mxu0 %v2878
    %2881 = vmatprep.subr.mxu0 0.0
    %2882 = vmatpush1.msra.mxu0 %v2877
    %2883 = vmatprep.subr.mxu0 0.0
    %2884 = vmatpush1.msra.mxu0 %v2876
    %2885 = vmatprep.subr.mxu0 0.0
    %2886 = vmatpush1.msra.mxu0 %v2875
    %2887 = vmatprep.subr.mxu0 0.0
    %2888 = vmatpush1.msra.mxu0 %v2874
    %2889 = vmatprep.subr.mxu0 0.0
    %2890 = vmatpush1.msra.mxu0 %v2873
    %2891 = vmatprep.subr.mxu0 0.0
    %2892 = vmatpush1.msra.mxu0 %v2872
    %2893 = vmatprep.subr.mxu0 0.0
    %2894 = vmatpush1.msra.mxu0 %v2871
    %2895 = vmatprep.subr.mxu0 0.0
    %2896 = vmatpush1.msra.mxu0 %v2870
    %2897 = vmatprep.subr.mxu0 0.0
    %2898 = vmatpush1.msra.mxu0 %v2869
    %2899 = vmatprep.subr.mxu0 0.0
    %2900 = vmatpush1.msra.mxu0 %v2868
    %2901 = vmatprep.subr.mxu0 0.0
    %2902 = vmatpush1.msra.mxu0 %v2867
    %2903 = vmatprep.subr.mxu0 0.0
    %2904 = vmatpush1.msra.mxu0 %v2866
    %2905 = vmatprep.subr.mxu0 0.0
    %2906 = vmatpush1.msra.mxu0 %v2865
    %2907 = vmatprep.subr.mxu0 0.0
    %2908 = vmatpush1.msra.mxu0 %v2864
    %2909 = vmatprep.subr.mxu0 0.0
    %2910 = vmatpush1.msra.mxu0 %v2863
    %2911 = vmatprep.subr.mxu0 0.0
    %2912 = vmatpush2.msra.mxu0 0.0
    %2913 = vmatprep.subr.mxu0 0.0
    %2914 = vmatpush2.msra.mxu0 0.0
    %2915 = vmatprep.subr.mxu0 0.0
    %2916 = vmatpush2.msra.mxu0 0.0
    %2917 = vmatprep.subr.mxu0 0.0
    %2918 = vmatpush2.msra.mxu0 0.0
    %2919 = vmatprep.subr.mxu0 0.0
    %2920 = vmatpush2.msra.mxu0 0.0
    %2921 = vmatprep.subr.mxu0 0.0
    %2922 = vmatpush2.msra.mxu0 0.0
    %2923 = vmatprep.subr.mxu0 0.0
    %2924 = vmatpush2.msra.mxu0 0.0
    %2925 = vmatprep.subr.mxu0 0.0
    %2926 = vmatpush2.msra.mxu0 0.0
    %2927 = vmatprep.subr.mxu0 0.0
    %2928 = vmatpush2.msra.mxu0 0.0
    %2929 = vmatprep.subr.mxu0 0.0
    %2930 = vmatpush2.msra.mxu0 0.0
    %2931 = vmatprep.subr.mxu0 0.0
    %2932 = vmatpush2.msra.mxu0 0.0
    %2933 = vmatprep.subr.mxu0 0.0
    %2934 = vmatpush2.msra.mxu0 0.0
    %2935 = vmatprep.subr.mxu0 0.0
    %2936 = vmatpush2.msra.mxu0 0.0
    %2937 = vmatprep.subr.mxu0 0.0
    %2938 = vmatpush2.msra.mxu0 0.0
    %2939 = vmatprep.subr.mxu0 0.0
    %2940 = vmatpush2.msra.mxu0 0.0
    %2941 = vmatprep.subr.mxu0 0.0
    %2942 = vmatpush2.msra.mxu0 0.0
    %2943 = vmatprep.mubr.f32.mxu0 0.0
    %2944 = vmatmul.mubr.f32.gmra.mxu0 %v2859
    %v2945 = vpop.f32.mrf.mxu0
    %v2946 = vadd.f32 0.0, %v2945
    %v2947 = vpop.f32.mrf.mxu0
    %2948 = vdwg.mxu0
    %v2949 = vadd.f32 %v2786, %v2946
    %s2950 = scalar_lea.vmem %s4, 12
    %v2951 = vld [vmem:[%s2950] sm:$0x3]
    %v2953 = vsel %vm1976, %v2951, 0
    %2955 = vmatprep.subr.mxu0 0.0
    %2956 = vmatpush1.msra.mxu0 0.0
    %2957 = vmatprep.subr.mxu0 0.0
    %2958 = vmatpush1.msra.mxu0 0.0
    %2959 = vmatprep.subr.mxu0 0.0
    %2960 = vmatpush1.msra.mxu0 0.0
    %2961 = vmatprep.subr.mxu0 0.0
    %2962 = vmatpush1.msra.mxu0 0.0
    %2963 = vmatprep.subr.mxu0 0.0
    %2964 = vmatpush1.msra.mxu0 0.0
    %2965 = vmatprep.subr.mxu0 0.0
    %2966 = vmatpush1.msra.mxu0 0.0
    %2967 = vmatprep.subr.mxu0 0.0
    %2968 = vmatpush1.msra.mxu0 0.0
    %2969 = vmatprep.subr.mxu0 0.0
    %2970 = vmatpush1.msra.mxu0 0.0
    %2971 = vmatprep.subr.mxu0 0.0
    %2972 = vmatpush1.msra.mxu0 0.0
    %2973 = vmatprep.subr.mxu0 0.0
    %2974 = vmatpush1.msra.mxu0 0.0
    %2975 = vmatprep.subr.mxu0 0.0
    %2976 = vmatpush1.msra.mxu0 0.0
    %2977 = vmatprep.subr.mxu0 0.0
    %2978 = vmatpush1.msra.mxu0 0.0
    %2979 = vmatprep.subr.mxu0 0.0
    %2980 = vmatpush1.msra.mxu0 %v1974
    %2981 = vmatprep.subr.mxu0 0.0
    %2982 = vmatpush1.msra.mxu0 %v1973
    %2983 = vmatprep.subr.mxu0 0.0
    %2984 = vmatpush1.msra.mxu0 %v1972
    %2985 = vmatprep.subr.mxu0 0.0
    %2986 = vmatpush1.msra.mxu0 %v1971
    %2987 = vmatprep.subr.mxu0 0.0
    %2988 = vmatpush2.msra.mxu0 0.0
    %2989 = vmatprep.subr.mxu0 0.0
    %2990 = vmatpush2.msra.mxu0 0.0
    %2991 = vmatprep.subr.mxu0 0.0
    %2992 = vmatpush2.msra.mxu0 0.0
    %2993 = vmatprep.subr.mxu0 0.0
    %2994 = vmatpush2.msra.mxu0 0.0
    %2995 = vmatprep.subr.mxu0 0.0
    %2996 = vmatpush2.msra.mxu0 0.0
    %2997 = vmatprep.subr.mxu0 0.0
    %2998 = vmatpush2.msra.mxu0 0.0
    %2999 = vmatprep.subr.mxu0 0.0
    %3000 = vmatpush2.msra.mxu0 0.0
    %3001 = vmatprep.subr.mxu0 0.0
    %3002 = vmatpush2.msra.mxu0 0.0
    %3003 = vmatprep.subr.mxu0 0.0
    %3004 = vmatpush2.msra.mxu0 0.0
    %3005 = vmatprep.subr.mxu0 0.0
    %3006 = vmatpush2.msra.mxu0 0.0
    %3007 = vmatprep.subr.mxu0 0.0
    %3008 = vmatpush2.msra.mxu0 0.0
    %3009 = vmatprep.subr.mxu0 0.0
    %3010 = vmatpush2.msra.mxu0 0.0
    %3011 = vmatprep.subr.mxu0 0.0
    %3012 = vmatpush2.msra.mxu0 0.0
    %3013 = vmatprep.subr.mxu0 0.0
    %3014 = vmatpush2.msra.mxu0 0.0
    %3015 = vmatprep.subr.mxu0 0.0
    %3016 = vmatpush2.msra.mxu0 0.0
    %3017 = vmatprep.subr.mxu0 0.0
    %3018 = vmatpush2.msra.mxu0 0.0
    %3019 = vmatprep.mubr.f32.mxu0 0.0
    %3020 = vmatmul.mubr.f32.gmra.mxu0 %v2953
    %v3021 = vpop.f32.mrf.mxu0
    %v3022 = vadd.f32 0.0, %v3021
    %v3023 = vpop.f32.mrf.mxu0
    %3024 = vdwg.mxu0
    %s3025 = scalar_lea.vmem %s5, 768
    %v3026 = vld [vmem:[%s3025] sm:$0xff]
    %v3027 = vld [vmem:[%s3025 + $0x8] sm:$0xff]
    %v3028 = vld [vmem:[%s3025 + $0x10] sm:$0xff]
    %v3029 = vld [vmem:[%s3025 + $0x18] sm:$0xff]
    %v3030 = vld [vmem:[%s3025 + $0x20] sm:$0xff]
    %v3031 = vld [vmem:[%s3025 + $0x28] sm:$0xff]
    %v3032 = vld [vmem:[%s3025 + $0x30] sm:$0xff]
    %v3033 = vld [vmem:[%s3025 + $0x38] sm:$0xff]
    %v3034 = vld [vmem:[%s3025 + $0x40] sm:$0xff]
    %v3035 = vld [vmem:[%s3025 + $0x48] sm:$0xff]
    %v3036 = vld [vmem:[%s3025 + $0x50] sm:$0xff]
    %v3037 = vld [vmem:[%s3025 + $0x58] sm:$0xff]
    %v3038 = vld [vmem:[%s3025 + $0x60] sm:$0xff]
    %v3039 = vld [vmem:[%s3025 + $0x68] sm:$0xff]
    %v3040 = vld [vmem:[%s3025 + $0x70] sm:$0xff]
    %v3041 = vld [vmem:[%s3025 + $0x78] sm:$0xff]
    %3042 = vmatprep.subr.mxu0 0.0
    %3043 = vmatpush1.msra.mxu0 %v3041
    %3044 = vmatprep.subr.mxu0 0.0
    %3045 = vmatpush1.msra.mxu0 %v3040
    %3046 = vmatprep.subr.mxu0 0.0
    %3047 = vmatpush1.msra.mxu0 %v3039
    %3048 = vmatprep.subr.mxu0 0.0
    %3049 = vmatpush1.msra.mxu0 %v3038
    %3050 = vmatprep.subr.mxu0 0.0
    %3051 = vmatpush1.msra.mxu0 %v3037
    %3052 = vmatprep.subr.mxu0 0.0
    %3053 = vmatpush1.msra.mxu0 %v3036
    %3054 = vmatprep.subr.mxu0 0.0
    %3055 = vmatpush1.msra.mxu0 %v3035
    %3056 = vmatprep.subr.mxu0 0.0
    %3057 = vmatpush1.msra.mxu0 %v3034
    %3058 = vmatprep.subr.mxu0 0.0
    %3059 = vmatpush1.msra.mxu0 %v3033
    %3060 = vmatprep.subr.mxu0 0.0
    %3061 = vmatpush1.msra.mxu0 %v3032
    %3062 = vmatprep.subr.mxu0 0.0
    %3063 = vmatpush1.msra.mxu0 %v3031
    %3064 = vmatprep.subr.mxu0 0.0
    %3065 = vmatpush1.msra.mxu0 %v3030
    %3066 = vmatprep.subr.mxu0 0.0
    %3067 = vmatpush1.msra.mxu0 %v3029
    %3068 = vmatprep.subr.mxu0 0.0
    %3069 = vmatpush1.msra.mxu0 %v3028
    %3070 = vmatprep.subr.mxu0 0.0
    %3071 = vmatpush1.msra.mxu0 %v3027
    %3072 = vmatprep.subr.mxu0 0.0
    %3073 = vmatpush1.msra.mxu0 %v3026
    %3074 = vmatprep.subr.mxu0 0.0
    %3075 = vmatpush2.msra.mxu0 0.0
    %3076 = vmatprep.subr.mxu0 0.0
    %3077 = vmatpush2.msra.mxu0 0.0
    %3078 = vmatprep.subr.mxu0 0.0
    %3079 = vmatpush2.msra.mxu0 0.0
    %3080 = vmatprep.subr.mxu0 0.0
    %3081 = vmatpush2.msra.mxu0 0.0
    %3082 = vmatprep.subr.mxu0 0.0
    %3083 = vmatpush2.msra.mxu0 0.0
    %3084 = vmatprep.subr.mxu0 0.0
    %3085 = vmatpush2.msra.mxu0 0.0
    %3086 = vmatprep.subr.mxu0 0.0
    %3087 = vmatpush2.msra.mxu0 0.0
    %3088 = vmatprep.subr.mxu0 0.0
    %3089 = vmatpush2.msra.mxu0 0.0
    %3090 = vmatprep.subr.mxu0 0.0
    %3091 = vmatpush2.msra.mxu0 0.0
    %3092 = vmatprep.subr.mxu0 0.0
    %3093 = vmatpush2.msra.mxu0 0.0
    %3094 = vmatprep.subr.mxu0 0.0
    %3095 = vmatpush2.msra.mxu0 0.0
    %3096 = vmatprep.subr.mxu0 0.0
    %3097 = vmatpush2.msra.mxu0 0.0
    %3098 = vmatprep.subr.mxu0 0.0
    %3099 = vmatpush2.msra.mxu0 0.0
    %3100 = vmatprep.subr.mxu0 0.0
    %3101 = vmatpush2.msra.mxu0 0.0
    %3102 = vmatprep.subr.mxu0 0.0
    %3103 = vmatpush2.msra.mxu0 0.0
    %3104 = vmatprep.subr.mxu0 0.0
    %3105 = vmatpush2.msra.mxu0 0.0
    %3106 = vmatprep.mubr.f32.mxu0 0.0
    %3107 = vmatmul.mubr.f32.gmra.mxu0 %v3022
    %v3108 = vpop.f32.mrf.mxu0
    %v3109 = vadd.f32 0.0, %v3108
    %v3110 = vpop.f32.mrf.mxu0
    %3111 = vdwg.mxu0
    %v3112 = vadd.f32 %v2949, %v3109
    %s3113 = scalar_lea.vmem %s4, 14
    %v3114 = vld [vmem:[%s3113] sm:$0x3]
    %v3116 = vsel %vm1976, %v3114, 0
    %3118 = vmatprep.subr.mxu0 0.0
    %3119 = vmatpush1.msra.mxu0 0.0
    %3120 = vmatprep.subr.mxu0 0.0
    %3121 = vmatpush1.msra.mxu0 0.0
    %3122 = vmatprep.subr.mxu0 0.0
    %3123 = vmatpush1.msra.mxu0 0.0
    %3124 = vmatprep.subr.mxu0 0.0
    %3125 = vmatpush1.msra.mxu0 0.0
    %3126 = vmatprep.subr.mxu0 0.0
    %3127 = vmatpush1.msra.mxu0 0.0
    %3128 = vmatprep.subr.mxu0 0.0
    %3129 = vmatpush1.msra.mxu0 0.0
    %3130 = vmatprep.subr.mxu0 0.0
    %3131 = vmatpush1.msra.mxu0 0.0
    %3132 = vmatprep.subr.mxu0 0.0
    %3133 = vmatpush1.msra.mxu0 0.0
    %3134 = vmatprep.subr.mxu0 0.0
    %3135 = vmatpush1.msra.mxu0 0.0
    %3136 = vmatprep.subr.mxu0 0.0
    %3137 = vmatpush1.msra.mxu0 0.0
    %3138 = vmatprep.subr.mxu0 0.0
    %3139 = vmatpush1.msra.mxu0 0.0
    %3140 = vmatprep.subr.mxu0 0.0
    %3141 = vmatpush1.msra.mxu0 0.0
    %3142 = vmatprep.subr.mxu0 0.0
    %3143 = vmatpush1.msra.mxu0 %v1974
    %3144 = vmatprep.subr.mxu0 0.0
    %3145 = vmatpush1.msra.mxu0 %v1973
    %3146 = vmatprep.subr.mxu0 0.0
    %3147 = vmatpush1.msra.mxu0 %v1972
    %3148 = vmatprep.subr.mxu0 0.0
    %3149 = vmatpush1.msra.mxu0 %v1971
    %3150 = vmatprep.subr.mxu0 0.0
    %3151 = vmatpush2.msra.mxu0 0.0
    %3152 = vmatprep.subr.mxu0 0.0
    %3153 = vmatpush2.msra.mxu0 0.0
    %3154 = vmatprep.subr.mxu0 0.0
    %3155 = vmatpush2.msra.mxu0 0.0
    %3156 = vmatprep.subr.mxu0 0.0
    %3157 = vmatpush2.msra.mxu0 0.0
    %3158 = vmatprep.subr.mxu0 0.0
    %3159 = vmatpush2.msra.mxu0 0.0
    %3160 = vmatprep.subr.mxu0 0.0
    %3161 = vmatpush2.msra.mxu0 0.0
    %3162 = vmatprep.subr.mxu0 0.0
    %3163 = vmatpush2.msra.mxu0 0.0
    %3164 = vmatprep.subr.mxu0 0.0
    %3165 = vmatpush2.msra.mxu0 0.0
    %3166 = vmatprep.subr.mxu0 0.0
    %3167 = vmatpush2.msra.mxu0 0.0
    %3168 = vmatprep.subr.mxu0 0.0
    %3169 = vmatpush2.msra.mxu0 0.0
    %3170 = vmatprep.subr.mxu0 0.0
    %3171 = vmatpush2.msra.mxu0 0.0
    %3172 = vmatprep.subr.mxu0 0.0
    %3173 = vmatpush2.msra.mxu0 0.0
    %3174 = vmatprep.subr.mxu0 0.0
    %3175 = vmatpush2.msra.mxu0 0.0
    %3176 = vmatprep.subr.mxu0 0.0
    %3177 = vmatpush2.msra.mxu0 0.0
    %3178 = vmatprep.subr.mxu0 0.0
    %3179 = vmatpush2.msra.mxu0 0.0
    %3180 = vmatprep.subr.mxu0 0.0
    %3181 = vmatpush2.msra.mxu0 0.0
    %3182 = vmatprep.mubr.f32.mxu0 0.0
    %3183 = vmatmul.mubr.f32.gmra.mxu0 %v3116
    %v3184 = vpop.f32.mrf.mxu0
    %v3185 = vadd.f32 0.0, %v3184
    %v3186 = vpop.f32.mrf.mxu0
    %3187 = vdwg.mxu0
    %s3188 = scalar_lea.vmem %s5, 896
    %v3189 = vld [vmem:[%s3188] sm:$0xff]
    %v3190 = vld [vmem:[%s3188 + $0x8] sm:$0xff]
    %v3191 = vld [vmem:[%s3188 + $0x10] sm:$0xff]
    %v3192 = vld [vmem:[%s3188 + $0x18] sm:$0xff]
    %v3193 = vld [vmem:[%s3188 + $0x20] sm:$0xff]
    %v3194 = vld [vmem:[%s3188 + $0x28] sm:$0xff]
    %v3195 = vld [vmem:[%s3188 + $0x30] sm:$0xff]
    %v3196 = vld [vmem:[%s3188 + $0x38] sm:$0xff]
    %v3197 = vld [vmem:[%s3188 + $0x40] sm:$0xff]
    %v3198 = vld [vmem:[%s3188 + $0x48] sm:$0xff]
    %v3199 = vld [vmem:[%s3188 + $0x50] sm:$0xff]
    %v3200 = vld [vmem:[%s3188 + $0x58] sm:$0xff]
    %v3201 = vld [vmem:[%s3188 + $0x60] sm:$0xff]
    %v3202 = vld [vmem:[%s3188 + $0x68] sm:$0xff]
    %v3203 = vld [vmem:[%s3188 + $0x70] sm:$0xff]
    %v3204 = vld [vmem:[%s3188 + $0x78] sm:$0xff]
    %3205 = vmatprep.subr.mxu0 0.0
    %3206 = vmatpush1.msra.mxu0 %v3204
    %3207 = vmatprep.subr.mxu0 0.0
    %3208 = vmatpush1.msra.mxu0 %v3203
    %3209 = vmatprep.subr.mxu0 0.0
    %3210 = vmatpush1.msra.mxu0 %v3202
    %3211 = vmatprep.subr.mxu0 0.0
    %3212 = vmatpush1.msra.mxu0 %v3201
    %3213 = vmatprep.subr.mxu0 0.0
    %3214 = vmatpush1.msra.mxu0 %v3200
    %3215 = vmatprep.subr.mxu0 0.0
    %3216 = vmatpush1.msra.mxu0 %v3199
    %3217 = vmatprep.subr.mxu0 0.0
    %3218 = vmatpush1.msra.mxu0 %v3198
    %3219 = vmatprep.subr.mxu0 0.0
    %3220 = vmatpush1.msra.mxu0 %v3197
    %3221 = vmatprep.subr.mxu0 0.0
    %3222 = vmatpush1.msra.mxu0 %v3196
    %3223 = vmatprep.subr.mxu0 0.0
    %3224 = vmatpush1.msra.mxu0 %v3195
    %3225 = vmatprep.subr.mxu0 0.0
    %3226 = vmatpush1.msra.mxu0 %v3194
    %3227 = vmatprep.subr.mxu0 0.0
    %3228 = vmatpush1.msra.mxu0 %v3193
    %3229 = vmatprep.subr.mxu0 0.0
    %3230 = vmatpush1.msra.mxu0 %v3192
    %3231 = vmatprep.subr.mxu0 0.0
    %3232 = vmatpush1.msra.mxu0 %v3191
    %3233 = vmatprep.subr.mxu0 0.0
    %3234 = vmatpush1.msra.mxu0 %v3190
    %3235 = vmatprep.subr.mxu0 0.0
    %3236 = vmatpush1.msra.mxu0 %v3189
    %3237 = vmatprep.subr.mxu0 0.0
    %3238 = vmatpush2.msra.mxu0 0.0
    %3239 = vmatprep.subr.mxu0 0.0
    %3240 = vmatpush2.msra.mxu0 0.0
    %3241 = vmatprep.subr.mxu0 0.0
    %3242 = vmatpush2.msra.mxu0 0.0
    %3243 = vmatprep.subr.mxu0 0.0
    %3244 = vmatpush2.msra.mxu0 0.0
    %3245 = vmatprep.subr.mxu0 0.0
    %3246 = vmatpush2.msra.mxu0 0.0
    %3247 = vmatprep.subr.mxu0 0.0
    %3248 = vmatpush2.msra.mxu0 0.0
    %3249 = vmatprep.subr.mxu0 0.0
    %3250 = vmatpush2.msra.mxu0 0.0
    %3251 = vmatprep.subr.mxu0 0.0
    %3252 = vmatpush2.msra.mxu0 0.0
    %3253 = vmatprep.subr.mxu0 0.0
    %3254 = vmatpush2.msra.mxu0 0.0
    %3255 = vmatprep.subr.mxu0 0.0
    %3256 = vmatpush2.msra.mxu0 0.0
    %3257 = vmatprep.subr.mxu0 0.0
    %3258 = vmatpush2.msra.mxu0 0.0
    %3259 = vmatprep.subr.mxu0 0.0
    %3260 = vmatpush2.msra.mxu0 0.0
    %3261 = vmatprep.subr.mxu0 0.0
    %3262 = vmatpush2.msra.mxu0 0.0
    %3263 = vmatprep.subr.mxu0 0.0
    %3264 = vmatpush2.msra.mxu0 0.0
    %3265 = vmatprep.subr.mxu0 0.0
    %3266 = vmatpush2.msra.mxu0 0.0
    %3267 = vmatprep.subr.mxu0 0.0
    %3268 = vmatpush2.msra.mxu0 0.0
    %3269 = vmatprep.mubr.f32.mxu0 0.0
    %3270 = vmatmul.mubr.f32.gmra.mxu0 %v3185
    %v3271 = vpop.f32.mrf.mxu0
    %v3272 = vadd.f32 0.0, %v3271
    %v3273 = vpop.f32.mrf.mxu0
    %3274 = vdwg.mxu0
    %v3275 = vadd.f32 %v3112, %v3272
    %s3276 = scalar_lea.vmem %s4, 16
    %v3277 = vld [vmem:[%s3276] sm:$0x3]
    %v3279 = vsel %vm1976, %v3277, 0
    %3281 = vmatprep.subr.mxu0 0.0
    %3282 = vmatpush1.msra.mxu0 0.0
    %3283 = vmatprep.subr.mxu0 0.0
    %3284 = vmatpush1.msra.mxu0 0.0
    %3285 = vmatprep.subr.mxu0 0.0
    %3286 = vmatpush1.msra.mxu0 0.0
    %3287 = vmatprep.subr.mxu0 0.0
    %3288 = vmatpush1.msra.mxu0 0.0
    %3289 = vmatprep.subr.mxu0 0.0
    %3290 = vmatpush1.msra.mxu0 0.0
    %3291 = vmatprep.subr.mxu0 0.0
    %3292 = vmatpush1.msra.mxu0 0.0
    %3293 = vmatprep.subr.mxu0 0.0
    %3294 = vmatpush1.msra.mxu0 0.0
    %3295 = vmatprep.subr.mxu0 0.0
    %3296 = vmatpush1.msra.mxu0 0.0
    %3297 = vmatprep.subr.mxu0 0.0
    %3298 = vmatpush1.msra.mxu0 0.0
    %3299 = vmatprep.subr.mxu0 0.0
    %3300 = vmatpush1.msra.mxu0 0.0
    %3301 = vmatprep.subr.mxu0 0.0
    %3302 = vmatpush1.msra.mxu0 0.0
    %3303 = vmatprep.subr.mxu0 0.0
    %3304 = vmatpush1.msra.mxu0 0.0
    %3305 = vmatprep.subr.mxu0 0.0
    %3306 = vmatpush1.msra.mxu0 %v1974
    %3307 = vmatprep.subr.mxu0 0.0
    %3308 = vmatpush1.msra.mxu0 %v1973
    %3309 = vmatprep.subr.mxu0 0.0
    %3310 = vmatpush1.msra.mxu0 %v1972
    %3311 = vmatprep.subr.mxu0 0.0
    %3312 = vmatpush1.msra.mxu0 %v1971
    %3313 = vmatprep.subr.mxu0 0.0
    %3314 = vmatpush2.msra.mxu0 0.0
    %3315 = vmatprep.subr.mxu0 0.0
    %3316 = vmatpush2.msra.mxu0 0.0
    %3317 = vmatprep.subr.mxu0 0.0
    %3318 = vmatpush2.msra.mxu0 0.0
    %3319 = vmatprep.subr.mxu0 0.0
    %3320 = vmatpush2.msra.mxu0 0.0
    %3321 = vmatprep.subr.mxu0 0.0
    %3322 = vmatpush2.msra.mxu0 0.0
    %3323 = vmatprep.subr.mxu0 0.0
    %3324 = vmatpush2.msra.mxu0 0.0
    %3325 = vmatprep.subr.mxu0 0.0
    %3326 = vmatpush2.msra.mxu0 0.0
    %3327 = vmatprep.subr.mxu0 0.0
    %3328 = vmatpush2.msra.mxu0 0.0
    %3329 = vmatprep.subr.mxu0 0.0
    %3330 = vmatpush2.msra.mxu0 0.0
    %3331 = vmatprep.subr.mxu0 0.0
    %3332 = vmatpush2.msra.mxu0 0.0
    %3333 = vmatprep.subr.mxu0 0.0
    %3334 = vmatpush2.msra.mxu0 0.0
    %3335 = vmatprep.subr.mxu0 0.0
    %3336 = vmatpush2.msra.mxu0 0.0
    %3337 = vmatprep.subr.mxu0 0.0
    %3338 = vmatpush2.msra.mxu0 0.0
    %3339 = vmatprep.subr.mxu0 0.0
    %3340 = vmatpush2.msra.mxu0 0.0
    %3341 = vmatprep.subr.mxu0 0.0
    %3342 = vmatpush2.msra.mxu0 0.0
    %3343 = vmatprep.subr.mxu0 0.0
    %3344 = vmatpush2.msra.mxu0 0.0
    %3345 = vmatprep.mubr.f32.mxu0 0.0
    %3346 = vmatmul.mubr.f32.gmra.mxu0 %v3279
    %v3347 = vpop.f32.mrf.mxu0
    %v3348 = vadd.f32 0.0, %v3347
    %v3349 = vpop.f32.mrf.mxu0
    %3350 = vdwg.mxu0
    %s3351 = scalar_lea.vmem %s5, 1024
    %v3352 = vld [vmem:[%s3351] sm:$0xff]
    %v3353 = vld [vmem:[%s3351 + $0x8] sm:$0xff]
    %v3354 = vld [vmem:[%s3351 + $0x10] sm:$0xff]
    %v3355 = vld [vmem:[%s3351 + $0x18] sm:$0xff]
    %v3356 = vld [vmem:[%s3351 + $0x20] sm:$0xff]
    %v3357 = vld [vmem:[%s3351 + $0x28] sm:$0xff]
    %v3358 = vld [vmem:[%s3351 + $0x30] sm:$0xff]
    %v3359 = vld [vmem:[%s3351 + $0x38] sm:$0xff]
    %v3360 = vld [vmem:[%s3351 + $0x40] sm:$0xff]
    %v3361 = vld [vmem:[%s3351 + $0x48] sm:$0xff]
    %v3362 = vld [vmem:[%s3351 + $0x50] sm:$0xff]
    %v3363 = vld [vmem:[%s3351 + $0x58] sm:$0xff]
    %v3364 = vld [vmem:[%s3351 + $0x60] sm:$0xff]
    %v3365 = vld [vmem:[%s3351 + $0x68] sm:$0xff]
    %v3366 = vld [vmem:[%s3351 + $0x70] sm:$0xff]
    %v3367 = vld [vmem:[%s3351 + $0x78] sm:$0xff]
    %3368 = vmatprep.subr.mxu0 0.0
    %3369 = vmatpush1.msra.mxu0 %v3367
    %3370 = vmatprep.subr.mxu0 0.0
    %3371 = vmatpush1.msra.mxu0 %v3366
    %3372 = vmatprep.subr.mxu0 0.0
    %3373 = vmatpush1.msra.mxu0 %v3365
    %3374 = vmatprep.subr.mxu0 0.0
    %3375 = vmatpush1.msra.mxu0 %v3364
    %3376 = vmatprep.subr.mxu0 0.0
    %3377 = vmatpush1.msra.mxu0 %v3363
    %3378 = vmatprep.subr.mxu0 0.0
    %3379 = vmatpush1.msra.mxu0 %v3362
    %3380 = vmatprep.subr.mxu0 0.0
    %3381 = vmatpush1.msra.mxu0 %v3361
    %3382 = vmatprep.subr.mxu0 0.0
    %3383 = vmatpush1.msra.mxu0 %v3360
    %3384 = vmatprep.subr.mxu0 0.0
    %3385 = vmatpush1.msra.mxu0 %v3359
    %3386 = vmatprep.subr.mxu0 0.0
    %3387 = vmatpush1.msra.mxu0 %v3358
    %3388 = vmatprep.subr.mxu0 0.0
    %3389 = vmatpush1.msra.mxu0 %v3357
    %3390 = vmatprep.subr.mxu0 0.0
    %3391 = vmatpush1.msra.mxu0 %v3356
    %3392 = vmatprep.subr.mxu0 0.0
    %3393 = vmatpush1.msra.mxu0 %v3355
    %3394 = vmatprep.subr.mxu0 0.0
    %3395 = vmatpush1.msra.mxu0 %v3354
    %3396 = vmatprep.subr.mxu0 0.0
    %3397 = vmatpush1.msra.mxu0 %v3353
    %3398 = vmatprep.subr.mxu0 0.0
    %3399 = vmatpush1.msra.mxu0 %v3352
    %3400 = vmatprep.subr.mxu0 0.0
    %3401 = vmatpush2.msra.mxu0 0.0
    %3402 = vmatprep.subr.mxu0 0.0
    %3403 = vmatpush2.msra.mxu0 0.0
    %3404 = vmatprep.subr.mxu0 0.0
    %3405 = vmatpush2.msra.mxu0 0.0
    %3406 = vmatprep.subr.mxu0 0.0
    %3407 = vmatpush2.msra.mxu0 0.0
    %3408 = vmatprep.subr.mxu0 0.0
    %3409 = vmatpush2.msra.mxu0 0.0
    %3410 = vmatprep.subr.mxu0 0.0
    %3411 = vmatpush2.msra.mxu0 0.0
    %3412 = vmatprep.subr.mxu0 0.0
    %3413 = vmatpush2.msra.mxu0 0.0
    %3414 = vmatprep.subr.mxu0 0.0
    %3415 = vmatpush2.msra.mxu0 0.0
    %3416 = vmatprep.subr.mxu0 0.0
    %3417 = vmatpush2.msra.mxu0 0.0
    %3418 = vmatprep.subr.mxu0 0.0
    %3419 = vmatpush2.msra.mxu0 0.0
    %3420 = vmatprep.subr.mxu0 0.0
    %3421 = vmatpush2.msra.mxu0 0.0
    %3422 = vmatprep.subr.mxu0 0.0
    %3423 = vmatpush2.msra.mxu0 0.0
    %3424 = vmatprep.subr.mxu0 0.0
    %3425 = vmatpush2.msra.mxu0 0.0
    %3426 = vmatprep.subr.mxu0 0.0
    %3427 = vmatpush2.msra.mxu0 0.0
    %3428 = vmatprep.subr.mxu0 0.0
    %3429 = vmatpush2.msra.mxu0 0.0
    %3430 = vmatprep.subr.mxu0 0.0
    %3431 = vmatpush2.msra.mxu0 0.0
    %3432 = vmatprep.mubr.f32.mxu0 0.0
    %3433 = vmatmul.mubr.f32.gmra.mxu0 %v3348
    %v3434 = vpop.f32.mrf.mxu0
    %v3435 = vadd.f32 0.0, %v3434
    %v3436 = vpop.f32.mrf.mxu0
    %3437 = vdwg.mxu0
    %v3438 = vadd.f32 %v3275, %v3435
    %s3439 = scalar_lea.vmem %s4, 18
    %v3440 = vld [vmem:[%s3439] sm:$0x3]
    %v3442 = vsel %vm1976, %v3440, 0
    %3444 = vmatprep.subr.mxu0 0.0
    %3445 = vmatpush1.msra.mxu0 0.0
    %3446 = vmatprep.subr.mxu0 0.0
    %3447 = vmatpush1.msra.mxu0 0.0
    %3448 = vmatprep.subr.mxu0 0.0
    %3449 = vmatpush1.msra.mxu0 0.0
    %3450 = vmatprep.subr.mxu0 0.0
    %3451 = vmatpush1.msra.mxu0 0.0
    %3452 = vmatprep.subr.mxu0 0.0
    %3453 = vmatpush1.msra.mxu0 0.0
    %3454 = vmatprep.subr.mxu0 0.0
    %3455 = vmatpush1.msra.mxu0 0.0
    %3456 = vmatprep.subr.mxu0 0.0
    %3457 = vmatpush1.msra.mxu0 0.0
    %3458 = vmatprep.subr.mxu0 0.0
    %3459 = vmatpush1.msra.mxu0 0.0
    %3460 = vmatprep.subr.mxu0 0.0
    %3461 = vmatpush1.msra.mxu0 0.0
    %3462 = vmatprep.subr.mxu0 0.0
    %3463 = vmatpush1.msra.mxu0 0.0
    %3464 = vmatprep.subr.mxu0 0.0
    %3465 = vmatpush1.msra.mxu0 0.0
    %3466 = vmatprep.subr.mxu0 0.0
    %3467 = vmatpush1.msra.mxu0 0.0
    %3468 = vmatprep.subr.mxu0 0.0
    %3469 = vmatpush1.msra.mxu0 %v1974
    %3470 = vmatprep.subr.mxu0 0.0
    %3471 = vmatpush1.msra.mxu0 %v1973
    %3472 = vmatprep.subr.mxu0 0.0
    %3473 = vmatpush1.msra.mxu0 %v1972
    %3474 = vmatprep.subr.mxu0 0.0
    %3475 = vmatpush1.msra.mxu0 %v1971
    %3476 = vmatprep.subr.mxu0 0.0
    %3477 = vmatpush2.msra.mxu0 0.0
    %3478 = vmatprep.subr.mxu0 0.0
    %3479 = vmatpush2.msra.mxu0 0.0
    %3480 = vmatprep.subr.mxu0 0.0
    %3481 = vmatpush2.msra.mxu0 0.0
    %3482 = vmatprep.subr.mxu0 0.0
    %3483 = vmatpush2.msra.mxu0 0.0
    %3484 = vmatprep.subr.mxu0 0.0
    %3485 = vmatpush2.msra.mxu0 0.0
    %3486 = vmatprep.subr.mxu0 0.0
    %3487 = vmatpush2.msra.mxu0 0.0
    %3488 = vmatprep.subr.mxu0 0.0
    %3489 = vmatpush2.msra.mxu0 0.0
    %3490 = vmatprep.subr.mxu0 0.0
    %3491 = vmatpush2.msra.mxu0 0.0
    %3492 = vmatprep.subr.mxu0 0.0
    %3493 = vmatpush2.msra.mxu0 0.0
    %3494 = vmatprep.subr.mxu0 0.0
    %3495 = vmatpush2.msra.mxu0 0.0
    %3496 = vmatprep.subr.mxu0 0.0
    %3497 = vmatpush2.msra.mxu0 0.0
    %3498 = vmatprep.subr.mxu0 0.0
    %3499 = vmatpush2.msra.mxu0 0.0
    %3500 = vmatprep.subr.mxu0 0.0
    %3501 = vmatpush2.msra.mxu0 0.0
    %3502 = vmatprep.subr.mxu0 0.0
    %3503 = vmatpush2.msra.mxu0 0.0
    %3504 = vmatprep.subr.mxu0 0.0
    %3505 = vmatpush2.msra.mxu0 0.0
    %3506 = vmatprep.subr.mxu0 0.0
    %3507 = vmatpush2.msra.mxu0 0.0
    %3508 = vmatprep.mubr.f32.mxu0 0.0
    %3509 = vmatmul.mubr.f32.gmra.mxu0 %v3442
    %v3510 = vpop.f32.mrf.mxu0
    %v3511 = vadd.f32 0.0, %v3510
    %v3512 = vpop.f32.mrf.mxu0
    %3513 = vdwg.mxu0
    %s3514 = scalar_lea.vmem %s5, 1152
    %v3515 = vld [vmem:[%s3514] sm:$0xff]
    %v3516 = vld [vmem:[%s3514 + $0x8] sm:$0xff]
    %v3517 = vld [vmem:[%s3514 + $0x10] sm:$0xff]
    %v3518 = vld [vmem:[%s3514 + $0x18] sm:$0xff]
    %v3519 = vld [vmem:[%s3514 + $0x20] sm:$0xff]
    %v3520 = vld [vmem:[%s3514 + $0x28] sm:$0xff]
    %v3521 = vld [vmem:[%s3514 + $0x30] sm:$0xff]
    %v3522 = vld [vmem:[%s3514 + $0x38] sm:$0xff]
    %v3523 = vld [vmem:[%s3514 + $0x40] sm:$0xff]
    %v3524 = vld [vmem:[%s3514 + $0x48] sm:$0xff]
    %v3525 = vld [vmem:[%s3514 + $0x50] sm:$0xff]
    %v3526 = vld [vmem:[%s3514 + $0x58] sm:$0xff]
    %v3527 = vld [vmem:[%s3514 + $0x60] sm:$0xff]
    %v3528 = vld [vmem:[%s3514 + $0x68] sm:$0xff]
    %v3529 = vld [vmem:[%s3514 + $0x70] sm:$0xff]
    %v3530 = vld [vmem:[%s3514 + $0x78] sm:$0xff]
    %3531 = vmatprep.subr.mxu0 0.0
    %3532 = vmatpush1.msra.mxu0 %v3530
    %3533 = vmatprep.subr.mxu0 0.0
    %3534 = vmatpush1.msra.mxu0 %v3529
    %3535 = vmatprep.subr.mxu0 0.0
    %3536 = vmatpush1.msra.mxu0 %v3528
    %3537 = vmatprep.subr.mxu0 0.0
    %3538 = vmatpush1.msra.mxu0 %v3527
    %3539 = vmatprep.subr.mxu0 0.0
    %3540 = vmatpush1.msra.mxu0 %v3526
    %3541 = vmatprep.subr.mxu0 0.0
    %3542 = vmatpush1.msra.mxu0 %v3525
    %3543 = vmatprep.subr.mxu0 0.0
    %3544 = vmatpush1.msra.mxu0 %v3524
    %3545 = vmatprep.subr.mxu0 0.0
    %3546 = vmatpush1.msra.mxu0 %v3523
    %3547 = vmatprep.subr.mxu0 0.0
    %3548 = vmatpush1.msra.mxu0 %v3522
    %3549 = vmatprep.subr.mxu0 0.0
    %3550 = vmatpush1.msra.mxu0 %v3521
    %3551 = vmatprep.subr.mxu0 0.0
    %3552 = vmatpush1.msra.mxu0 %v3520
    %3553 = vmatprep.subr.mxu0 0.0
    %3554 = vmatpush1.msra.mxu0 %v3519
    %3555 = vmatprep.subr.mxu0 0.0
    %3556 = vmatpush1.msra.mxu0 %v3518
    %3557 = vmatprep.subr.mxu0 0.0
    %3558 = vmatpush1.msra.mxu0 %v3517
    %3559 = vmatprep.subr.mxu0 0.0
    %3560 = vmatpush1.msra.mxu0 %v3516
    %3561 = vmatprep.subr.mxu0 0.0
    %3562 = vmatpush1.msra.mxu0 %v3515
    %3563 = vmatprep.subr.mxu0 0.0
    %3564 = vmatpush2.msra.mxu0 0.0
    %3565 = vmatprep.subr.mxu0 0.0
    %3566 = vmatpush2.msra.mxu0 0.0
    %3567 = vmatprep.subr.mxu0 0.0
    %3568 = vmatpush2.msra.mxu0 0.0
    %3569 = vmatprep.subr.mxu0 0.0
    %3570 = vmatpush2.msra.mxu0 0.0
    %3571 = vmatprep.subr.mxu0 0.0
    %3572 = vmatpush2.msra.mxu0 0.0
    %3573 = vmatprep.subr.mxu0 0.0
    %3574 = vmatpush2.msra.mxu0 0.0
    %3575 = vmatprep.subr.mxu0 0.0
    %3576 = vmatpush2.msra.mxu0 0.0
    %3577 = vmatprep.subr.mxu0 0.0
    %3578 = vmatpush2.msra.mxu0 0.0
    %3579 = vmatprep.subr.mxu0 0.0
    %3580 = vmatpush2.msra.mxu0 0.0
    %3581 = vmatprep.subr.mxu0 0.0
    %3582 = vmatpush2.msra.mxu0 0.0
    %3583 = vmatprep.subr.mxu0 0.0
    %3584 = vmatpush2.msra.mxu0 0.0
    %3585 = vmatprep.subr.mxu0 0.0
    %3586 = vmatpush2.msra.mxu0 0.0
    %3587 = vmatprep.subr.mxu0 0.0
    %3588 = vmatpush2.msra.mxu0 0.0
    %3589 = vmatprep.subr.mxu0 0.0
    %3590 = vmatpush2.msra.mxu0 0.0
    %3591 = vmatprep.subr.mxu0 0.0
    %3592 = vmatpush2.msra.mxu0 0.0
    %3593 = vmatprep.subr.mxu0 0.0
    %3594 = vmatpush2.msra.mxu0 0.0
    %3595 = vmatprep.mubr.f32.mxu0 0.0
    %3596 = vmatmul.mubr.f32.gmra.mxu0 %v3511
    %v3597 = vpop.f32.mrf.mxu0
    %v3598 = vadd.f32 0.0, %v3597
    %v3599 = vpop.f32.mrf.mxu0
    %3600 = vdwg.mxu0
    %v3601 = vadd.f32 %v3438, %v3598
    %s3602 = scalar_lea.vmem %s4, 20
    %v3603 = vld [vmem:[%s3602] sm:$0x3]
    %v3605 = vsel %vm1976, %v3603, 0
    %3607 = vmatprep.subr.mxu0 0.0
    %3608 = vmatpush1.msra.mxu0 0.0
    %3609 = vmatprep.subr.mxu0 0.0
    %3610 = vmatpush1.msra.mxu0 0.0
    %3611 = vmatprep.subr.mxu0 0.0
    %3612 = vmatpush1.msra.mxu0 0.0
    %3613 = vmatprep.subr.mxu0 0.0
    %3614 = vmatpush1.msra.mxu0 0.0
    %3615 = vmatprep.subr.mxu0 0.0
    %3616 = vmatpush1.msra.mxu0 0.0
    %3617 = vmatprep.subr.mxu0 0.0
    %3618 = vmatpush1.msra.mxu0 0.0
    %3619 = vmatprep.subr.mxu0 0.0
    %3620 = vmatpush1.msra.mxu0 0.0
    %3621 = vmatprep.subr.mxu0 0.0
    %3622 = vmatpush1.msra.mxu0 0.0
    %3623 = vmatprep.subr.mxu0 0.0
    %3624 = vmatpush1.msra.mxu0 0.0
    %3625 = vmatprep.subr.mxu0 0.0
    %3626 = vmatpush1.msra.mxu0 0.0
    %3627 = vmatprep.subr.mxu0 0.0
    %3628 = vmatpush1.msra.mxu0 0.0
    %3629 = vmatprep.subr.mxu0 0.0
    %3630 = vmatpush1.msra.mxu0 0.0
    %3631 = vmatprep.subr.mxu0 0.0
    %3632 = vmatpush1.msra.mxu0 %v1974
    %3633 = vmatprep.subr.mxu0 0.0
    %3634 = vmatpush1.msra.mxu0 %v1973
    %3635 = vmatprep.subr.mxu0 0.0
    %3636 = vmatpush1.msra.mxu0 %v1972
    %3637 = vmatprep.subr.mxu0 0.0
    %3638 = vmatpush1.msra.mxu0 %v1971
    %3639 = vmatprep.subr.mxu0 0.0
    %3640 = vmatpush2.msra.mxu0 0.0
    %3641 = vmatprep.subr.mxu0 0.0
    %3642 = vmatpush2.msra.mxu0 0.0
    %3643 = vmatprep.subr.mxu0 0.0
    %3644 = vmatpush2.msra.mxu0 0.0
    %3645 = vmatprep.subr.mxu0 0.0
    %3646 = vmatpush2.msra.mxu0 0.0
    %3647 = vmatprep.subr.mxu0 0.0
    %3648 = vmatpush2.msra.mxu0 0.0
    %3649 = vmatprep.subr.mxu0 0.0
    %3650 = vmatpush2.msra.mxu0 0.0
    %3651 = vmatprep.subr.mxu0 0.0
    %3652 = vmatpush2.msra.mxu0 0.0
    %3653 = vmatprep.subr.mxu0 0.0
    %3654 = vmatpush2.msra.mxu0 0.0
    %3655 = vmatprep.subr.mxu0 0.0
    %3656 = vmatpush2.msra.mxu0 0.0
    %3657 = vmatprep.subr.mxu0 0.0
    %3658 = vmatpush2.msra.mxu0 0.0
    %3659 = vmatprep.subr.mxu0 0.0
    %3660 = vmatpush2.msra.mxu0 0.0
    %3661 = vmatprep.subr.mxu0 0.0
    %3662 = vmatpush2.msra.mxu0 0.0
    %3663 = vmatprep.subr.mxu0 0.0
    %3664 = vmatpush2.msra.mxu0 0.0
    %3665 = vmatprep.subr.mxu0 0.0
    %3666 = vmatpush2.msra.mxu0 0.0
    %3667 = vmatprep.subr.mxu0 0.0
    %3668 = vmatpush2.msra.mxu0 0.0
    %3669 = vmatprep.subr.mxu0 0.0
    %3670 = vmatpush2.msra.mxu0 0.0
    %3671 = vmatprep.mubr.f32.mxu0 0.0
    %3672 = vmatmul.mubr.f32.gmra.mxu0 %v3605
    %v3673 = vpop.f32.mrf.mxu0
    %v3674 = vadd.f32 0.0, %v3673
    %v3675 = vpop.f32.mrf.mxu0
    %3676 = vdwg.mxu0
    %s3677 = scalar_lea.vmem %s5, 1280
    %v3678 = vld [vmem:[%s3677] sm:$0xff]
    %v3679 = vld [vmem:[%s3677 + $0x8] sm:$0xff]
    %v3680 = vld [vmem:[%s3677 + $0x10] sm:$0xff]
    %v3681 = vld [vmem:[%s3677 + $0x18] sm:$0xff]
    %v3682 = vld [vmem:[%s3677 + $0x20] sm:$0xff]
    %v3683 = vld [vmem:[%s3677 + $0x28] sm:$0xff]
    %v3684 = vld [vmem:[%s3677 + $0x30] sm:$0xff]
    %v3685 = vld [vmem:[%s3677 + $0x38] sm:$0xff]
    %v3686 = vld [vmem:[%s3677 + $0x40] sm:$0xff]
    %v3687 = vld [vmem:[%s3677 + $0x48] sm:$0xff]
    %v3688 = vld [vmem:[%s3677 + $0x50] sm:$0xff]
    %v3689 = vld [vmem:[%s3677 + $0x58] sm:$0xff]
    %v3690 = vld [vmem:[%s3677 + $0x60] sm:$0xff]
    %v3691 = vld [vmem:[%s3677 + $0x68] sm:$0xff]
    %v3692 = vld [vmem:[%s3677 + $0x70] sm:$0xff]
    %v3693 = vld [vmem:[%s3677 + $0x78] sm:$0xff]
    %3694 = vmatprep.subr.mxu0 0.0
    %3695 = vmatpush1.msra.mxu0 %v3693
    %3696 = vmatprep.subr.mxu0 0.0
    %3697 = vmatpush1.msra.mxu0 %v3692
    %3698 = vmatprep.subr.mxu0 0.0
    %3699 = vmatpush1.msra.mxu0 %v3691
    %3700 = vmatprep.subr.mxu0 0.0
    %3701 = vmatpush1.msra.mxu0 %v3690
    %3702 = vmatprep.subr.mxu0 0.0
    %3703 = vmatpush1.msra.mxu0 %v3689
    %3704 = vmatprep.subr.mxu0 0.0
    %3705 = vmatpush1.msra.mxu0 %v3688
    %3706 = vmatprep.subr.mxu0 0.0
    %3707 = vmatpush1.msra.mxu0 %v3687
    %3708 = vmatprep.subr.mxu0 0.0
    %3709 = vmatpush1.msra.mxu0 %v3686
    %3710 = vmatprep.subr.mxu0 0.0
    %3711 = vmatpush1.msra.mxu0 %v3685
    %3712 = vmatprep.subr.mxu0 0.0
    %3713 = vmatpush1.msra.mxu0 %v3684
    %3714 = vmatprep.subr.mxu0 0.0
    %3715 = vmatpush1.msra.mxu0 %v3683
    %3716 = vmatprep.subr.mxu0 0.0
    %3717 = vmatpush1.msra.mxu0 %v3682
    %3718 = vmatprep.subr.mxu0 0.0
    %3719 = vmatpush1.msra.mxu0 %v3681
    %3720 = vmatprep.subr.mxu0 0.0
    %3721 = vmatpush1.msra.mxu0 %v3680
    %3722 = vmatprep.subr.mxu0 0.0
    %3723 = vmatpush1.msra.mxu0 %v3679
    %3724 = vmatprep.subr.mxu0 0.0
    %3725 = vmatpush1.msra.mxu0 %v3678
    %3726 = vmatprep.subr.mxu0 0.0
    %3727 = vmatpush2.msra.mxu0 0.0
    %3728 = vmatprep.subr.mxu0 0.0
    %3729 = vmatpush2.msra.mxu0 0.0
    %3730 = vmatprep.subr.mxu0 0.0
    %3731 = vmatpush2.msra.mxu0 0.0
    %3732 = vmatprep.subr.mxu0 0.0
    %3733 = vmatpush2.msra.mxu0 0.0
    %3734 = vmatprep.subr.mxu0 0.0
    %3735 = vmatpush2.msra.mxu0 0.0
    %3736 = vmatprep.subr.mxu0 0.0
    %3737 = vmatpush2.msra.mxu0 0.0
    %3738 = vmatprep.subr.mxu0 0.0
    %3739 = vmatpush2.msra.mxu0 0.0
    %3740 = vmatprep.subr.mxu0 0.0
    %3741 = vmatpush2.msra.mxu0 0.0
    %3742 = vmatprep.subr.mxu0 0.0
    %3743 = vmatpush2.msra.mxu0 0.0
    %3744 = vmatprep.subr.mxu0 0.0
    %3745 = vmatpush2.msra.mxu0 0.0
    %3746 = vmatprep.subr.mxu0 0.0
    %3747 = vmatpush2.msra.mxu0 0.0
    %3748 = vmatprep.subr.mxu0 0.0
    %3749 = vmatpush2.msra.mxu0 0.0
    %3750 = vmatprep.subr.mxu0 0.0
    %3751 = vmatpush2.msra.mxu0 0.0
    %3752 = vmatprep.subr.mxu0 0.0
    %3753 = vmatpush2.msra.mxu0 0.0
    %3754 = vmatprep.subr.mxu0 0.0
    %3755 = vmatpush2.msra.mxu0 0.0
    %3756 = vmatprep.subr.mxu0 0.0
    %3757 = vmatpush2.msra.mxu0 0.0
    %3758 = vmatprep.mubr.f32.mxu0 0.0
    %3759 = vmatmul.mubr.f32.gmra.mxu0 %v3674
    %v3760 = vpop.f32.mrf.mxu0
    %v3761 = vadd.f32 0.0, %v3760
    %v3762 = vpop.f32.mrf.mxu0
    %3763 = vdwg.mxu0
    %v3764 = vadd.f32 %v3601, %v3761
    %s3765 = scalar_lea.vmem %s4, 22
    %v3766 = vld [vmem:[%s3765] sm:$0x3]
    %v3768 = vsel %vm1976, %v3766, 0
    %3770 = vmatprep.subr.mxu0 0.0
    %3771 = vmatpush1.msra.mxu0 0.0
    %3772 = vmatprep.subr.mxu0 0.0
    %3773 = vmatpush1.msra.mxu0 0.0
    %3774 = vmatprep.subr.mxu0 0.0
    %3775 = vmatpush1.msra.mxu0 0.0
    %3776 = vmatprep.subr.mxu0 0.0
    %3777 = vmatpush1.msra.mxu0 0.0
    %3778 = vmatprep.subr.mxu0 0.0
    %3779 = vmatpush1.msra.mxu0 0.0
    %3780 = vmatprep.subr.mxu0 0.0
    %3781 = vmatpush1.msra.mxu0 0.0
    %3782 = vmatprep.subr.mxu0 0.0
    %3783 = vmatpush1.msra.mxu0 0.0
    %3784 = vmatprep.subr.mxu0 0.0
    %3785 = vmatpush1.msra.mxu0 0.0
    %3786 = vmatprep.subr.mxu0 0.0
    %3787 = vmatpush1.msra.mxu0 0.0
    %3788 = vmatprep.subr.mxu0 0.0
    %3789 = vmatpush1.msra.mxu0 0.0
    %3790 = vmatprep.subr.mxu0 0.0
    %3791 = vmatpush1.msra.mxu0 0.0
    %3792 = vmatprep.subr.mxu0 0.0
    %3793 = vmatpush1.msra.mxu0 0.0
    %3794 = vmatprep.subr.mxu0 0.0
    %3795 = vmatpush1.msra.mxu0 %v1974
    %3796 = vmatprep.subr.mxu0 0.0
    %3797 = vmatpush1.msra.mxu0 %v1973
    %3798 = vmatprep.subr.mxu0 0.0
    %3799 = vmatpush1.msra.mxu0 %v1972
    %3800 = vmatprep.subr.mxu0 0.0
    %3801 = vmatpush1.msra.mxu0 %v1971
    %3802 = vmatprep.subr.mxu0 0.0
    %3803 = vmatpush2.msra.mxu0 0.0
    %3804 = vmatprep.subr.mxu0 0.0
    %3805 = vmatpush2.msra.mxu0 0.0
    %3806 = vmatprep.subr.mxu0 0.0
    %3807 = vmatpush2.msra.mxu0 0.0
    %3808 = vmatprep.subr.mxu0 0.0
    %3809 = vmatpush2.msra.mxu0 0.0
    %3810 = vmatprep.subr.mxu0 0.0
    %3811 = vmatpush2.msra.mxu0 0.0
    %3812 = vmatprep.subr.mxu0 0.0
    %3813 = vmatpush2.msra.mxu0 0.0
    %3814 = vmatprep.subr.mxu0 0.0
    %3815 = vmatpush2.msra.mxu0 0.0
    %3816 = vmatprep.subr.mxu0 0.0
    %3817 = vmatpush2.msra.mxu0 0.0
    %3818 = vmatprep.subr.mxu0 0.0
    %3819 = vmatpush2.msra.mxu0 0.0
    %3820 = vmatprep.subr.mxu0 0.0
    %3821 = vmatpush2.msra.mxu0 0.0
    %3822 = vmatprep.subr.mxu0 0.0
    %3823 = vmatpush2.msra.mxu0 0.0
    %3824 = vmatprep.subr.mxu0 0.0
    %3825 = vmatpush2.msra.mxu0 0.0
    %3826 = vmatprep.subr.mxu0 0.0
    %3827 = vmatpush2.msra.mxu0 0.0
    %3828 = vmatprep.subr.mxu0 0.0
    %3829 = vmatpush2.msra.mxu0 0.0
    %3830 = vmatprep.subr.mxu0 0.0
    %3831 = vmatpush2.msra.mxu0 0.0
    %3832 = vmatprep.subr.mxu0 0.0
    %3833 = vmatpush2.msra.mxu0 0.0
    %3834 = vmatprep.mubr.f32.mxu0 0.0
    %3835 = vmatmul.mubr.f32.gmra.mxu0 %v3768
    %v3836 = vpop.f32.mrf.mxu0
    %v3837 = vadd.f32 0.0, %v3836
    %v3838 = vpop.f32.mrf.mxu0
    %3839 = vdwg.mxu0
    %s3840 = scalar_lea.vmem %s5, 1408
    %v3841 = vld [vmem:[%s3840] sm:$0xff]
    %v3842 = vld [vmem:[%s3840 + $0x8] sm:$0xff]
    %v3843 = vld [vmem:[%s3840 + $0x10] sm:$0xff]
    %v3844 = vld [vmem:[%s3840 + $0x18] sm:$0xff]
    %v3845 = vld [vmem:[%s3840 + $0x20] sm:$0xff]
    %v3846 = vld [vmem:[%s3840 + $0x28] sm:$0xff]
    %v3847 = vld [vmem:[%s3840 + $0x30] sm:$0xff]
    %v3848 = vld [vmem:[%s3840 + $0x38] sm:$0xff]
    %v3849 = vld [vmem:[%s3840 + $0x40] sm:$0xff]
    %v3850 = vld [vmem:[%s3840 + $0x48] sm:$0xff]
    %v3851 = vld [vmem:[%s3840 + $0x50] sm:$0xff]
    %v3852 = vld [vmem:[%s3840 + $0x58] sm:$0xff]
    %v3853 = vld [vmem:[%s3840 + $0x60] sm:$0xff]
    %v3854 = vld [vmem:[%s3840 + $0x68] sm:$0xff]
    %v3855 = vld [vmem:[%s3840 + $0x70] sm:$0xff]
    %v3856 = vld [vmem:[%s3840 + $0x78] sm:$0xff]
    %3857 = vmatprep.subr.mxu0 0.0
    %3858 = vmatpush1.msra.mxu0 %v3856
    %3859 = vmatprep.subr.mxu0 0.0
    %3860 = vmatpush1.msra.mxu0 %v3855
    %3861 = vmatprep.subr.mxu0 0.0
    %3862 = vmatpush1.msra.mxu0 %v3854
    %3863 = vmatprep.subr.mxu0 0.0
    %3864 = vmatpush1.msra.mxu0 %v3853
    %3865 = vmatprep.subr.mxu0 0.0
    %3866 = vmatpush1.msra.mxu0 %v3852
    %3867 = vmatprep.subr.mxu0 0.0
    %3868 = vmatpush1.msra.mxu0 %v3851
    %3869 = vmatprep.subr.mxu0 0.0
    %3870 = vmatpush1.msra.mxu0 %v3850
    %3871 = vmatprep.subr.mxu0 0.0
    %3872 = vmatpush1.msra.mxu0 %v3849
    %3873 = vmatprep.subr.mxu0 0.0
    %3874 = vmatpush1.msra.mxu0 %v3848
    %3875 = vmatprep.subr.mxu0 0.0
    %3876 = vmatpush1.msra.mxu0 %v3847
    %3877 = vmatprep.subr.mxu0 0.0
    %3878 = vmatpush1.msra.mxu0 %v3846
    %3879 = vmatprep.subr.mxu0 0.0
    %3880 = vmatpush1.msra.mxu0 %v3845
    %3881 = vmatprep.subr.mxu0 0.0
    %3882 = vmatpush1.msra.mxu0 %v3844
    %3883 = vmatprep.subr.mxu0 0.0
    %3884 = vmatpush1.msra.mxu0 %v3843
    %3885 = vmatprep.subr.mxu0 0.0
    %3886 = vmatpush1.msra.mxu0 %v3842
    %3887 = vmatprep.subr.mxu0 0.0
    %3888 = vmatpush1.msra.mxu0 %v3841
    %3889 = vmatprep.subr.mxu0 0.0
    %3890 = vmatpush2.msra.mxu0 0.0
    %3891 = vmatprep.subr.mxu0 0.0
    %3892 = vmatpush2.msra.mxu0 0.0
    %3893 = vmatprep.subr.mxu0 0.0
    %3894 = vmatpush2.msra.mxu0 0.0
    %3895 = vmatprep.subr.mxu0 0.0
    %3896 = vmatpush2.msra.mxu0 0.0
    %3897 = vmatprep.subr.mxu0 0.0
    %3898 = vmatpush2.msra.mxu0 0.0
    %3899 = vmatprep.subr.mxu0 0.0
    %3900 = vmatpush2.msra.mxu0 0.0
    %3901 = vmatprep.subr.mxu0 0.0
    %3902 = vmatpush2.msra.mxu0 0.0
    %3903 = vmatprep.subr.mxu0 0.0
    %3904 = vmatpush2.msra.mxu0 0.0
    %3905 = vmatprep.subr.mxu0 0.0
    %3906 = vmatpush2.msra.mxu0 0.0
    %3907 = vmatprep.subr.mxu0 0.0
    %3908 = vmatpush2.msra.mxu0 0.0
    %3909 = vmatprep.subr.mxu0 0.0
    %3910 = vmatpush2.msra.mxu0 0.0
    %3911 = vmatprep.subr.mxu0 0.0
    %3912 = vmatpush2.msra.mxu0 0.0
    %3913 = vmatprep.subr.mxu0 0.0
    %3914 = vmatpush2.msra.mxu0 0.0
    %3915 = vmatprep.subr.mxu0 0.0
    %3916 = vmatpush2.msra.mxu0 0.0
    %3917 = vmatprep.subr.mxu0 0.0
    %3918 = vmatpush2.msra.mxu0 0.0
    %3919 = vmatprep.subr.mxu0 0.0
    %3920 = vmatpush2.msra.mxu0 0.0
    %3921 = vmatprep.mubr.f32.mxu0 0.0
    %3922 = vmatmul.mubr.f32.gmra.mxu0 %v3837
    %v3923 = vpop.f32.mrf.mxu0
    %v3924 = vadd.f32 0.0, %v3923
    %v3925 = vpop.f32.mrf.mxu0
    %3926 = vdwg.mxu0
    %v3927 = vadd.f32 %v3764, %v3924
    %s3928 = scalar_lea.vmem %s4, 24
    %v3929 = vld [vmem:[%s3928] sm:$0x3]
    %v3931 = vsel %vm1976, %v3929, 0
    %3933 = vmatprep.subr.mxu0 0.0
    %3934 = vmatpush1.msra.mxu0 0.0
    %3935 = vmatprep.subr.mxu0 0.0
    %3936 = vmatpush1.msra.mxu0 0.0
    %3937 = vmatprep.subr.mxu0 0.0
    %3938 = vmatpush1.msra.mxu0 0.0
    %3939 = vmatprep.subr.mxu0 0.0
    %3940 = vmatpush1.msra.mxu0 0.0
    %3941 = vmatprep.subr.mxu0 0.0
    %3942 = vmatpush1.msra.mxu0 0.0
    %3943 = vmatprep.subr.mxu0 0.0
    %3944 = vmatpush1.msra.mxu0 0.0
    %3945 = vmatprep.subr.mxu0 0.0
    %3946 = vmatpush1.msra.mxu0 0.0
    %3947 = vmatprep.subr.mxu0 0.0
    %3948 = vmatpush1.msra.mxu0 0.0
    %3949 = vmatprep.subr.mxu0 0.0
    %3950 = vmatpush1.msra.mxu0 0.0
    %3951 = vmatprep.subr.mxu0 0.0
    %3952 = vmatpush1.msra.mxu0 0.0
    %3953 = vmatprep.subr.mxu0 0.0
    %3954 = vmatpush1.msra.mxu0 0.0
    %3955 = vmatprep.subr.mxu0 0.0
    %3956 = vmatpush1.msra.mxu0 0.0
    %3957 = vmatprep.subr.mxu0 0.0
    %3958 = vmatpush1.msra.mxu0 %v1974
    %3959 = vmatprep.subr.mxu0 0.0
    %3960 = vmatpush1.msra.mxu0 %v1973
    %3961 = vmatprep.subr.mxu0 0.0
    %3962 = vmatpush1.msra.mxu0 %v1972
    %3963 = vmatprep.subr.mxu0 0.0
    %3964 = vmatpush1.msra.mxu0 %v1971
    %3965 = vmatprep.subr.mxu0 0.0
    %3966 = vmatpush2.msra.mxu0 0.0
    %3967 = vmatprep.subr.mxu0 0.0
    %3968 = vmatpush2.msra.mxu0 0.0
    %3969 = vmatprep.subr.mxu0 0.0
    %3970 = vmatpush2.msra.mxu0 0.0
    %3971 = vmatprep.subr.mxu0 0.0
    %3972 = vmatpush2.msra.mxu0 0.0
    %3973 = vmatprep.subr.mxu0 0.0
    %3974 = vmatpush2.msra.mxu0 0.0
    %3975 = vmatprep.subr.mxu0 0.0
    %3976 = vmatpush2.msra.mxu0 0.0
    %3977 = vmatprep.subr.mxu0 0.0
    %3978 = vmatpush2.msra.mxu0 0.0
    %3979 = vmatprep.subr.mxu0 0.0
    %3980 = vmatpush2.msra.mxu0 0.0
    %3981 = vmatprep.subr.mxu0 0.0
    %3982 = vmatpush2.msra.mxu0 0.0
    %3983 = vmatprep.subr.mxu0 0.0
    %3984 = vmatpush2.msra.mxu0 0.0
    %3985 = vmatprep.subr.mxu0 0.0
    %3986 = vmatpush2.msra.mxu0 0.0
    %3987 = vmatprep.subr.mxu0 0.0
    %3988 = vmatpush2.msra.mxu0 0.0
    %3989 = vmatprep.subr.mxu0 0.0
    %3990 = vmatpush2.msra.mxu0 0.0
    %3991 = vmatprep.subr.mxu0 0.0
    %3992 = vmatpush2.msra.mxu0 0.0
    %3993 = vmatprep.subr.mxu0 0.0
    %3994 = vmatpush2.msra.mxu0 0.0
    %3995 = vmatprep.subr.mxu0 0.0
    %3996 = vmatpush2.msra.mxu0 0.0
    %3997 = vmatprep.mubr.f32.mxu0 0.0
    %3998 = vmatmul.mubr.f32.gmra.mxu0 %v3931
    %v3999 = vpop.f32.mrf.mxu0
    %v4000 = vadd.f32 0.0, %v3999
    %v4001 = vpop.f32.mrf.mxu0
    %4002 = vdwg.mxu0
    %s4003 = scalar_lea.vmem %s5, 1536
    %v4004 = vld [vmem:[%s4003] sm:$0xff]
    %v4005 = vld [vmem:[%s4003 + $0x8] sm:$0xff]
    %v4006 = vld [vmem:[%s4003 + $0x10] sm:$0xff]
    %v4007 = vld [vmem:[%s4003 + $0x18] sm:$0xff]
    %v4008 = vld [vmem:[%s4003 + $0x20] sm:$0xff]
    %v4009 = vld [vmem:[%s4003 + $0x28] sm:$0xff]
    %v4010 = vld [vmem:[%s4003 + $0x30] sm:$0xff]
    %v4011 = vld [vmem:[%s4003 + $0x38] sm:$0xff]
    %v4012 = vld [vmem:[%s4003 + $0x40] sm:$0xff]
    %v4013 = vld [vmem:[%s4003 + $0x48] sm:$0xff]
    %v4014 = vld [vmem:[%s4003 + $0x50] sm:$0xff]
    %v4015 = vld [vmem:[%s4003 + $0x58] sm:$0xff]
    %v4016 = vld [vmem:[%s4003 + $0x60] sm:$0xff]
    %v4017 = vld [vmem:[%s4003 + $0x68] sm:$0xff]
    %v4018 = vld [vmem:[%s4003 + $0x70] sm:$0xff]
    %v4019 = vld [vmem:[%s4003 + $0x78] sm:$0xff]
    %4020 = vmatprep.subr.mxu0 0.0
    %4021 = vmatpush1.msra.mxu0 %v4019
    %4022 = vmatprep.subr.mxu0 0.0
    %4023 = vmatpush1.msra.mxu0 %v4018
    %4024 = vmatprep.subr.mxu0 0.0
    %4025 = vmatpush1.msra.mxu0 %v4017
    %4026 = vmatprep.subr.mxu0 0.0
    %4027 = vmatpush1.msra.mxu0 %v4016
    %4028 = vmatprep.subr.mxu0 0.0
    %4029 = vmatpush1.msra.mxu0 %v4015
    %4030 = vmatprep.subr.mxu0 0.0
    %4031 = vmatpush1.msra.mxu0 %v4014
    %4032 = vmatprep.subr.mxu0 0.0
    %4033 = vmatpush1.msra.mxu0 %v4013
    %4034 = vmatprep.subr.mxu0 0.0
    %4035 = vmatpush1.msra.mxu0 %v4012
    %4036 = vmatprep.subr.mxu0 0.0
    %4037 = vmatpush1.msra.mxu0 %v4011
    %4038 = vmatprep.subr.mxu0 0.0
    %4039 = vmatpush1.msra.mxu0 %v4010
    %4040 = vmatprep.subr.mxu0 0.0
    %4041 = vmatpush1.msra.mxu0 %v4009
    %4042 = vmatprep.subr.mxu0 0.0
    %4043 = vmatpush1.msra.mxu0 %v4008
    %4044 = vmatprep.subr.mxu0 0.0
    %4045 = vmatpush1.msra.mxu0 %v4007
    %4046 = vmatprep.subr.mxu0 0.0
    %4047 = vmatpush1.msra.mxu0 %v4006
    %4048 = vmatprep.subr.mxu0 0.0
    %4049 = vmatpush1.msra.mxu0 %v4005
    %4050 = vmatprep.subr.mxu0 0.0
    %4051 = vmatpush1.msra.mxu0 %v4004
    %4052 = vmatprep.subr.mxu0 0.0
    %4053 = vmatpush2.msra.mxu0 0.0
    %4054 = vmatprep.subr.mxu0 0.0
    %4055 = vmatpush2.msra.mxu0 0.0
    %4056 = vmatprep.subr.mxu0 0.0
    %4057 = vmatpush2.msra.mxu0 0.0
    %4058 = vmatprep.subr.mxu0 0.0
    %4059 = vmatpush2.msra.mxu0 0.0
    %4060 = vmatprep.subr.mxu0 0.0
    %4061 = vmatpush2.msra.mxu0 0.0
    %4062 = vmatprep.subr.mxu0 0.0
    %4063 = vmatpush2.msra.mxu0 0.0
    %4064 = vmatprep.subr.mxu0 0.0
    %4065 = vmatpush2.msra.mxu0 0.0
    %4066 = vmatprep.subr.mxu0 0.0
    %4067 = vmatpush2.msra.mxu0 0.0
    %4068 = vmatprep.subr.mxu0 0.0
    %4069 = vmatpush2.msra.mxu0 0.0
    %4070 = vmatprep.subr.mxu0 0.0
    %4071 = vmatpush2.msra.mxu0 0.0
    %4072 = vmatprep.subr.mxu0 0.0
    %4073 = vmatpush2.msra.mxu0 0.0
    %4074 = vmatprep.subr.mxu0 0.0
    %4075 = vmatpush2.msra.mxu0 0.0
    %4076 = vmatprep.subr.mxu0 0.0
    %4077 = vmatpush2.msra.mxu0 0.0
    %4078 = vmatprep.subr.mxu0 0.0
    %4079 = vmatpush2.msra.mxu0 0.0
    %4080 = vmatprep.subr.mxu0 0.0
    %4081 = vmatpush2.msra.mxu0 0.0
    %4082 = vmatprep.subr.mxu0 0.0
    %4083 = vmatpush2.msra.mxu0 0.0
    %4084 = vmatprep.mubr.f32.mxu0 0.0
    %4085 = vmatmul.mubr.f32.gmra.mxu0 %v4000
    %v4086 = vpop.f32.mrf.mxu0
    %v4087 = vadd.f32 0.0, %v4086
    %v4088 = vpop.f32.mrf.mxu0
    %4089 = vdwg.mxu0
    %v4090 = vadd.f32 %v3927, %v4087
    %s4091 = scalar_lea.vmem %s4, 26
    %v4092 = vld [vmem:[%s4091] sm:$0x3]
    %v4094 = vsel %vm1976, %v4092, 0
    %4096 = vmatprep.subr.mxu0 0.0
    %4097 = vmatpush1.msra.mxu0 0.0
    %4098 = vmatprep.subr.mxu0 0.0
    %4099 = vmatpush1.msra.mxu0 0.0
    %4100 = vmatprep.subr.mxu0 0.0
    %4101 = vmatpush1.msra.mxu0 0.0
    %4102 = vmatprep.subr.mxu0 0.0
    %4103 = vmatpush1.msra.mxu0 0.0
    %4104 = vmatprep.subr.mxu0 0.0
    %4105 = vmatpush1.msra.mxu0 0.0
    %4106 = vmatprep.subr.mxu0 0.0
    %4107 = vmatpush1.msra.mxu0 0.0
    %4108 = vmatprep.subr.mxu0 0.0
    %4109 = vmatpush1.msra.mxu0 0.0
    %4110 = vmatprep.subr.mxu0 0.0
    %4111 = vmatpush1.msra.mxu0 0.0
    %4112 = vmatprep.subr.mxu0 0.0
    %4113 = vmatpush1.msra.mxu0 0.0
    %4114 = vmatprep.subr.mxu0 0.0
    %4115 = vmatpush1.msra.mxu0 0.0
    %4116 = vmatprep.subr.mxu0 0.0
    %4117 = vmatpush1.msra.mxu0 0.0
    %4118 = vmatprep.subr.mxu0 0.0
    %4119 = vmatpush1.msra.mxu0 0.0
    %4120 = vmatprep.subr.mxu0 0.0
    %4121 = vmatpush1.msra.mxu0 %v1974
    %4122 = vmatprep.subr.mxu0 0.0
    %4123 = vmatpush1.msra.mxu0 %v1973
    %4124 = vmatprep.subr.mxu0 0.0
    %4125 = vmatpush1.msra.mxu0 %v1972
    %4126 = vmatprep.subr.mxu0 0.0
    %4127 = vmatpush1.msra.mxu0 %v1971
    %4128 = vmatprep.subr.mxu0 0.0
    %4129 = vmatpush2.msra.mxu0 0.0
    %4130 = vmatprep.subr.mxu0 0.0
    %4131 = vmatpush2.msra.mxu0 0.0
    %4132 = vmatprep.subr.mxu0 0.0
    %4133 = vmatpush2.msra.mxu0 0.0
    %4134 = vmatprep.subr.mxu0 0.0
    %4135 = vmatpush2.msra.mxu0 0.0
    %4136 = vmatprep.subr.mxu0 0.0
    %4137 = vmatpush2.msra.mxu0 0.0
    %4138 = vmatprep.subr.mxu0 0.0
    %4139 = vmatpush2.msra.mxu0 0.0
    %4140 = vmatprep.subr.mxu0 0.0
    %4141 = vmatpush2.msra.mxu0 0.0
    %4142 = vmatprep.subr.mxu0 0.0
    %4143 = vmatpush2.msra.mxu0 0.0
    %4144 = vmatprep.subr.mxu0 0.0
    %4145 = vmatpush2.msra.mxu0 0.0
    %4146 = vmatprep.subr.mxu0 0.0
    %4147 = vmatpush2.msra.mxu0 0.0
    %4148 = vmatprep.subr.mxu0 0.0
    %4149 = vmatpush2.msra.mxu0 0.0
    %4150 = vmatprep.subr.mxu0 0.0
    %4151 = vmatpush2.msra.mxu0 0.0
    %4152 = vmatprep.subr.mxu0 0.0
    %4153 = vmatpush2.msra.mxu0 0.0
    %4154 = vmatprep.subr.mxu0 0.0
    %4155 = vmatpush2.msra.mxu0 0.0
    %4156 = vmatprep.subr.mxu0 0.0
    %4157 = vmatpush2.msra.mxu0 0.0
    %4158 = vmatprep.subr.mxu0 0.0
    %4159 = vmatpush2.msra.mxu0 0.0
    %4160 = vmatprep.mubr.f32.mxu0 0.0
    %4161 = vmatmul.mubr.f32.gmra.mxu0 %v4094
    %v4162 = vpop.f32.mrf.mxu0
    %v4163 = vadd.f32 0.0, %v4162
    %v4164 = vpop.f32.mrf.mxu0
    %4165 = vdwg.mxu0
    %s4166 = scalar_lea.vmem %s5, 1664
    %v4167 = vld [vmem:[%s4166] sm:$0xff]
    %v4168 = vld [vmem:[%s4166 + $0x8] sm:$0xff]
    %v4169 = vld [vmem:[%s4166 + $0x10] sm:$0xff]
    %v4170 = vld [vmem:[%s4166 + $0x18] sm:$0xff]
    %v4171 = vld [vmem:[%s4166 + $0x20] sm:$0xff]
    %v4172 = vld [vmem:[%s4166 + $0x28] sm:$0xff]
    %v4173 = vld [vmem:[%s4166 + $0x30] sm:$0xff]
    %v4174 = vld [vmem:[%s4166 + $0x38] sm:$0xff]
    %v4175 = vld [vmem:[%s4166 + $0x40] sm:$0xff]
    %v4176 = vld [vmem:[%s4166 + $0x48] sm:$0xff]
    %v4177 = vld [vmem:[%s4166 + $0x50] sm:$0xff]
    %v4178 = vld [vmem:[%s4166 + $0x58] sm:$0xff]
    %v4179 = vld [vmem:[%s4166 + $0x60] sm:$0xff]
    %v4180 = vld [vmem:[%s4166 + $0x68] sm:$0xff]
    %v4181 = vld [vmem:[%s4166 + $0x70] sm:$0xff]
    %v4182 = vld [vmem:[%s4166 + $0x78] sm:$0xff]
    %4183 = vmatprep.subr.mxu0 0.0
    %4184 = vmatpush1.msra.mxu0 %v4182
    %4185 = vmatprep.subr.mxu0 0.0
    %4186 = vmatpush1.msra.mxu0 %v4181
    %4187 = vmatprep.subr.mxu0 0.0
    %4188 = vmatpush1.msra.mxu0 %v4180
    %4189 = vmatprep.subr.mxu0 0.0
    %4190 = vmatpush1.msra.mxu0 %v4179
    %4191 = vmatprep.subr.mxu0 0.0
    %4192 = vmatpush1.msra.mxu0 %v4178
    %4193 = vmatprep.subr.mxu0 0.0
    %4194 = vmatpush1.msra.mxu0 %v4177
    %4195 = vmatprep.subr.mxu0 0.0
    %4196 = vmatpush1.msra.mxu0 %v4176
    %4197 = vmatprep.subr.mxu0 0.0
    %4198 = vmatpush1.msra.mxu0 %v4175
    %4199 = vmatprep.subr.mxu0 0.0
    %4200 = vmatpush1.msra.mxu0 %v4174
    %4201 = vmatprep.subr.mxu0 0.0
    %4202 = vmatpush1.msra.mxu0 %v4173
    %4203 = vmatprep.subr.mxu0 0.0
    %4204 = vmatpush1.msra.mxu0 %v4172
    %4205 = vmatprep.subr.mxu0 0.0
    %4206 = vmatpush1.msra.mxu0 %v4171
    %4207 = vmatprep.subr.mxu0 0.0
    %4208 = vmatpush1.msra.mxu0 %v4170
    %4209 = vmatprep.subr.mxu0 0.0
    %4210 = vmatpush1.msra.mxu0 %v4169
    %4211 = vmatprep.subr.mxu0 0.0
    %4212 = vmatpush1.msra.mxu0 %v4168
    %4213 = vmatprep.subr.mxu0 0.0
    %4214 = vmatpush1.msra.mxu0 %v4167
    %4215 = vmatprep.subr.mxu0 0.0
    %4216 = vmatpush2.msra.mxu0 0.0
    %4217 = vmatprep.subr.mxu0 0.0
    %4218 = vmatpush2.msra.mxu0 0.0
    %4219 = vmatprep.subr.mxu0 0.0
    %4220 = vmatpush2.msra.mxu0 0.0
    %4221 = vmatprep.subr.mxu0 0.0
    %4222 = vmatpush2.msra.mxu0 0.0
    %4223 = vmatprep.subr.mxu0 0.0
    %4224 = vmatpush2.msra.mxu0 0.0
    %4225 = vmatprep.subr.mxu0 0.0
    %4226 = vmatpush2.msra.mxu0 0.0
    %4227 = vmatprep.subr.mxu0 0.0
    %4228 = vmatpush2.msra.mxu0 0.0
    %4229 = vmatprep.subr.mxu0 0.0
    %4230 = vmatpush2.msra.mxu0 0.0
    %4231 = vmatprep.subr.mxu0 0.0
    %4232 = vmatpush2.msra.mxu0 0.0
    %4233 = vmatprep.subr.mxu0 0.0
    %4234 = vmatpush2.msra.mxu0 0.0
    %4235 = vmatprep.subr.mxu0 0.0
    %4236 = vmatpush2.msra.mxu0 0.0
    %4237 = vmatprep.subr.mxu0 0.0
    %4238 = vmatpush2.msra.mxu0 0.0
    %4239 = vmatprep.subr.mxu0 0.0
    %4240 = vmatpush2.msra.mxu0 0.0
    %4241 = vmatprep.subr.mxu0 0.0
    %4242 = vmatpush2.msra.mxu0 0.0
    %4243 = vmatprep.subr.mxu0 0.0
    %4244 = vmatpush2.msra.mxu0 0.0
    %4245 = vmatprep.subr.mxu0 0.0
    %4246 = vmatpush2.msra.mxu0 0.0
    %4247 = vmatprep.mubr.f32.mxu0 0.0
    %4248 = vmatmul.mubr.f32.gmra.mxu0 %v4163
    %v4249 = vpop.f32.mrf.mxu0
    %v4250 = vadd.f32 0.0, %v4249
    %v4251 = vpop.f32.mrf.mxu0
    %4252 = vdwg.mxu0
    %v4253 = vadd.f32 %v4090, %v4250
    %s4254 = scalar_lea.vmem %s4, 28
    %v4255 = vld [vmem:[%s4254] sm:$0x3]
    %v4257 = vsel %vm1976, %v4255, 0
    %4259 = vmatprep.subr.mxu0 0.0
    %4260 = vmatpush1.msra.mxu0 0.0
    %4261 = vmatprep.subr.mxu0 0.0
    %4262 = vmatpush1.msra.mxu0 0.0
    %4263 = vmatprep.subr.mxu0 0.0
    %4264 = vmatpush1.msra.mxu0 0.0
    %4265 = vmatprep.subr.mxu0 0.0
    %4266 = vmatpush1.msra.mxu0 0.0
    %4267 = vmatprep.subr.mxu0 0.0
    %4268 = vmatpush1.msra.mxu0 0.0
    %4269 = vmatprep.subr.mxu0 0.0
    %4270 = vmatpush1.msra.mxu0 0.0
    %4271 = vmatprep.subr.mxu0 0.0
    %4272 = vmatpush1.msra.mxu0 0.0
    %4273 = vmatprep.subr.mxu0 0.0
    %4274 = vmatpush1.msra.mxu0 0.0
    %4275 = vmatprep.subr.mxu0 0.0
    %4276 = vmatpush1.msra.mxu0 0.0
    %4277 = vmatprep.subr.mxu0 0.0
    %4278 = vmatpush1.msra.mxu0 0.0
    %4279 = vmatprep.subr.mxu0 0.0
    %4280 = vmatpush1.msra.mxu0 0.0
    %4281 = vmatprep.subr.mxu0 0.0
    %4282 = vmatpush1.msra.mxu0 0.0
    %4283 = vmatprep.subr.mxu0 0.0
    %4284 = vmatpush1.msra.mxu0 %v1974
    %4285 = vmatprep.subr.mxu0 0.0
    %4286 = vmatpush1.msra.mxu0 %v1973
    %4287 = vmatprep.subr.mxu0 0.0
    %4288 = vmatpush1.msra.mxu0 %v1972
    %4289 = vmatprep.subr.mxu0 0.0
    %4290 = vmatpush1.msra.mxu0 %v1971
    %4291 = vmatprep.subr.mxu0 0.0
    %4292 = vmatpush2.msra.mxu0 0.0
    %4293 = vmatprep.subr.mxu0 0.0
    %4294 = vmatpush2.msra.mxu0 0.0
    %4295 = vmatprep.subr.mxu0 0.0
    %4296 = vmatpush2.msra.mxu0 0.0
    %4297 = vmatprep.subr.mxu0 0.0
    %4298 = vmatpush2.msra.mxu0 0.0
    %4299 = vmatprep.subr.mxu0 0.0
    %4300 = vmatpush2.msra.mxu0 0.0
    %4301 = vmatprep.subr.mxu0 0.0
    %4302 = vmatpush2.msra.mxu0 0.0
    %4303 = vmatprep.subr.mxu0 0.0
    %4304 = vmatpush2.msra.mxu0 0.0
    %4305 = vmatprep.subr.mxu0 0.0
    %4306 = vmatpush2.msra.mxu0 0.0
    %4307 = vmatprep.subr.mxu0 0.0
    %4308 = vmatpush2.msra.mxu0 0.0
    %4309 = vmatprep.subr.mxu0 0.0
    %4310 = vmatpush2.msra.mxu0 0.0
    %4311 = vmatprep.subr.mxu0 0.0
    %4312 = vmatpush2.msra.mxu0 0.0
    %4313 = vmatprep.subr.mxu0 0.0
    %4314 = vmatpush2.msra.mxu0 0.0
    %4315 = vmatprep.subr.mxu0 0.0
    %4316 = vmatpush2.msra.mxu0 0.0
    %4317 = vmatprep.subr.mxu0 0.0
    %4318 = vmatpush2.msra.mxu0 0.0
    %4319 = vmatprep.subr.mxu0 0.0
    %4320 = vmatpush2.msra.mxu0 0.0
    %4321 = vmatprep.subr.mxu0 0.0
    %4322 = vmatpush2.msra.mxu0 0.0
    %4323 = vmatprep.mubr.f32.mxu0 0.0
    %4324 = vmatmul.mubr.f32.gmra.mxu0 %v4257
    %v4325 = vpop.f32.mrf.mxu0
    %v4326 = vadd.f32 0.0, %v4325
    %v4327 = vpop.f32.mrf.mxu0
    %4328 = vdwg.mxu0
    %s4329 = scalar_lea.vmem %s5, 1792
    %v4330 = vld [vmem:[%s4329] sm:$0xff]
    %v4331 = vld [vmem:[%s4329 + $0x8] sm:$0xff]
    %v4332 = vld [vmem:[%s4329 + $0x10] sm:$0xff]
    %v4333 = vld [vmem:[%s4329 + $0x18] sm:$0xff]
    %v4334 = vld [vmem:[%s4329 + $0x20] sm:$0xff]
    %v4335 = vld [vmem:[%s4329 + $0x28] sm:$0xff]
    %v4336 = vld [vmem:[%s4329 + $0x30] sm:$0xff]
    %v4337 = vld [vmem:[%s4329 + $0x38] sm:$0xff]
    %v4338 = vld [vmem:[%s4329 + $0x40] sm:$0xff]
    %v4339 = vld [vmem:[%s4329 + $0x48] sm:$0xff]
    %v4340 = vld [vmem:[%s4329 + $0x50] sm:$0xff]
    %v4341 = vld [vmem:[%s4329 + $0x58] sm:$0xff]
    %v4342 = vld [vmem:[%s4329 + $0x60] sm:$0xff]
    %v4343 = vld [vmem:[%s4329 + $0x68] sm:$0xff]
    %v4344 = vld [vmem:[%s4329 + $0x70] sm:$0xff]
    %v4345 = vld [vmem:[%s4329 + $0x78] sm:$0xff]
    %4346 = vmatprep.subr.mxu0 0.0
    %4347 = vmatpush1.msra.mxu0 %v4345
    %4348 = vmatprep.subr.mxu0 0.0
    %4349 = vmatpush1.msra.mxu0 %v4344
    %4350 = vmatprep.subr.mxu0 0.0
    %4351 = vmatpush1.msra.mxu0 %v4343
    %4352 = vmatprep.subr.mxu0 0.0
    %4353 = vmatpush1.msra.mxu0 %v4342
    %4354 = vmatprep.subr.mxu0 0.0
    %4355 = vmatpush1.msra.mxu0 %v4341
    %4356 = vmatprep.subr.mxu0 0.0
    %4357 = vmatpush1.msra.mxu0 %v4340
    %4358 = vmatprep.subr.mxu0 0.0
    %4359 = vmatpush1.msra.mxu0 %v4339
    %4360 = vmatprep.subr.mxu0 0.0
    %4361 = vmatpush1.msra.mxu0 %v4338
    %4362 = vmatprep.subr.mxu0 0.0
    %4363 = vmatpush1.msra.mxu0 %v4337
    %4364 = vmatprep.subr.mxu0 0.0
    %4365 = vmatpush1.msra.mxu0 %v4336
    %4366 = vmatprep.subr.mxu0 0.0
    %4367 = vmatpush1.msra.mxu0 %v4335
    %4368 = vmatprep.subr.mxu0 0.0
    %4369 = vmatpush1.msra.mxu0 %v4334
    %4370 = vmatprep.subr.mxu0 0.0
    %4371 = vmatpush1.msra.mxu0 %v4333
    %4372 = vmatprep.subr.mxu0 0.0
    %4373 = vmatpush1.msra.mxu0 %v4332
    %4374 = vmatprep.subr.mxu0 0.0
    %4375 = vmatpush1.msra.mxu0 %v4331
    %4376 = vmatprep.subr.mxu0 0.0
    %4377 = vmatpush1.msra.mxu0 %v4330
    %4378 = vmatprep.subr.mxu0 0.0
    %4379 = vmatpush2.msra.mxu0 0.0
    %4380 = vmatprep.subr.mxu0 0.0
    %4381 = vmatpush2.msra.mxu0 0.0
    %4382 = vmatprep.subr.mxu0 0.0
    %4383 = vmatpush2.msra.mxu0 0.0
    %4384 = vmatprep.subr.mxu0 0.0
    %4385 = vmatpush2.msra.mxu0 0.0
    %4386 = vmatprep.subr.mxu0 0.0
    %4387 = vmatpush2.msra.mxu0 0.0
    %4388 = vmatprep.subr.mxu0 0.0
    %4389 = vmatpush2.msra.mxu0 0.0
    %4390 = vmatprep.subr.mxu0 0.0
    %4391 = vmatpush2.msra.mxu0 0.0
    %4392 = vmatprep.subr.mxu0 0.0
    %4393 = vmatpush2.msra.mxu0 0.0
    %4394 = vmatprep.subr.mxu0 0.0
    %4395 = vmatpush2.msra.mxu0 0.0
    %4396 = vmatprep.subr.mxu0 0.0
    %4397 = vmatpush2.msra.mxu0 0.0
    %4398 = vmatprep.subr.mxu0 0.0
    %4399 = vmatpush2.msra.mxu0 0.0
    %4400 = vmatprep.subr.mxu0 0.0
    %4401 = vmatpush2.msra.mxu0 0.0
    %4402 = vmatprep.subr.mxu0 0.0
    %4403 = vmatpush2.msra.mxu0 0.0
    %4404 = vmatprep.subr.mxu0 0.0
    %4405 = vmatpush2.msra.mxu0 0.0
    %4406 = vmatprep.subr.mxu0 0.0
    %4407 = vmatpush2.msra.mxu0 0.0
    %4408 = vmatprep.subr.mxu0 0.0
    %4409 = vmatpush2.msra.mxu0 0.0
    %4410 = vmatprep.mubr.f32.mxu0 0.0
    %4411 = vmatmul.mubr.f32.gmra.mxu0 %v4326
    %v4412 = vpop.f32.mrf.mxu0
    %v4413 = vadd.f32 0.0, %v4412
    %v4414 = vpop.f32.mrf.mxu0
    %4415 = vdwg.mxu0
    %v4416 = vadd.f32 %v4253, %v4413
    %s4417 = scalar_lea.vmem %s4, 30
    %v4418 = vld [vmem:[%s4417] sm:$0x3]
    %v4420 = vsel %vm1976, %v4418, 0
    %4422 = vmatprep.subr.mxu0 0.0
    %4423 = vmatpush1.msra.mxu0 0.0
    %4424 = vmatprep.subr.mxu0 0.0
    %4425 = vmatpush1.msra.mxu0 0.0
    %4426 = vmatprep.subr.mxu0 0.0
    %4427 = vmatpush1.msra.mxu0 0.0
    %4428 = vmatprep.subr.mxu0 0.0
    %4429 = vmatpush1.msra.mxu0 0.0
    %4430 = vmatprep.subr.mxu0 0.0
    %4431 = vmatpush1.msra.mxu0 0.0
    %4432 = vmatprep.subr.mxu0 0.0
    %4433 = vmatpush1.msra.mxu0 0.0
    %4434 = vmatprep.subr.mxu0 0.0
    %4435 = vmatpush1.msra.mxu0 0.0
    %4436 = vmatprep.subr.mxu0 0.0
    %4437 = vmatpush1.msra.mxu0 0.0
    %4438 = vmatprep.subr.mxu0 0.0
    %4439 = vmatpush1.msra.mxu0 0.0
    %4440 = vmatprep.subr.mxu0 0.0
    %4441 = vmatpush1.msra.mxu0 0.0
    %4442 = vmatprep.subr.mxu0 0.0
    %4443 = vmatpush1.msra.mxu0 0.0
    %4444 = vmatprep.subr.mxu0 0.0
    %4445 = vmatpush1.msra.mxu0 0.0
    %4446 = vmatprep.subr.mxu0 0.0
    %4447 = vmatpush1.msra.mxu0 %v1974
    %4448 = vmatprep.subr.mxu0 0.0
    %4449 = vmatpush1.msra.mxu0 %v1973
    %4450 = vmatprep.subr.mxu0 0.0
    %4451 = vmatpush1.msra.mxu0 %v1972
    %4452 = vmatprep.subr.mxu0 0.0
    %4453 = vmatpush1.msra.mxu0 %v1971
    %4454 = vmatprep.subr.mxu0 0.0
    %4455 = vmatpush2.msra.mxu0 0.0
    %4456 = vmatprep.subr.mxu0 0.0
    %4457 = vmatpush2.msra.mxu0 0.0
    %4458 = vmatprep.subr.mxu0 0.0
    %4459 = vmatpush2.msra.mxu0 0.0
    %4460 = vmatprep.subr.mxu0 0.0
    %4461 = vmatpush2.msra.mxu0 0.0
    %4462 = vmatprep.subr.mxu0 0.0
    %4463 = vmatpush2.msra.mxu0 0.0
    %4464 = vmatprep.subr.mxu0 0.0
    %4465 = vmatpush2.msra.mxu0 0.0
    %4466 = vmatprep.subr.mxu0 0.0
    %4467 = vmatpush2.msra.mxu0 0.0
    %4468 = vmatprep.subr.mxu0 0.0
    %4469 = vmatpush2.msra.mxu0 0.0
    %4470 = vmatprep.subr.mxu0 0.0
    %4471 = vmatpush2.msra.mxu0 0.0
    %4472 = vmatprep.subr.mxu0 0.0
    %4473 = vmatpush2.msra.mxu0 0.0
    %4474 = vmatprep.subr.mxu0 0.0
    %4475 = vmatpush2.msra.mxu0 0.0
    %4476 = vmatprep.subr.mxu0 0.0
    %4477 = vmatpush2.msra.mxu0 0.0
    %4478 = vmatprep.subr.mxu0 0.0
    %4479 = vmatpush2.msra.mxu0 0.0
    %4480 = vmatprep.subr.mxu0 0.0
    %4481 = vmatpush2.msra.mxu0 0.0
    %4482 = vmatprep.subr.mxu0 0.0
    %4483 = vmatpush2.msra.mxu0 0.0
    %4484 = vmatprep.subr.mxu0 0.0
    %4485 = vmatpush2.msra.mxu0 0.0
    %4486 = vmatprep.mubr.f32.mxu0 0.0
    %4487 = vmatmul.mubr.f32.gmra.mxu0 %v4420
    %v4488 = vpop.f32.mrf.mxu0
    %v4489 = vadd.f32 0.0, %v4488
    %v4490 = vpop.f32.mrf.mxu0
    %4491 = vdwg.mxu0
    %s4492 = scalar_lea.vmem %s5, 1920
    %v4493 = vld [vmem:[%s4492] sm:$0xff]
    %v4494 = vld [vmem:[%s4492 + $0x8] sm:$0xff]
    %v4495 = vld [vmem:[%s4492 + $0x10] sm:$0xff]
    %v4496 = vld [vmem:[%s4492 + $0x18] sm:$0xff]
    %v4497 = vld [vmem:[%s4492 + $0x20] sm:$0xff]
    %v4498 = vld [vmem:[%s4492 + $0x28] sm:$0xff]
    %v4499 = vld [vmem:[%s4492 + $0x30] sm:$0xff]
    %v4500 = vld [vmem:[%s4492 + $0x38] sm:$0xff]
    %v4501 = vld [vmem:[%s4492 + $0x40] sm:$0xff]
    %v4502 = vld [vmem:[%s4492 + $0x48] sm:$0xff]
    %v4503 = vld [vmem:[%s4492 + $0x50] sm:$0xff]
    %v4504 = vld [vmem:[%s4492 + $0x58] sm:$0xff]
    %v4505 = vld [vmem:[%s4492 + $0x60] sm:$0xff]
    %v4506 = vld [vmem:[%s4492 + $0x68] sm:$0xff]
    %v4507 = vld [vmem:[%s4492 + $0x70] sm:$0xff]
    %v4508 = vld [vmem:[%s4492 + $0x78] sm:$0xff]
    %4509 = vmatprep.subr.mxu0 0.0
    %4510 = vmatpush1.msra.mxu0 %v4508
    %4511 = vmatprep.subr.mxu0 0.0
    %4512 = vmatpush1.msra.mxu0 %v4507
    %4513 = vmatprep.subr.mxu0 0.0
    %4514 = vmatpush1.msra.mxu0 %v4506
    %4515 = vmatprep.subr.mxu0 0.0
    %4516 = vmatpush1.msra.mxu0 %v4505
    %4517 = vmatprep.subr.mxu0 0.0
    %4518 = vmatpush1.msra.mxu0 %v4504
    %4519 = vmatprep.subr.mxu0 0.0
    %4520 = vmatpush1.msra.mxu0 %v4503
    %4521 = vmatprep.subr.mxu0 0.0
    %4522 = vmatpush1.msra.mxu0 %v4502
    %4523 = vmatprep.subr.mxu0 0.0
    %4524 = vmatpush1.msra.mxu0 %v4501
    %4525 = vmatprep.subr.mxu0 0.0
    %4526 = vmatpush1.msra.mxu0 %v4500
    %4527 = vmatprep.subr.mxu0 0.0
    %4528 = vmatpush1.msra.mxu0 %v4499
    %4529 = vmatprep.subr.mxu0 0.0
    %4530 = vmatpush1.msra.mxu0 %v4498
    %4531 = vmatprep.subr.mxu0 0.0
    %4532 = vmatpush1.msra.mxu0 %v4497
    %4533 = vmatprep.subr.mxu0 0.0
    %4534 = vmatpush1.msra.mxu0 %v4496
    %4535 = vmatprep.subr.mxu0 0.0
    %4536 = vmatpush1.msra.mxu0 %v4495
    %4537 = vmatprep.subr.mxu0 0.0
    %4538 = vmatpush1.msra.mxu0 %v4494
    %4539 = vmatprep.subr.mxu0 0.0
    %4540 = vmatpush1.msra.mxu0 %v4493
    %4541 = vmatprep.subr.mxu0 0.0
    %4542 = vmatpush2.msra.mxu0 0.0
    %4543 = vmatprep.subr.mxu0 0.0
    %4544 = vmatpush2.msra.mxu0 0.0
    %4545 = vmatprep.subr.mxu0 0.0
    %4546 = vmatpush2.msra.mxu0 0.0
    %4547 = vmatprep.subr.mxu0 0.0
    %4548 = vmatpush2.msra.mxu0 0.0
    %4549 = vmatprep.subr.mxu0 0.0
    %4550 = vmatpush2.msra.mxu0 0.0
    %4551 = vmatprep.subr.mxu0 0.0
    %4552 = vmatpush2.msra.mxu0 0.0
    %4553 = vmatprep.subr.mxu0 0.0
    %4554 = vmatpush2.msra.mxu0 0.0
    %4555 = vmatprep.subr.mxu0 0.0
    %4556 = vmatpush2.msra.mxu0 0.0
    %4557 = vmatprep.subr.mxu0 0.0
    %4558 = vmatpush2.msra.mxu0 0.0
    %4559 = vmatprep.subr.mxu0 0.0
    %4560 = vmatpush2.msra.mxu0 0.0
    %4561 = vmatprep.subr.mxu0 0.0
    %4562 = vmatpush2.msra.mxu0 0.0
    %4563 = vmatprep.subr.mxu0 0.0
    %4564 = vmatpush2.msra.mxu0 0.0
    %4565 = vmatprep.subr.mxu0 0.0
    %4566 = vmatpush2.msra.mxu0 0.0
    %4567 = vmatprep.subr.mxu0 0.0
    %4568 = vmatpush2.msra.mxu0 0.0
    %4569 = vmatprep.subr.mxu0 0.0
    %4570 = vmatpush2.msra.mxu0 0.0
    %4571 = vmatprep.subr.mxu0 0.0
    %4572 = vmatpush2.msra.mxu0 0.0
    %4573 = vmatprep.mubr.f32.mxu0 0.0
    %4574 = vmatmul.mubr.f32.gmra.mxu0 %v4489
    %v4575 = vpop.f32.mrf.mxu0
    %v4576 = vadd.f32 0.0, %v4575
    %v4577 = vpop.f32.mrf.mxu0
    %4578 = vdwg.mxu0
    %v4579 = vadd.f32 %v4416, %v4576
    %4580 = vst [vmem:[#allocation2] sm:$0x3] %v4579
    // Predicated region
    $region26: #{autoencoder_classifier_forward.1} parent=1 // pred_check
      _
    $region27: #{autoencoder_classifier_forward.1} parent=1 // pred_check_branch
      %4582 = sbr.rel (0) target = $region29
    $region28: #{autoencoder_classifier_forward.1} parent=1 // pred_region
      %s4584 = ssub.s32 32, 32
      %4585 = vsyncadd [#allocation3], %s4584
      %s4587 = sshll.u32 [#allocation2], 4
      %s4588 = int_to_ptr.vmem [resolvable:$true] %s4587
      %4590 = dma.vmem_to_hbm [thread:$0]  %s4588, 32, %s6, [#allocation3]
    $region29: #{autoencoder_classifier_forward.1} parent=1 // pred_fallthru
      _
    // Predicated region
    $region30: #{autoencoder_classifier_forward.1} parent=1 // pred_check
      _
    $region31: #{autoencoder_classifier_forward.1} parent=1 // pred_check_branch
      %4592 = sbr.rel (0) target = $region33
    $region32: #{autoencoder_classifier_forward.1} parent=1 // pred_region
      %4593 = dma.done [#allocation3], 32
    $region33: #{autoencoder_classifier_forward.1} parent=1 // pred_fallthru
      _
    %4594 = vsyncpa [#allocation3], 1

</llo_original>
